<compile_context>
chip_gen: v7x
topology: tpu7x:2x2x1
jax: 0.10.0
libtpu: 0.0.40
codegen_flags: <defaults>
</compile_context>

<pallas_src>
import math
from functools import partial

import jax
import jax.numpy as jnp
from jax import lax
from jax.experimental import pallas as pl
from jax.experimental.pallas import tpu as pltpu


def _round_up(x, m):
    return ((x + m - 1) // m) * m


def _pad_to(a, shape):
    return jnp.pad(a, [(0, t - s) for s, t in zip(a.shape, shape)])


def _encoder_layer_kernel(E, eps,
                          x_ref,
                          wqh_ref, bqh_ref, wkh_ref, bkh_ref, wvh_ref, bvh_ref,
                          woh_ref, bo_ref,
                          w1_ref, b1_ref, w2_ref, b2_ref,
                          g1_ref, beta1_ref, g2_ref, beta2_ref,
                          o_ref):
    bt, S, E_pad = x_ref.shape                      # bt sequences per step
    nhead = wqh_ref.shape[0]
    R = bt * S                                      # row slab for all row-parallel matmuls

    x = x_ref[...].astype(jnp.float32).reshape(R, E_pad)   # residual path in f32
    x16 = x.astype(jnp.bfloat16)
    xb = jnp.broadcast_to(x16[None], (nhead, R, E_pad))    # heads share the same rows

    # ---- Q/K/V projections: one batched (leading-head) MXU matmul each; the per-head
    #      weights are zero-padded to (E_pad, Hd_pad) and the 1/sqrt(head_dim) scale is
    #      already folded into wq/bq on the host. ----
    q = jnp.einsum('hre,hed->hrd', xb, wqh_ref[...],
                   preferred_element_type=jnp.float32) + bqh_ref[...]
    k = jnp.einsum('hre,hed->hrd', xb, wkh_ref[...],
                   preferred_element_type=jnp.float32) + bkh_ref[...]
    v = jnp.einsum('hre,hed->hrd', xb, wvh_ref[...],
                   preferred_element_type=jnp.float32) + bvh_ref[...]
    q16 = q.astype(jnp.bfloat16)
    k16 = k.astype(jnp.bfloat16)
    v16 = v.astype(jnp.bfloat16)

    # ---- scaled dot-product attention, all heads in one batched matmul ----
    # TODO(synk): for long S, tile the KV axis with online softmax (flash pattern) so the
    #             (R, R) score matrix never materializes (required for v7x's 64 MiB VMEM).
    s = jnp.einsum('hqd,hkd->hqk', q16, k16,
                   preferred_element_type=jnp.float32)           # (nhead, R, R)
    if bt > 1:
        # Rows from different sequences in the slab must not attend to each other.
        qb = lax.broadcasted_iota(jnp.int32, (R, R), 0) // S
        kb = lax.broadcasted_iota(jnp.int32, (R, R), 1) // S
        s = s + jnp.where(qb == kb, 0.0, -1e30).astype(jnp.float32)[None]
    s = s - jnp.max(s, axis=-1, keepdims=True)
    p = jnp.exp(s)
    p = p * pl.reciprocal(jnp.sum(p, axis=-1, keepdims=True), approx=True)
    attn = jnp.einsum('hqk,hkd->hqd', p.astype(jnp.bfloat16), v16,
                      preferred_element_type=jnp.float32)        # (nhead, R, Hd_pad)

    # ---- output projection: batched per-head matmul + reduce over heads (no concat;
    #      padded head columns are exactly zero so they contribute nothing). ----
    # TODO(synk): accumulate over heads instead of materializing (nhead, R, E_pad) f32
    #             once realistic E makes that buffer a VMEM concern.
    per_head = jnp.einsum('hrd,hde->hre', attn.astype(jnp.bfloat16), woh_ref[...],
                          preferred_element_type=jnp.float32)    # (nhead, R, E_pad)
    attn_out = jnp.sum(per_head, axis=0) + bo_ref[...]           # (R, E_pad)

    # ---- LayerNorm masked to the real E columns (lane padding stays exactly 0) ----
    emask = (lax.broadcasted_iota(jnp.int32, (1, E_pad), 1) < E).astype(jnp.float32)
    inv_e = 1.0 / float(E)

    def layer_norm(t, gamma, beta):
        mu = jnp.sum(t, axis=-1, keepdims=True) * inv_e          # padded cols are zero
        c = (t - mu) * emask
        var = jnp.sum(c * c, axis=-1, keepdims=True) * inv_e
        return c * lax.rsqrt(var + eps) * gamma + beta           # gamma/beta padded w/ 0

    # ---- residual + LayerNorm 1 (dropout1 = identity in eval) ----
    y = layer_norm(x + attn_out, g1_ref[...], beta1_ref[...])

    # ---- feed-forward: linear1 -> exact GELU (erf form, = F.gelu) -> linear2 ----
    # TODO(synk): on v5e, if a bundle dump shows the lone EUP slot binding on exp+erf,
    #             switch GELU to the tanh/polynomial (VALU) form; keep exp for softmax.
    # TODO(synk): for realistic E/dim_ff on v7x, stream w1/w2 from HBM
    #             (memory_space=pl.ANY + pltpu.emit_pipeline) instead of keeping resident.
    h1 = jnp.dot(y.astype(jnp.bfloat16), w1_ref[...],
                 preferred_element_type=jnp.float32) + b1_ref[...]
    h1 = 0.5 * h1 * (1.0 + lax.erf(h1 * (1.0 / math.sqrt(2.0))))
    h2 = jnp.dot(h1.astype(jnp.bfloat16), w2_ref[...],
                 preferred_element_type=jnp.float32) + b2_ref[...]

    # ---- residual + LayerNorm 2 (dropout2 = identity in eval) ----
    z = layer_norm(y + h2, g2_ref[...], beta2_ref[...])

    o_ref[...] = z.reshape(bt, S, E_pad).astype(o_ref.dtype)


def _pick_batch_tile(N, S, target_rows=256):
    """Sequences per grid step: fill MXU M toward ~256 rows, but keep >=2 grid steps
    when N >= 2 so both v7x TensorCores get a parallel step. Must divide N."""
    max_bt = max(1, target_rows // max(S, 1))
    if N >= 2:
        max_bt = max(1, min(max_bt, N // 2))
    max_bt = min(max_bt, N)
    for bt in range(max_bt, 0, -1):
        if N % bt == 0:
            return bt
    return 1


def _vmem_limit_bytes():
    """~75% of this generation's physical VMEM (headroom for compiler scratch):
    ~48 MiB on v7x (64 MiB parts), ~96 MiB on v5e/v6e (128 MiB parts)."""
    try:
        cap = pltpu.get_tpu_info().vmem_capacity_bytes
    except Exception:
        cap = 128 * 2 ** 20
    return int(max(32 * 2 ** 20, min((cap * 3) // 4, 100 * 2 ** 20)))


def transformer_encoder_layer(src, params, nhead, eps=1e-5):
    """src: (S, N, E) float32 (seq-first, like the PyTorch module). Returns (S, N, E)."""
    S, N, E = src.shape
    assert E % nhead == 0
    head_dim = E // nhead
    dim_ff = params["w1"].shape[1]

    E_pad = _round_up(E, 128)
    Hd_pad = _round_up(head_dim, 128)
    F_pad = _round_up(dim_ff, 128)
    bt = _pick_batch_tile(N, S)

    f32, bf16 = jnp.float32, jnp.bfloat16
    scale = 1.0 / math.sqrt(head_dim)

    def qkv_heads(w, b, s=1.0):
        # (E, E)=(in, nhead*hd) / (1, E)  ->  per-head, lane-padded (nhead, E_pad, Hd_pad)
        wh = (w.astype(f32) * s).reshape(E, nhead, head_dim).transpose(1, 0, 2)
        bh = (b.astype(f32) * s).reshape(nhead, head_dim)[:, None, :]
        return (_pad_to(wh, (nhead, E_pad, Hd_pad)).astype(bf16),
                _pad_to(bh, (nhead, 1, Hd_pad)))

    wqh, bqh = qkv_heads(params["wq"], params["bq"], scale)   # attention scale folded in
    wkh, bkh = qkv_heads(params["wk"], params["bk"])
    wvh, bvh = qkv_heads(params["wv"], params["bv"])
    woh = _pad_to(params["wo"].astype(f32).reshape(nhead, head_dim, E),
                  (nhead, Hd_pad, E_pad)).astype(bf16)

    def row_vec(b, width, pad_width):
        return _pad_to(b.astype(f32).reshape(1, width), (1, pad_width))

    weights = [
        wqh, bqh, wkh, bkh, wvh, bvh, woh,
        row_vec(params["bo"], E, E_pad),
        _pad_to(params["w1"].astype(f32), (E_pad, F_pad)).astype(bf16),
        row_vec(params["b1"], dim_ff, F_pad),
        _pad_to(params["w2"].astype(f32), (F_pad, E_pad)).astype(bf16),
        row_vec(params["b2"], E, E_pad),
        row_vec(params["g1"], E, E_pad), row_vec(params["beta1"], E, E_pad),
        row_vec(params["g2"], E, E_pad), row_vec(params["beta2"], E, E_pad),
    ]

    # Batch-major, lane-padded input: the zero-pad pass is needed anyway, so fold the
    # (S,N,E)->(N,S,E) transpose into it; the kernel then sees contiguous row slabs.
    x = _pad_to(jnp.transpose(src, (1, 0, 2)).astype(f32), (N, S, E_pad))

    def weight_spec(arr):
        zeros = (0,) * arr.ndim
        # Constant block index across the grid -> single-buffer (halves resident VMEM).
        return pl.BlockSpec(arr.shape, lambda i, _z=zeros: _z,
                            pipeline_mode=pl.Buffered(1))

    kernel = partial(_encoder_layer_kernel, E, eps)

    out_p = pl.pallas_call(
        kernel,
        out_shape=jax.ShapeDtypeStruct((N, S, E_pad), src.dtype),
        grid_spec=pltpu.PrefetchScalarGridSpec(
            num_scalar_prefetch=0,
            grid=(N // bt,),
            in_specs=[pl.BlockSpec((bt, S, E_pad), lambda i: (i, 0, 0))]
                     + [weight_spec(w) for w in weights],
            out_specs=pl.BlockSpec((bt, S, E_pad), lambda i: (i, 0, 0)),
        ),
        compiler_params=pltpu.CompilerParams(
            dimension_semantics=("parallel",),
            vmem_limit_bytes=_vmem_limit_bytes(),
        ),
    )(x, *weights)

    # Strip lane padding and return to the module's (S, N, E) layout.
    return jnp.transpose(out_p[:, :, :E], (1, 0, 2))


def _reference(src, params, nhead, eps=1e-5):
    """Pure-JAX f32 reference with identical math (mask-free path, eval-mode dropout)."""
    S, N, E = src.shape
    hd = E // nhead
    x = jnp.transpose(src, (1, 0, 2)).astype(jnp.float32)               # (N, S, E)
    q = x @ params["wq"] + params["bq"]
    k = x @ params["wk"] + params["bk"]
    v = x @ params["wv"] + params["bv"]
    q = q.reshape(N, S, nhead, hd).transpose(0, 2, 1, 3) * (1.0 / math.sqrt(hd))
    k = k.reshape(N, S, nhead, hd).transpose(0, 2, 1, 3)
    v = v.reshape(N, S, nhead, hd).transpose(0, 2, 1, 3)
    p = jax.nn.softmax(q @ jnp.swapaxes(k, -1, -2), axis=-1)
    a = (p @ v).transpose(0, 2, 1, 3).reshape(N, S, E)
    a = a @ params["wo"] + params["bo"]
    y = x + a
    mu = y.mean(-1, keepdims=True)
    var = ((y - mu) ** 2).mean(-1, keepdims=True)
    y = (y - mu) * jax.lax.rsqrt(var + eps) * params["g1"] + params["beta1"]
    h1 = y @ params["w1"] + params["b1"]
    h1 = 0.5 * h1 * (1.0 + jax.lax.erf(h1 / math.sqrt(2.0)))
    h2 = h1 @ params["w2"] + params["b2"]
    z = y + h2
    mu2 = z.mean(-1, keepdims=True)
    var2 = ((z - mu2) ** 2).mean(-1, keepdims=True)
    z = (z - mu2) * jax.lax.rsqrt(var2 + eps) * params["g2"] + params["beta2"]
    return jnp.transpose(z, (1, 0, 2))


def init_params(key, d_model, nhead, dim_feedforward):
    # Deterministic synthetic parameters (same shapes as the module's __init__; linear
    # weights stored pre-transposed as (in_features, out_features)), kept in f32 here.
    ks = jax.random.split(key, 8)
    std = 0.02
    return {
        "wq": jax.random.normal(ks[0], (d_model, d_model), jnp.float32) * std,
        "wk": jax.random.normal(ks[1], (d_model, d_model), jnp.float32) * std,
        "wv": jax.random.normal(ks[2], (d_model, d_model), jnp.float32) * std,
        "wo": jax.random.normal(ks[3], (d_model, d_model), jnp.float32) * std,
        "w1": jax.random.normal(ks[4], (d_model, dim_feedforward), jnp.float32) * std,
        "w2": jax.random.normal(ks[5], (dim_feedforward, d_model), jnp.float32) * std,
        "bq": jax.random.normal(ks[6], (1, d_model), jnp.float32) * std,
        "bk": jnp.zeros((1, d_model), jnp.float32),
        "bv": jnp.zeros((1, d_model), jnp.float32),
        "bo": jnp.zeros((1, d_model), jnp.float32),
        "b1": jax.random.normal(ks[7], (1, dim_feedforward), jnp.float32) * std,
        "b2": jnp.zeros((1, d_model), jnp.float32),
        "g1": jnp.ones((1, d_model), jnp.float32),
        "beta1": jnp.zeros((1, d_model), jnp.float32),
        "g2": jnp.ones((1, d_model), jnp.float32),
        "beta2": jnp.zeros((1, d_model), jnp.float32),
    }


if __name__ == "__main__":
    S, N, d_model, nhead, dim_ff = 8, 2, 32, 4, 64

    key = jax.random.PRNGKey(0)
    k_src, k_par = jax.random.split(key)
    src = jax.random.normal(k_src, (S, N, d_model), jnp.float32)
    params = init_params(k_par, d_model, nhead, dim_ff)

    out = jax.block_until_ready(transformer_encoder_layer(src, params, nhead))
    ref = jax.block_until_ready(_reference(src, params, nhead))

    max_err = float(jnp.max(jnp.abs(out - ref)))
    assert out.shape == (S, N, d_model)
    assert bool(jnp.all(jnp.isfinite(out)))
    # Kernel uses bf16 matmul operands (f32 accumulation) and an approx softmax
    # reciprocal; compare to the f32 reference with a correspondingly relaxed tolerance.
    assert max_err < 2e-2, f"max abs diff vs f32 reference too large: {max_err}"
    print("KERNEL_OK")
</pallas_src>

<mosaic_0001>
module attributes {stable_mosaic.version = 11 : i64} {
  func.func @_encoder_layer_kernel(%arg0: i32, %arg1: memref<1x8x128xf32, #tpu.memory_space<vmem>>, %arg2: memref<4x128x128xbf16, #tpu.memory_space<vmem>>, %arg3: memref<4x1x128xf32, #tpu.memory_space<vmem>>, %arg4: memref<4x128x128xbf16, #tpu.memory_space<vmem>>, %arg5: memref<4x1x128xf32, #tpu.memory_space<vmem>>, %arg6: memref<4x128x128xbf16, #tpu.memory_space<vmem>>, %arg7: memref<4x1x128xf32, #tpu.memory_space<vmem>>, %arg8: memref<4x128x128xbf16, #tpu.memory_space<vmem>>, %arg9: memref<1x128xf32, #tpu.memory_space<vmem>>, %arg10: memref<128x128xbf16, #tpu.memory_space<vmem>>, %arg11: memref<1x128xf32, #tpu.memory_space<vmem>>, %arg12: memref<128x128xbf16, #tpu.memory_space<vmem>>, %arg13: memref<1x128xf32, #tpu.memory_space<vmem>>, %arg14: memref<1x128xf32, #tpu.memory_space<vmem>>, %arg15: memref<1x128xf32, #tpu.memory_space<vmem>>, %arg16: memref<1x128xf32, #tpu.memory_space<vmem>>, %arg17: memref<1x128xf32, #tpu.memory_space<vmem>>, %arg18: memref<1x8x128xf32, #tpu.memory_space<vmem>>) attributes {dimension_semantics = [#tpu.dimension_semantics<parallel>], iteration_bounds = array<i64: 2>, scalar_prefetch = 0 : i64, scratch_operands = 0 : i64, tpu.core_type = #tpu.core_type<tc>, window_params = [{transform_indices = @transform_0, window_bounds = array<i64: 1, 8, 128>}, {pipeline_mode = #tpu.pipeline_mode<synchronous>, transform_indices = @transform_1, window_bounds = array<i64: 4, 128, 128>}, {pipeline_mode = #tpu.pipeline_mode<synchronous>, transform_indices = @transform_2, window_bounds = array<i64: 4, 1, 128>}, {pipeline_mode = #tpu.pipeline_mode<synchronous>, transform_indices = @transform_3, window_bounds = array<i64: 4, 128, 128>}, {pipeline_mode = #tpu.pipeline_mode<synchronous>, transform_indices = @transform_4, window_bounds = array<i64: 4, 1, 128>}, {pipeline_mode = #tpu.pipeline_mode<synchronous>, transform_indices = @transform_5, window_bounds = array<i64: 4, 128, 128>}, {pipeline_mode = #tpu.pipeline_mode<synchronous>, transform_indices = @transform_6, window_bounds = array<i64: 4, 1, 128>}, {pipeline_mode = #tpu.pipeline_mode<synchronous>, transform_indices = @transform_7, window_bounds = array<i64: 4, 128, 128>}, {pipeline_mode = #tpu.pipeline_mode<synchronous>, transform_indices = @transform_8, window_bounds = array<i64: 1, 128>}, {pipeline_mode = #tpu.pipeline_mode<synchronous>, transform_indices = @transform_9, window_bounds = array<i64: 128, 128>}, {pipeline_mode = #tpu.pipeline_mode<synchronous>, transform_indices = @transform_10, window_bounds = array<i64: 1, 128>}, {pipeline_mode = #tpu.pipeline_mode<synchronous>, transform_indices = @transform_11, window_bounds = array<i64: 128, 128>}, {pipeline_mode = #tpu.pipeline_mode<synchronous>, transform_indices = @transform_12, window_bounds = array<i64: 1, 128>}, {pipeline_mode = #tpu.pipeline_mode<synchronous>, transform_indices = @transform_13, window_bounds = array<i64: 1, 128>}, {pipeline_mode = #tpu.pipeline_mode<synchronous>, transform_indices = @transform_14, window_bounds = array<i64: 1, 128>}, {pipeline_mode = #tpu.pipeline_mode<synchronous>, transform_indices = @transform_15, window_bounds = array<i64: 1, 128>}, {pipeline_mode = #tpu.pipeline_mode<synchronous>, transform_indices = @transform_16, window_bounds = array<i64: 1, 128>}, {transform_indices = @transform_17, window_bounds = array<i64: 1, 8, 128>}]} {
    %c0 = arith.constant 0 : index
    %c0_0 = arith.constant 0 : index
    %c0_1 = arith.constant 0 : index
    %0 = vector.load %arg1[%c0, %c0_0, %c0_1] : memref<1x8x128xf32, #tpu.memory_space<vmem>>, vector<1x8x128xf32>
    %1 = vector.shape_cast %0 : vector<1x8x128xf32> to vector<8x128xf32>
    %2 = arith.truncf %1 : vector<8x128xf32> to vector<8x128xbf16>
    %3 = vector.shape_cast %2 : vector<8x128xbf16> to vector<1x8x128xbf16>
    %4 = vector.shape_cast %3 : vector<1x8x128xbf16> to vector<1x8x128xbf16>
    %5 = vector.broadcast %4 : vector<1x8x128xbf16> to vector<4x8x128xbf16>
    %c0_2 = arith.constant 0 : index
    %c0_3 = arith.constant 0 : index
    %c0_4 = arith.constant 0 : index
    %6 = vector.load %arg2[%c0_2, %c0_3, %c0_4] : memref<4x128x128xbf16, #tpu.memory_space<vmem>>, vector<4x128x128xbf16>
    "tpu.trace_start"() <{level = 10 : i32, message = "hre,hed->hrd"}> : () -> ()
    %cst = arith.constant dense<0.000000e+00> : vector<4x8x128xf32>
    %7 = tpu.matmul %5, %6, %cst {dimension_numbers = #tpu.dot_dimension_numbers<[2], [1], [1], [2], [0, 0, 0, 1, 1, 2], [0], [0]>} : vector<4x8x128xbf16>, vector<4x128x128xbf16>, vector<4x8x128xf32> -> vector<4x8x128xf32>
    "tpu.trace_stop"() : () -> ()
    %c0_5 = arith.constant 0 : index
    %c0_6 = arith.constant 0 : index
    %c0_7 = arith.constant 0 : index
    %8 = vector.load %arg3[%c0_5, %c0_6, %c0_7] : memref<4x1x128xf32, #tpu.memory_space<vmem>>, vector<4x1x128xf32>
    %9 = vector.broadcast %8 : vector<4x1x128xf32> to vector<4x8x128xf32>
    %10 = arith.addf %7, %9 : vector<4x8x128xf32>
    %c0_8 = arith.constant 0 : index
    %c0_9 = arith.constant 0 : index
    %c0_10 = arith.constant 0 : index
    %11 = vector.load %arg4[%c0_8, %c0_9, %c0_10] : memref<4x128x128xbf16, #tpu.memory_space<vmem>>, vector<4x128x128xbf16>
    "tpu.trace_start"() <{level = 10 : i32, message = "hre,hed->hrd"}> : () -> ()
    %cst_11 = arith.constant dense<0.000000e+00> : vector<4x8x128xf32>
    %12 = tpu.matmul %5, %11, %cst_11 {dimension_numbers = #tpu.dot_dimension_numbers<[2], [1], [1], [2], [0, 0, 0, 1, 1, 2], [0], [0]>} : vector<4x8x128xbf16>, vector<4x128x128xbf16>, vector<4x8x128xf32> -> vector<4x8x128xf32>
    "tpu.trace_stop"() : () -> ()
    %c0_12 = arith.constant 0 : index
    %c0_13 = arith.constant 0 : index
    %c0_14 = arith.constant 0 : index
    %13 = vector.load %arg5[%c0_12, %c0_13, %c0_14] : memref<4x1x128xf32, #tpu.memory_space<vmem>>, vector<4x1x128xf32>
    %14 = vector.broadcast %13 : vector<4x1x128xf32> to vector<4x8x128xf32>
    %15 = arith.addf %12, %14 : vector<4x8x128xf32>
    %c0_15 = arith.constant 0 : index
    %c0_16 = arith.constant 0 : index
    %c0_17 = arith.constant 0 : index
    %16 = vector.load %arg6[%c0_15, %c0_16, %c0_17] : memref<4x128x128xbf16, #tpu.memory_space<vmem>>, vector<4x128x128xbf16>
    "tpu.trace_start"() <{level = 10 : i32, message = "hre,hed->hrd"}> : () -> ()
    %cst_18 = arith.constant dense<0.000000e+00> : vector<4x8x128xf32>
    %17 = tpu.matmul %5, %16, %cst_18 {dimension_numbers = #tpu.dot_dimension_numbers<[2], [1], [1], [2], [0, 0, 0, 1, 1, 2], [0], [0]>} : vector<4x8x128xbf16>, vector<4x128x128xbf16>, vector<4x8x128xf32> -> vector<4x8x128xf32>
    "tpu.trace_stop"() : () -> ()
    %c0_19 = arith.constant 0 : index
    %c0_20 = arith.constant 0 : index
    %c0_21 = arith.constant 0 : index
    %18 = vector.load %arg7[%c0_19, %c0_20, %c0_21] : memref<4x1x128xf32, #tpu.memory_space<vmem>>, vector<4x1x128xf32>
    %19 = vector.broadcast %18 : vector<4x1x128xf32> to vector<4x8x128xf32>
    %20 = arith.addf %17, %19 : vector<4x8x128xf32>
    %21 = arith.truncf %10 : vector<4x8x128xf32> to vector<4x8x128xbf16>
    %22 = arith.truncf %15 : vector<4x8x128xf32> to vector<4x8x128xbf16>
    %23 = arith.truncf %20 : vector<4x8x128xf32> to vector<4x8x128xbf16>
    "tpu.trace_start"() <{level = 10 : i32, message = "hqd,hkd->hqk"}> : () -> ()
    %cst_22 = arith.constant dense<0.000000e+00> : vector<4x8x8xf32>
    %24 = tpu.matmul %21, %22, %cst_22 {dimension_numbers = #tpu.dot_dimension_numbers<[2], [2], [1], [1], [0, 0, 0, 1, 1, 1], [0], [0]>} : vector<4x8x128xbf16>, vector<4x8x128xbf16>, vector<4x8x8xf32> -> vector<4x8x8xf32>
    "tpu.trace_stop"() : () -> ()
    %cst_23 = arith.constant dense<0xFF800000> : vector<4x8xf32>
    %25 = vector.multi_reduction <maximumf>, %24, %cst_23 [2] : vector<4x8x8xf32> to vector<4x8xf32>
    %26 = vector.shape_cast %25 : vector<4x8xf32> to vector<4x8x1xf32>
    %27 = vector.broadcast %26 : vector<4x8x1xf32> to vector<4x8x8xf32>
    %28 = arith.subf %24, %27 : vector<4x8x8xf32>
    %29 = math.exp %28 : vector<4x8x8xf32>
    %cst_24 = arith.constant dense<0.000000e+00> : vector<4x8xf32>
    %30 = vector.multi_reduction <add>, %29, %cst_24 [2] : vector<4x8x8xf32> to vector<4x8xf32>
    %31 = vector.shape_cast %30 : vector<4x8xf32> to vector<4x8x1xf32>
    %32 = tpu.reciprocal %31 {approx = true} : vector<4x8x1xf32> -> vector<4x8x1xf32>
    %33 = vector.broadcast %32 : vector<4x8x1xf32> to vector<4x8x8xf32>
    %34 = arith.mulf %29, %33 : vector<4x8x8xf32>
    %35 = arith.truncf %34 : vector<4x8x8xf32> to vector<4x8x8xbf16>
    "tpu.trace_start"() <{level = 10 : i32, message = "hqk,hkd->hqd"}> : () -> ()
    %cst_25 = arith.constant dense<0.000000e+00> : vector<4x8x128xf32>
    %36 = tpu.matmul %35, %23, %cst_25 {dimension_numbers = #tpu.dot_dimension_numbers<[2], [1], [1], [2], [0, 0, 0, 1, 1, 2], [0], [0]>} : vector<4x8x8xbf16>, vector<4x8x128xbf16>, vector<4x8x128xf32> -> vector<4x8x128xf32>
    "tpu.trace_stop"() : () -> ()
    %37 = arith.truncf %36 : vector<4x8x128xf32> to vector<4x8x128xbf16>
    %c0_26 = arith.constant 0 : index
    %c0_27 = arith.constant 0 : index
    %c0_28 = arith.constant 0 : index
    %38 = vector.load %arg8[%c0_26, %c0_27, %c0_28] : memref<4x128x128xbf16, #tpu.memory_space<vmem>>, vector<4x128x128xbf16>
    "tpu.trace_start"() <{level = 10 : i32, message = "hrd,hde->hre"}> : () -> ()
    %cst_29 = arith.constant dense<0.000000e+00> : vector<4x8x128xf32>
    %39 = tpu.matmul %37, %38, %cst_29 {dimension_numbers = #tpu.dot_dimension_numbers<[2], [1], [1], [2], [0, 0, 0, 1, 1, 2], [0], [0]>} : vector<4x8x128xbf16>, vector<4x128x128xbf16>, vector<4x8x128xf32> -> vector<4x8x128xf32>
    "tpu.trace_stop"() : () -> ()
    %cst_30 = arith.constant dense<0.000000e+00> : vector<8x128xf32>
    %40 = vector.multi_reduction <add>, %39, %cst_30 [0] : vector<4x8x128xf32> to vector<8x128xf32>
    %c0_31 = arith.constant 0 : index
    %c0_32 = arith.constant 0 : index
    %41 = vector.load %arg9[%c0_31, %c0_32] : memref<1x128xf32, #tpu.memory_space<vmem>>, vector<1x128xf32>
    %42 = vector.broadcast %41 : vector<1x128xf32> to vector<8x128xf32>
    %43 = arith.addf %40, %42 : vector<8x128xf32>
    %44 = tpu.iota {dimensions = array<i32: 1>} : vector<1x128xi32>
    %c32_i32 = arith.constant 32 : i32
    %45 = vector.broadcast %c32_i32 : i32 to vector<1x128xi32>
    %46 = arith.cmpi slt, %44, %45 : vector<1x128xi32>
    %47 = arith.extui %46 : vector<1x128xi1> to vector<1x128xi32>
    %48 = arith.sitofp %47 : vector<1x128xi32> to vector<1x128xf32>
    %49 = arith.addf %1, %43 : vector<8x128xf32>
    %c0_33 = arith.constant 0 : index
    %c0_34 = arith.constant 0 : index
    %50 = vector.load %arg14[%c0_33, %c0_34] : memref<1x128xf32, #tpu.memory_space<vmem>>, vector<1x128xf32>
    %c0_35 = arith.constant 0 : index
    %c0_36 = arith.constant 0 : index
    %51 = vector.load %arg15[%c0_35, %c0_36] : memref<1x128xf32, #tpu.memory_space<vmem>>, vector<1x128xf32>
    %cst_37 = arith.constant dense<0.000000e+00> : vector<8xf32>
    %52 = vector.multi_reduction <add>, %49, %cst_37 [1] : vector<8x128xf32> to vector<8xf32>
    %53 = vector.shape_cast %52 : vector<8xf32> to vector<8x1xf32>
    %cst_38 = arith.constant 3.125000e-02 : f32
    %54 = vector.broadcast %cst_38 : f32 to vector<8x1xf32>
    %55 = arith.mulf %53, %54 : vector<8x1xf32>
    %56 = vector.broadcast %55 : vector<8x1xf32> to vector<8x128xf32>
    %57 = arith.subf %49, %56 : vector<8x128xf32>
    %58 = vector.broadcast %48 : vector<1x128xf32> to vector<8x128xf32>
    %59 = arith.mulf %57, %58 : vector<8x128xf32>
    %60 = arith.mulf %59, %59 : vector<8x128xf32>
    %cst_39 = arith.constant dense<0.000000e+00> : vector<8xf32>
    %61 = vector.multi_reduction <add>, %60, %cst_39 [1] : vector<8x128xf32> to vector<8xf32>
    %62 = vector.shape_cast %61 : vector<8xf32> to vector<8x1xf32>
    %cst_40 = arith.constant 3.125000e-02 : f32
    %63 = vector.broadcast %cst_40 : f32 to vector<8x1xf32>
    %64 = arith.mulf %62, %63 : vector<8x1xf32>
    %cst_41 = arith.constant 9.99999974E-6 : f32
    %65 = vector.broadcast %cst_41 : f32 to vector<8x1xf32>
    %66 = arith.addf %64, %65 : vector<8x1xf32>
    %67 = math.rsqrt %66 : vector<8x1xf32>
    %68 = vector.broadcast %67 : vector<8x1xf32> to vector<8x128xf32>
    %69 = arith.mulf %59, %68 : vector<8x128xf32>
    %70 = vector.broadcast %50 : vector<1x128xf32> to vector<8x128xf32>
    %71 = arith.mulf %69, %70 : vector<8x128xf32>
    %72 = vector.broadcast %51 : vector<1x128xf32> to vector<8x128xf32>
    %73 = arith.addf %71, %72 : vector<8x128xf32>
    %74 = arith.truncf %73 : vector<8x128xf32> to vector<8x128xbf16>
    %c0_42 = arith.constant 0 : index
    %c0_43 = arith.constant 0 : index
    %75 = vector.load %arg10[%c0_42, %c0_43] : memref<128x128xbf16, #tpu.memory_space<vmem>>, vector<128x128xbf16>
    %cst_44 = arith.constant dense<0.000000e+00> : vector<8x128xf32>
    %76 = tpu.matmul %74, %75, %cst_44 {dimension_numbers = #tpu.dot_dimension_numbers<[1], [0], [0], [1], [0, 0, 1, 1], [], []>} : vector<8x128xbf16>, vector<128x128xbf16>, vector<8x128xf32> -> vector<8x128xf32>
    %c0_45 = arith.constant 0 : index
    %c0_46 = arith.constant 0 : index
    %77 = vector.load %arg11[%c0_45, %c0_46] : memref<1x128xf32, #tpu.memory_space<vmem>>, vector<1x128xf32>
    %78 = vector.broadcast %77 : vector<1x128xf32> to vector<8x128xf32>
    %79 = arith.addf %76, %78 : vector<8x128xf32>
    %cst_47 = arith.constant 5.000000e-01 : f32
    %80 = vector.broadcast %cst_47 : f32 to vector<8x128xf32>
    %81 = arith.mulf %80, %79 : vector<8x128xf32>
    %cst_48 = arith.constant 0.707106769 : f32
    %82 = vector.broadcast %cst_48 : f32 to vector<8x128xf32>
    %83 = arith.mulf %79, %82 : vector<8x128xf32>
    %84 = math.erf %83 : vector<8x128xf32>
    %cst_49 = arith.constant 1.000000e+00 : f32
    %85 = vector.broadcast %cst_49 : f32 to vector<8x128xf32>
    %86 = arith.addf %85, %84 : vector<8x128xf32>
    %87 = arith.mulf %81, %86 : vector<8x128xf32>
    %88 = arith.truncf %87 : vector<8x128xf32> to vector<8x128xbf16>
    %c0_50 = arith.constant 0 : index
    %c0_51 = arith.constant 0 : index
    %89 = vector.load %arg12[%c0_50, %c0_51] : memref<128x128xbf16, #tpu.memory_space<vmem>>, vector<128x128xbf16>
    %cst_52 = arith.constant dense<0.000000e+00> : vector<8x128xf32>
    %90 = tpu.matmul %88, %89, %cst_52 {dimension_numbers = #tpu.dot_dimension_numbers<[1], [0], [0], [1], [0, 0, 1, 1], [], []>} : vector<8x128xbf16>, vector<128x128xbf16>, vector<8x128xf32> -> vector<8x128xf32>
    %c0_53 = arith.constant 0 : index
    %c0_54 = arith.constant 0 : index
    %91 = vector.load %arg13[%c0_53, %c0_54] : memref<1x128xf32, #tpu.memory_space<vmem>>, vector<1x128xf32>
    %92 = vector.broadcast %91 : vector<1x128xf32> to vector<8x128xf32>
    %93 = arith.addf %90, %92 : vector<8x128xf32>
    %94 = arith.addf %73, %93 : vector<8x128xf32>
    %c0_55 = arith.constant 0 : index
    %c0_56 = arith.constant 0 : index
    %95 = vector.load %arg16[%c0_55, %c0_56] : memref<1x128xf32, #tpu.memory_space<vmem>>, vector<1x128xf32>
    %c0_57 = arith.constant 0 : index
    %c0_58 = arith.constant 0 : index
    %96 = vector.load %arg17[%c0_57, %c0_58] : memref<1x128xf32, #tpu.memory_space<vmem>>, vector<1x128xf32>
    %cst_59 = arith.constant dense<0.000000e+00> : vector<8xf32>
    %97 = vector.multi_reduction <add>, %94, %cst_59 [1] : vector<8x128xf32> to vector<8xf32>
    %98 = vector.shape_cast %97 : vector<8xf32> to vector<8x1xf32>
    %cst_60 = arith.constant 3.125000e-02 : f32
    %99 = vector.broadcast %cst_60 : f32 to vector<8x1xf32>
    %100 = arith.mulf %98, %99 : vector<8x1xf32>
    %101 = vector.broadcast %100 : vector<8x1xf32> to vector<8x128xf32>
    %102 = arith.subf %94, %101 : vector<8x128xf32>
    %103 = vector.broadcast %48 : vector<1x128xf32> to vector<8x128xf32>
    %104 = arith.mulf %102, %103 : vector<8x128xf32>
    %105 = arith.mulf %104, %104 : vector<8x128xf32>
    %cst_61 = arith.constant dense<0.000000e+00> : vector<8xf32>
    %106 = vector.multi_reduction <add>, %105, %cst_61 [1] : vector<8x128xf32> to vector<8xf32>
    %107 = vector.shape_cast %106 : vector<8xf32> to vector<8x1xf32>
    %cst_62 = arith.constant 3.125000e-02 : f32
    %108 = vector.broadcast %cst_62 : f32 to vector<8x1xf32>
    %109 = arith.mulf %107, %108 : vector<8x1xf32>
    %cst_63 = arith.constant 9.99999974E-6 : f32
    %110 = vector.broadcast %cst_63 : f32 to vector<8x1xf32>
    %111 = arith.addf %109, %110 : vector<8x1xf32>
    %112 = math.rsqrt %111 : vector<8x1xf32>
    %113 = vector.broadcast %112 : vector<8x1xf32> to vector<8x128xf32>
    %114 = arith.mulf %104, %113 : vector<8x128xf32>
    %115 = vector.broadcast %95 : vector<1x128xf32> to vector<8x128xf32>
    %116 = arith.mulf %114, %115 : vector<8x128xf32>
    %117 = vector.broadcast %96 : vector<1x128xf32> to vector<8x128xf32>
    %118 = arith.addf %116, %117 : vector<8x128xf32>
    %119 = vector.shape_cast %118 : vector<8x128xf32> to vector<1x8x128xf32>
    %c0_64 = arith.constant 0 : index
    %c0_65 = arith.constant 0 : index
    %c0_66 = arith.constant 0 : index
    %120 = vector.load %arg18[%c0_64, %c0_65, %c0_66] : memref<1x8x128xf32, #tpu.memory_space<vmem>>, vector<1x8x128xf32>
    tpu.vector_store %arg18[%c0_64, %c0_65, %c0_66], %119 {strides = array<i32>} : memref<1x8x128xf32, #tpu.memory_space<vmem>>, vector<1x8x128xf32>,
    return
  }
  func.func @transform_0(%arg0: i32) -> (i32, i32, i32) {
    %c0_i32 = arith.constant 0 : i32
    %c0_i32_0 = arith.constant 0 : i32
    %c0_i32_1 = arith.constant 0 : i32
    return %arg0, %c0_i32, %c0_i32_0 : i32, i32, i32
  }
  func.func @transform_1(%arg0: i32) -> (i32, i32, i32) {
    %c0_i32 = arith.constant 0 : i32
    %c0_i32_0 = arith.constant 0 : i32
    %c0_i32_1 = arith.constant 0 : i32
    %c0_i32_2 = arith.constant 0 : i32
    return %c0_i32, %c0_i32_0, %c0_i32_1 : i32, i32, i32
  }
  func.func @transform_2(%arg0: i32) -> (i32, i32, i32) {
    %c0_i32 = arith.constant 0 : i32
    %c0_i32_0 = arith.constant 0 : i32
    %c0_i32_1 = arith.constant 0 : i32
    %c0_i32_2 = arith.constant 0 : i32
    return %c0_i32, %c0_i32_0, %c0_i32_1 : i32, i32, i32
  }
  func.func @transform_3(%arg0: i32) -> (i32, i32, i32) {
    %c0_i32 = arith.constant 0 : i32
    %c0_i32_0 = arith.constant 0 : i32
    %c0_i32_1 = arith.constant 0 : i32
    %c0_i32_2 = arith.constant 0 : i32
    return %c0_i32, %c0_i32_0, %c0_i32_1 : i32, i32, i32
  }
  func.func @transform_4(%arg0: i32) -> (i32, i32, i32) {
    %c0_i32 = arith.constant 0 : i32
    %c0_i32_0 = arith.constant 0 : i32
    %c0_i32_1 = arith.constant 0 : i32
    %c0_i32_2 = arith.constant 0 : i32
    return %c0_i32, %c0_i32_0, %c0_i32_1 : i32, i32, i32
  }
  func.func @transform_5(%arg0: i32) -> (i32, i32, i32) {
    %c0_i32 = arith.constant 0 : i32
    %c0_i32_0 = arith.constant 0 : i32
    %c0_i32_1 = arith.constant 0 : i32
    %c0_i32_2 = arith.constant 0 : i32
    return %c0_i32, %c0_i32_0, %c0_i32_1 : i32, i32, i32
  }
  func.func @transform_6(%arg0: i32) -> (i32, i32, i32) {
    %c0_i32 = arith.constant 0 : i32
    %c0_i32_0 = arith.constant 0 : i32
    %c0_i32_1 = arith.constant 0 : i32
    %c0_i32_2 = arith.constant 0 : i32
    return %c0_i32, %c0_i32_0, %c0_i32_1 : i32, i32, i32
  }
  func.func @transform_7(%arg0: i32) -> (i32, i32, i32) {
    %c0_i32 = arith.constant 0 : i32
    %c0_i32_0 = arith.constant 0 : i32
    %c0_i32_1 = arith.constant 0 : i32
    %c0_i32_2 = arith.constant 0 : i32
    return %c0_i32, %c0_i32_0, %c0_i32_1 : i32, i32, i32
  }
  func.func @transform_8(%arg0: i32) -> (i32, i32) {
    %c0_i32 = arith.constant 0 : i32
    %c0_i32_0 = arith.constant 0 : i32
    %c0_i32_1 = arith.constant 0 : i32
    return %c0_i32, %c0_i32_0 : i32, i32
  }
  func.func @transform_9(%arg0: i32) -> (i32, i32) {
    %c0_i32 = arith.constant 0 : i32
    %c0_i32_0 = arith.constant 0 : i32
    %c0_i32_1 = arith.constant 0 : i32
    return %c0_i32, %c0_i32_0 : i32, i32
  }
  func.func @transform_10(%arg0: i32) -> (i32, i32) {
    %c0_i32 = arith.constant 0 : i32
    %c0_i32_0 = arith.constant 0 : i32
    %c0_i32_1 = arith.constant 0 : i32
    return %c0_i32, %c0_i32_0 : i32, i32
  }
  func.func @transform_11(%arg0: i32) -> (i32, i32) {
    %c0_i32 = arith.constant 0 : i32
    %c0_i32_0 = arith.constant 0 : i32
    %c0_i32_1 = arith.constant 0 : i32
    return %c0_i32, %c0_i32_0 : i32, i32
  }
  func.func @transform_12(%arg0: i32) -> (i32, i32) {
    %c0_i32 = arith.constant 0 : i32
    %c0_i32_0 = arith.constant 0 : i32
    %c0_i32_1 = arith.constant 0 : i32
    return %c0_i32, %c0_i32_0 : i32, i32
  }
  func.func @transform_13(%arg0: i32) -> (i32, i32) {
    %c0_i32 = arith.constant 0 : i32
    %c0_i32_0 = arith.constant 0 : i32
    %c0_i32_1 = arith.constant 0 : i32
    return %c0_i32, %c0_i32_0 : i32, i32
  }
  func.func @transform_14(%arg0: i32) -> (i32, i32) {
    %c0_i32 = arith.constant 0 : i32
    %c0_i32_0 = arith.constant 0 : i32
    %c0_i32_1 = arith.constant 0 : i32
    return %c0_i32, %c0_i32_0 : i32, i32
  }
  func.func @transform_15(%arg0: i32) -> (i32, i32) {
    %c0_i32 = arith.constant 0 : i32
    %c0_i32_0 = arith.constant 0 : i32
    %c0_i32_1 = arith.constant 0 : i32
    return %c0_i32, %c0_i32_0 : i32, i32
  }
  func.func @transform_16(%arg0: i32) -> (i32, i32) {
    %c0_i32 = arith.constant 0 : i32
    %c0_i32_0 = arith.constant 0 : i32
    %c0_i32_1 = arith.constant 0 : i32
    return %c0_i32, %c0_i32_0 : i32, i32
  }
  func.func @transform_17(%arg0: i32) -> (i32, i32, i32) {
    %c0_i32 = arith.constant 0 : i32
    %c0_i32_0 = arith.constant 0 : i32
    %c0_i32_1 = arith.constant 0 : i32
    return %arg0, %c0_i32, %c0_i32_0 : i32, i32, i32
  }
}

</mosaic_0001>

<llo_original>
// kernel: tpu_custom_call.1
$region0: #{tpu_custom_call.1}
  #allocation0 [shape = 'u32[]', space=smem, size = 0x4, offset = 0x4, fixed_abs, tag = 'smem constant byte address 0x4 - core index']
  #allocation1 [shape = 'u32[144,128]{1,0:T(1,128)}', space=vmem, size = 0x12000, scoped, tag = 'internal scratch']
  %s0 = inlined_call_operand.hbm [shape: f32[2,8,128], index: 0, kind: input, shape index: {}]
  %s1 = inlined_call_operand.hbm [shape: bf16[4,128,128], index: 1, kind: input, shape index: {}]
  %s2 = inlined_call_operand.hbm [shape: f32[4,1,128], index: 2, kind: input, shape index: {}]
  %s3 = inlined_call_operand.hbm [shape: bf16[4,128,128], index: 3, kind: input, shape index: {}]
  %s4 = inlined_call_operand.hbm [shape: f32[4,1,128], index: 4, kind: input, shape index: {}]
  %s5 = inlined_call_operand.hbm [shape: bf16[4,128,128], index: 5, kind: input, shape index: {}]
  %s6 = inlined_call_operand.hbm [shape: f32[4,1,128], index: 6, kind: input, shape index: {}]
  %s7 = inlined_call_operand.hbm [shape: bf16[4,128,128], index: 7, kind: input, shape index: {}]
  %s8 = inlined_call_operand.hbm [shape: f32[1,128], index: 8, kind: input, shape index: {}]
  %s9 = inlined_call_operand.hbm [shape: bf16[128,128], index: 9, kind: input, shape index: {}]
  %s10 = inlined_call_operand.hbm [shape: f32[1,128], index: 10, kind: input, shape index: {}]
  %s11 = inlined_call_operand.hbm [shape: bf16[128,128], index: 11, kind: input, shape index: {}]
  %s12 = inlined_call_operand.hbm [shape: f32[1,128], index: 12, kind: input, shape index: {}]
  %s13 = inlined_call_operand.hbm [shape: f32[1,128], index: 13, kind: input, shape index: {}]
  %s14 = inlined_call_operand.hbm [shape: f32[1,128], index: 14, kind: input, shape index: {}]
  %s15 = inlined_call_operand.hbm [shape: f32[1,128], index: 15, kind: input, shape index: {}]
  %s16 = inlined_call_operand.hbm [shape: f32[1,128], index: 16, kind: input, shape index: {}]
  %s17 = inlined_call_operand.hbm [shape: f32[2,8,128], index: 17, kind: output, shape index: {}]
  %s18 = sld [smem:[#allocation0]]
  $region169: #{tpu_custom_call.1} parent=0
    _
  %s20 = ssub.s32 1, %s18
  %s21 = scalar_select 0, %s20, %s18
  $region1: #{tpu_custom_call.1} parent=0
    #allocation2 [shape = 'u8[8192]{0}', space=vmem, size = 0x2000, scoped, tag = 'input window, operand 0']
    #allocation3 [shape = 's32[2]{0}', space=sflag, size = 0x8, scoped, tag = 'scoped memory for tpu_custom_call.1']
    #allocation4 [shape = 's32[2]{0}', space=sflag, size = 0x8, scoped, tag = 'scoped memory for tpu_custom_call.1']
    #allocation5 [shape = 'u8[131072]{0}', space=vmem, size = 0x20000, scoped, tag = 'input window, operand 1, single buffered']
    #allocation6 [shape = 's32[1]{0}', space=sflag, size = 0x4, scoped, tag = 'scoped memory for tpu_custom_call.1']
    #allocation7 [shape = 'u8[2048]{0}', space=vmem, size = 0x800, scoped, tag = 'input window, operand 2, single buffered']
    #allocation8 [shape = 'u8[131072]{0}', space=vmem, size = 0x20000, scoped, tag = 'input window, operand 3, single buffered']
    #allocation9 [shape = 's32[1]{0}', space=sflag, size = 0x4, scoped, tag = 'scoped memory for tpu_custom_call.1']
    #allocation10 [shape = 'u8[2048]{0}', space=vmem, size = 0x800, scoped, tag = 'input window, operand 4, single buffered']
    #allocation11 [shape = 'u8[131072]{0}', space=vmem, size = 0x20000, scoped, tag = 'input window, operand 5, single buffered']
    #allocation12 [shape = 's32[1]{0}', space=sflag, size = 0x4, scoped, tag = 'scoped memory for tpu_custom_call.1']
    #allocation13 [shape = 'u8[2048]{0}', space=vmem, size = 0x800, scoped, tag = 'input window, operand 6, single buffered']
    #allocation14 [shape = 'u8[131072]{0}', space=vmem, size = 0x20000, scoped, tag = 'input window, operand 7, single buffered']
    #allocation15 [shape = 's32[1]{0}', space=sflag, size = 0x4, scoped, tag = 'scoped memory for tpu_custom_call.1']
    #allocation16 [shape = 'u8[512]{0}', space=vmem, size = 0x400, scoped, tag = 'input window, operand 8, single buffered']
    #allocation17 [shape = 'u8[32768]{0}', space=vmem, size = 0x8000, scoped, tag = 'input window, operand 9, single buffered']
    #allocation18 [shape = 's32[1]{0}', space=sflag, size = 0x4, scoped, tag = 'scoped memory for tpu_custom_call.1']
    #allocation19 [shape = 'u8[512]{0}', space=vmem, size = 0x400, scoped, tag = 'input window, operand 10, single buffered']
    #allocation20 [shape = 'u8[32768]{0}', space=vmem, size = 0x8000, scoped, tag = 'input window, operand 11, single buffered']
    #allocation21 [shape = 's32[1]{0}', space=sflag, size = 0x4, scoped, tag = 'scoped memory for tpu_custom_call.1']
    #allocation22 [shape = 'u8[512]{0}', space=vmem, size = 0x400, scoped, tag = 'input window, operand 12, single buffered']
    #allocation23 [shape = 'u8[512]{0}', space=vmem, size = 0x400, scoped, tag = 'input window, operand 13, single buffered']
    #allocation24 [shape = 's32[1]{0}', space=sflag, size = 0x4, scoped, tag = 'scoped memory for tpu_custom_call.1']
    #allocation25 [shape = 'u8[512]{0}', space=vmem, size = 0x400, scoped, tag = 'input window, operand 14, single buffered']
    #allocation26 [shape = 'u8[512]{0}', space=vmem, size = 0x400, scoped, tag = 'input window, operand 15, single buffered']
    #allocation27 [shape = 's32[1]{0}', space=sflag, size = 0x4, scoped, tag = 'scoped memory for tpu_custom_call.1']
    #allocation28 [shape = 'u8[512]{0}', space=vmem, size = 0x400, scoped, tag = 'input window, operand 16, single buffered']
    #allocation29 [shape = 'u8[8192]{0}', space=vmem, size = 0x2000, scoped, tag = 'output window, operand 0']
    %22 = vsyncpa [#allocation3], 0
    %s23 = scalar_lea.sflag [#allocation3], 1
    %24 = vsyncpa %s23, 0
    %25 = vsyncpa [#allocation6], 0
    %26 = vsyncpa [#allocation9], 0
    %27 = vsyncpa [#allocation12], 0
    %28 = vsyncpa [#allocation15], 0
    %29 = vsyncpa [#allocation18], 0
    %30 = vsyncpa [#allocation21], 0
    %31 = vsyncpa [#allocation24], 0
    %32 = vsyncpa [#allocation27], 0
    %33 = vsyncpa [#allocation4], 0
    %s34 = scalar_lea.sflag [#allocation4], 1
    %35 = vsyncpa %s34, 0
    loop: start=0, step=1, limit=4
    $region2: #{tpu_custom_call.1} parent=1 // loop_pre_header
      _
    $region3: #{tpu_custom_call.1} parent=1 // loop_header
      %s37 = sphi 0, %s41
      %p38 = scmp.ge.s32.totalorder %s37, 4
      %s47 = sphi 0, %s49
      %s50 = sphi 0, %s47
      %s51 = sphi 0, %s50
      %s67 = sphi 0, %s51
      %s71 = sphi 0, %s71
      %s73 = sphi 0, %s71
      %s74 = sphi 0, %s73
      %s88 = sphi 0, %s74
      %s92 = sphi 0, %s92
      %s94 = sphi 0, %s92
      %s95 = sphi 0, %s94
      %s109 = sphi 0, %s95
      %s113 = sphi 0, %s113
      %s115 = sphi 0, %s113
      %s116 = sphi 0, %s115
      %s130 = sphi 0, %s116
      %s134 = sphi 0, %s134
      %s136 = sphi 0, %s134
      %s137 = sphi 0, %s136
      %s151 = sphi 0, %s137
      %s155 = sphi 0, %s155
      %s157 = sphi 0, %s155
      %s158 = sphi 0, %s157
      %s172 = sphi 0, %s158
      %s176 = sphi 0, %s176
      %s178 = sphi 0, %s176
      %s179 = sphi 0, %s178
      %s193 = sphi 0, %s179
      %s197 = sphi 0, %s197
      %s199 = sphi 0, %s197
      %s200 = sphi 0, %s199
      %s214 = sphi 0, %s200
      %s218 = sphi 0, %s218
      %s220 = sphi 0, %s218
      %s221 = sphi 0, %s220
      %s235 = sphi 0, %s221
      %s239 = sphi 0, %s239
      %s241 = sphi 0, %s239
      %s242 = sphi 0, %s241
      %s256 = sphi 0, %s242
      %s260 = sphi 0, %s260
      %s262 = sphi 0, %s260
      %s263 = sphi 0, %s262
      %s277 = sphi 0, %s263
      %s281 = sphi 0, %s281
      %s283 = sphi 0, %s281
      %s284 = sphi 0, %s283
      %s298 = sphi 0, %s284
      %s302 = sphi 0, %s302
      %s304 = sphi 0, %s302
      %s305 = sphi 0, %s304
      %s319 = sphi 0, %s305
      %s323 = sphi 0, %s323
      %s325 = sphi 0, %s323
      %s326 = sphi 0, %s325
      %s340 = sphi 0, %s326
      %s344 = sphi 0, %s344
      %s346 = sphi 0, %s344
      %s347 = sphi 0, %s346
      %s361 = sphi 0, %s347
      %s365 = sphi 0, %s365
      %s367 = sphi 0, %s365
      %s368 = sphi 0, %s367
      %s382 = sphi 0, %s368
      %s386 = sphi 0, %s386
      %s388 = sphi 0, %s386
      %s389 = sphi 0, %s388
      %s403 = sphi 0, %s389
      %s409 = sphi 0, %s411
      %s412 = sphi 0, %s409
      %s413 = sphi 0, %s412
      %s429 = sphi 0, %s413
    $region4: #{tpu_custom_call.1} parent=1 // loop_header_branch
      %40 = sbr.rel (%p38) target = $region8
    $region5: #{tpu_custom_call.1} parent=1 // loop_body
      %s42 = ssub.s32 %s37, 1
      %s43 = ssub.s32 %s37, 2
      %s44 = sadd.s32 %s37, 1
      %s45 = ssub.s32 %s37, %s44
      %p46 = scmp.eq.s32.totalorder %s45, 0
      %s48 = sadd.s32 %s47, 1
      %s49 = scalar_select %p46, %s47, %s48
      %p52 = pneg %p46
      %p53 = scmp.eq.s32.totalorder %s37, 1
      %p54 = por %p52, %p53
      %p55 = scmp.ne.s32.totalorder %s47, %s50
      %p56 = scmp.eq.s32.totalorder %s37, 0
      %p57 = por %p55, %p56
      %p58 = scmp.ne.s32.totalorder %s47, %s50
      %p59 = scmp.eq.s32.totalorder %s42, 1
      %p60 = por %p58, %p59
      %p61 = scmp.ne.s32.totalorder %s50, %s51
      %p62 = scmp.eq.s32.totalorder %s42, 0
      %p63 = por %p61, %p62
      %p64 = scmp.ne.s32.totalorder %s50, %s51
      %p65 = scmp.eq.s32.totalorder %s43, 1
      %p66 = por %p64, %p65
      %p68 = scmp.ne.s32.totalorder %s51, %s67
      %p69 = scmp.eq.s32.totalorder %s43, 0
      %p70 = por %p68, %p69
      %s72 = sadd.s32 %s71, 1
      %p75 = scmp.eq.s32.totalorder %s37, 1
      %p76 = scmp.ne.s32.totalorder %s71, %s73
      %p77 = scmp.eq.s32.totalorder %s37, 0
      %p78 = por %p76, %p77
      %p79 = scmp.ne.s32.totalorder %s71, %s73
      %p80 = scmp.eq.s32.totalorder %s42, 1
      %p81 = por %p79, %p80
      %p82 = scmp.ne.s32.totalorder %s73, %s74
      %p83 = scmp.eq.s32.totalorder %s42, 0
      %p84 = por %p82, %p83
      %p85 = scmp.ne.s32.totalorder %s73, %s74
      %p86 = scmp.eq.s32.totalorder %s43, 1
      %p87 = por %p85, %p86
      %p89 = scmp.ne.s32.totalorder %s74, %s88
      %p90 = scmp.eq.s32.totalorder %s43, 0
      %p91 = por %p89, %p90
      %s93 = sadd.s32 %s92, 1
      %p96 = scmp.eq.s32.totalorder %s37, 1
      %p97 = scmp.ne.s32.totalorder %s92, %s94
      %p98 = scmp.eq.s32.totalorder %s37, 0
      %p99 = por %p97, %p98
      %p100 = scmp.ne.s32.totalorder %s92, %s94
      %p101 = scmp.eq.s32.totalorder %s42, 1
      %p102 = por %p100, %p101
      %p103 = scmp.ne.s32.totalorder %s94, %s95
      %p104 = scmp.eq.s32.totalorder %s42, 0
      %p105 = por %p103, %p104
      %p106 = scmp.ne.s32.totalorder %s94, %s95
      %p107 = scmp.eq.s32.totalorder %s43, 1
      %p108 = por %p106, %p107
      %p110 = scmp.ne.s32.totalorder %s95, %s109
      %p111 = scmp.eq.s32.totalorder %s43, 0
      %p112 = por %p110, %p111
      %s114 = sadd.s32 %s113, 1
      %p117 = scmp.eq.s32.totalorder %s37, 1
      %p118 = scmp.ne.s32.totalorder %s113, %s115
      %p119 = scmp.eq.s32.totalorder %s37, 0
      %p120 = por %p118, %p119
      %p121 = scmp.ne.s32.totalorder %s113, %s115
      %p122 = scmp.eq.s32.totalorder %s42, 1
      %p123 = por %p121, %p122
      %p124 = scmp.ne.s32.totalorder %s115, %s116
      %p125 = scmp.eq.s32.totalorder %s42, 0
      %p126 = por %p124, %p125
      %p127 = scmp.ne.s32.totalorder %s115, %s116
      %p128 = scmp.eq.s32.totalorder %s43, 1
      %p129 = por %p127, %p128
      %p131 = scmp.ne.s32.totalorder %s116, %s130
      %p132 = scmp.eq.s32.totalorder %s43, 0
      %p133 = por %p131, %p132
      %s135 = sadd.s32 %s134, 1
      %p138 = scmp.eq.s32.totalorder %s37, 1
      %p139 = scmp.ne.s32.totalorder %s134, %s136
      %p140 = scmp.eq.s32.totalorder %s37, 0
      %p141 = por %p139, %p140
      %p142 = scmp.ne.s32.totalorder %s134, %s136
      %p143 = scmp.eq.s32.totalorder %s42, 1
      %p144 = por %p142, %p143
      %p145 = scmp.ne.s32.totalorder %s136, %s137
      %p146 = scmp.eq.s32.totalorder %s42, 0
      %p147 = por %p145, %p146
      %p148 = scmp.ne.s32.totalorder %s136, %s137
      %p149 = scmp.eq.s32.totalorder %s43, 1
      %p150 = por %p148, %p149
      %p152 = scmp.ne.s32.totalorder %s137, %s151
      %p153 = scmp.eq.s32.totalorder %s43, 0
      %p154 = por %p152, %p153
      %s156 = sadd.s32 %s155, 1
      %p159 = scmp.eq.s32.totalorder %s37, 1
      %p160 = scmp.ne.s32.totalorder %s155, %s157
      %p161 = scmp.eq.s32.totalorder %s37, 0
      %p162 = por %p160, %p161
      %p163 = scmp.ne.s32.totalorder %s155, %s157
      %p164 = scmp.eq.s32.totalorder %s42, 1
      %p165 = por %p163, %p164
      %p166 = scmp.ne.s32.totalorder %s157, %s158
      %p167 = scmp.eq.s32.totalorder %s42, 0
      %p168 = por %p166, %p167
      %p169 = scmp.ne.s32.totalorder %s157, %s158
      %p170 = scmp.eq.s32.totalorder %s43, 1
      %p171 = por %p169, %p170
      %p173 = scmp.ne.s32.totalorder %s158, %s172
      %p174 = scmp.eq.s32.totalorder %s43, 0
      %p175 = por %p173, %p174
      %s177 = sadd.s32 %s176, 1
      %p180 = scmp.eq.s32.totalorder %s37, 1
      %p181 = scmp.ne.s32.totalorder %s176, %s178
      %p182 = scmp.eq.s32.totalorder %s37, 0
      %p183 = por %p181, %p182
      %p184 = scmp.ne.s32.totalorder %s176, %s178
      %p185 = scmp.eq.s32.totalorder %s42, 1
      %p186 = por %p184, %p185
      %p187 = scmp.ne.s32.totalorder %s178, %s179
      %p188 = scmp.eq.s32.totalorder %s42, 0
      %p189 = por %p187, %p188
      %p190 = scmp.ne.s32.totalorder %s178, %s179
      %p191 = scmp.eq.s32.totalorder %s43, 1
      %p192 = por %p190, %p191
      %p194 = scmp.ne.s32.totalorder %s179, %s193
      %p195 = scmp.eq.s32.totalorder %s43, 0
      %p196 = por %p194, %p195
      %s198 = sadd.s32 %s197, 1
      %p201 = scmp.eq.s32.totalorder %s37, 1
      %p202 = scmp.ne.s32.totalorder %s197, %s199
      %p203 = scmp.eq.s32.totalorder %s37, 0
      %p204 = por %p202, %p203
      %p205 = scmp.ne.s32.totalorder %s197, %s199
      %p206 = scmp.eq.s32.totalorder %s42, 1
      %p207 = por %p205, %p206
      %p208 = scmp.ne.s32.totalorder %s199, %s200
      %p209 = scmp.eq.s32.totalorder %s42, 0
      %p210 = por %p208, %p209
      %p211 = scmp.ne.s32.totalorder %s199, %s200
      %p212 = scmp.eq.s32.totalorder %s43, 1
      %p213 = por %p211, %p212
      %p215 = scmp.ne.s32.totalorder %s200, %s214
      %p216 = scmp.eq.s32.totalorder %s43, 0
      %p217 = por %p215, %p216
      %s219 = sadd.s32 %s218, 1
      %p222 = scmp.eq.s32.totalorder %s37, 1
      %p223 = scmp.ne.s32.totalorder %s218, %s220
      %p224 = scmp.eq.s32.totalorder %s37, 0
      %p225 = por %p223, %p224
      %p226 = scmp.ne.s32.totalorder %s218, %s220
      %p227 = scmp.eq.s32.totalorder %s42, 1
      %p228 = por %p226, %p227
      %p229 = scmp.ne.s32.totalorder %s220, %s221
      %p230 = scmp.eq.s32.totalorder %s42, 0
      %p231 = por %p229, %p230
      %p232 = scmp.ne.s32.totalorder %s220, %s221
      %p233 = scmp.eq.s32.totalorder %s43, 1
      %p234 = por %p232, %p233
      %p236 = scmp.ne.s32.totalorder %s221, %s235
      %p237 = scmp.eq.s32.totalorder %s43, 0
      %p238 = por %p236, %p237
      %s240 = sadd.s32 %s239, 1
      %p243 = scmp.eq.s32.totalorder %s37, 1
      %p244 = scmp.ne.s32.totalorder %s239, %s241
      %p245 = scmp.eq.s32.totalorder %s37, 0
      %p246 = por %p244, %p245
      %p247 = scmp.ne.s32.totalorder %s239, %s241
      %p248 = scmp.eq.s32.totalorder %s42, 1
      %p249 = por %p247, %p248
      %p250 = scmp.ne.s32.totalorder %s241, %s242
      %p251 = scmp.eq.s32.totalorder %s42, 0
      %p252 = por %p250, %p251
      %p253 = scmp.ne.s32.totalorder %s241, %s242
      %p254 = scmp.eq.s32.totalorder %s43, 1
      %p255 = por %p253, %p254
      %p257 = scmp.ne.s32.totalorder %s242, %s256
      %p258 = scmp.eq.s32.totalorder %s43, 0
      %p259 = por %p257, %p258
      %s261 = sadd.s32 %s260, 1
      %p264 = scmp.eq.s32.totalorder %s37, 1
      %p265 = scmp.ne.s32.totalorder %s260, %s262
      %p266 = scmp.eq.s32.totalorder %s37, 0
      %p267 = por %p265, %p266
      %p268 = scmp.ne.s32.totalorder %s260, %s262
      %p269 = scmp.eq.s32.totalorder %s42, 1
      %p270 = por %p268, %p269
      %p271 = scmp.ne.s32.totalorder %s262, %s263
      %p272 = scmp.eq.s32.totalorder %s42, 0
      %p273 = por %p271, %p272
      %p274 = scmp.ne.s32.totalorder %s262, %s263
      %p275 = scmp.eq.s32.totalorder %s43, 1
      %p276 = por %p274, %p275
      %p278 = scmp.ne.s32.totalorder %s263, %s277
      %p279 = scmp.eq.s32.totalorder %s43, 0
      %p280 = por %p278, %p279
      %s282 = sadd.s32 %s281, 1
      %p285 = scmp.eq.s32.totalorder %s37, 1
      %p286 = scmp.ne.s32.totalorder %s281, %s283
      %p287 = scmp.eq.s32.totalorder %s37, 0
      %p288 = por %p286, %p287
      %p289 = scmp.ne.s32.totalorder %s281, %s283
      %p290 = scmp.eq.s32.totalorder %s42, 1
      %p291 = por %p289, %p290
      %p292 = scmp.ne.s32.totalorder %s283, %s284
      %p293 = scmp.eq.s32.totalorder %s42, 0
      %p294 = por %p292, %p293
      %p295 = scmp.ne.s32.totalorder %s283, %s284
      %p296 = scmp.eq.s32.totalorder %s43, 1
      %p297 = por %p295, %p296
      %p299 = scmp.ne.s32.totalorder %s284, %s298
      %p300 = scmp.eq.s32.totalorder %s43, 0
      %p301 = por %p299, %p300
      %s303 = sadd.s32 %s302, 1
      %p306 = scmp.eq.s32.totalorder %s37, 1
      %p307 = scmp.ne.s32.totalorder %s302, %s304
      %p308 = scmp.eq.s32.totalorder %s37, 0
      %p309 = por %p307, %p308
      %p310 = scmp.ne.s32.totalorder %s302, %s304
      %p311 = scmp.eq.s32.totalorder %s42, 1
      %p312 = por %p310, %p311
      %p313 = scmp.ne.s32.totalorder %s304, %s305
      %p314 = scmp.eq.s32.totalorder %s42, 0
      %p315 = por %p313, %p314
      %p316 = scmp.ne.s32.totalorder %s304, %s305
      %p317 = scmp.eq.s32.totalorder %s43, 1
      %p318 = por %p316, %p317
      %p320 = scmp.ne.s32.totalorder %s305, %s319
      %p321 = scmp.eq.s32.totalorder %s43, 0
      %p322 = por %p320, %p321
      %s324 = sadd.s32 %s323, 1
      %p327 = scmp.eq.s32.totalorder %s37, 1
      %p328 = scmp.ne.s32.totalorder %s323, %s325
      %p329 = scmp.eq.s32.totalorder %s37, 0
      %p330 = por %p328, %p329
      %p331 = scmp.ne.s32.totalorder %s323, %s325
      %p332 = scmp.eq.s32.totalorder %s42, 1
      %p333 = por %p331, %p332
      %p334 = scmp.ne.s32.totalorder %s325, %s326
      %p335 = scmp.eq.s32.totalorder %s42, 0
      %p336 = por %p334, %p335
      %p337 = scmp.ne.s32.totalorder %s325, %s326
      %p338 = scmp.eq.s32.totalorder %s43, 1
      %p339 = por %p337, %p338
      %p341 = scmp.ne.s32.totalorder %s326, %s340
      %p342 = scmp.eq.s32.totalorder %s43, 0
      %p343 = por %p341, %p342
      %s345 = sadd.s32 %s344, 1
      %p348 = scmp.eq.s32.totalorder %s37, 1
      %p349 = scmp.ne.s32.totalorder %s344, %s346
      %p350 = scmp.eq.s32.totalorder %s37, 0
      %p351 = por %p349, %p350
      %p352 = scmp.ne.s32.totalorder %s344, %s346
      %p353 = scmp.eq.s32.totalorder %s42, 1
      %p354 = por %p352, %p353
      %p355 = scmp.ne.s32.totalorder %s346, %s347
      %p356 = scmp.eq.s32.totalorder %s42, 0
      %p357 = por %p355, %p356
      %p358 = scmp.ne.s32.totalorder %s346, %s347
      %p359 = scmp.eq.s32.totalorder %s43, 1
      %p360 = por %p358, %p359
      %p362 = scmp.ne.s32.totalorder %s347, %s361
      %p363 = scmp.eq.s32.totalorder %s43, 0
      %p364 = por %p362, %p363
      %s366 = sadd.s32 %s365, 1
      %p369 = scmp.eq.s32.totalorder %s37, 1
      %p370 = scmp.ne.s32.totalorder %s365, %s367
      %p371 = scmp.eq.s32.totalorder %s37, 0
      %p372 = por %p370, %p371
      %p373 = scmp.ne.s32.totalorder %s365, %s367
      %p374 = scmp.eq.s32.totalorder %s42, 1
      %p375 = por %p373, %p374
      %p376 = scmp.ne.s32.totalorder %s367, %s368
      %p377 = scmp.eq.s32.totalorder %s42, 0
      %p378 = por %p376, %p377
      %p379 = scmp.ne.s32.totalorder %s367, %s368
      %p380 = scmp.eq.s32.totalorder %s43, 1
      %p381 = por %p379, %p380
      %p383 = scmp.ne.s32.totalorder %s368, %s382
      %p384 = scmp.eq.s32.totalorder %s43, 0
      %p385 = por %p383, %p384
      %s387 = sadd.s32 %s386, 1
      %p390 = scmp.eq.s32.totalorder %s37, 1
      %p391 = scmp.ne.s32.totalorder %s386, %s388
      %p392 = scmp.eq.s32.totalorder %s37, 0
      %p393 = por %p391, %p392
      %p394 = scmp.ne.s32.totalorder %s386, %s388
      %p395 = scmp.eq.s32.totalorder %s42, 1
      %p396 = por %p394, %p395
      %p397 = scmp.ne.s32.totalorder %s388, %s389
      %p398 = scmp.eq.s32.totalorder %s42, 0
      %p399 = por %p397, %p398
      %p400 = scmp.ne.s32.totalorder %s388, %s389
      %p401 = scmp.eq.s32.totalorder %s43, 1
      %p402 = por %p400, %p401
      %p404 = scmp.ne.s32.totalorder %s389, %s403
      %p405 = scmp.eq.s32.totalorder %s43, 0
      %p406 = por %p404, %p405
      %s407 = ssub.s32 %s37, %s44
      %p408 = scmp.eq.s32.totalorder %s407, 0
      %s410 = sadd.s32 %s409, 1
      %s411 = scalar_select %p408, %s409, %s410
      %p414 = pneg %p408
      %p415 = scmp.eq.s32.totalorder %s37, 1
      %p416 = por %p414, %p415
      %p417 = scmp.ne.s32.totalorder %s409, %s412
      %p418 = scmp.eq.s32.totalorder %s37, 0
      %p419 = por %p417, %p418
      %p420 = scmp.ne.s32.totalorder %s409, %s412
      %p421 = scmp.eq.s32.totalorder %s42, 1
      %p422 = por %p420, %p421
      %p423 = scmp.ne.s32.totalorder %s412, %s413
      %p424 = scmp.eq.s32.totalorder %s42, 0
      %p425 = por %p423, %p424
      %p426 = scmp.ne.s32.totalorder %s412, %s413
      %p427 = scmp.eq.s32.totalorder %s43, 1
      %p428 = por %p426, %p427
      %p430 = scmp.ne.s32.totalorder %s413, %s429
      %p431 = scmp.eq.s32.totalorder %s43, 0
      %p432 = por %p430, %p431
      %p433 = scmp.le.s32.totalorder 1, %s37
      %p434 = scmp.lt.s32.totalorder %s37, 3
      %p435 = pnand %p433, %p434
      %p436 = pneg %p435
      // Predicated region
      $region9: #{tpu_custom_call.1} parent=5 // pred_check
        _
      $region10: #{tpu_custom_call.1} parent=5 // pred_check_branch
        %438 = sbr.rel (%p435) target = $region12
      $region11: #{tpu_custom_call.1} parent=5 // pred_region
        %s439 = ssub.s32 %s37, 1
        // Predicated region
        $region13: #{tpu_custom_call.1} parent=11 // pred_check
          %p440 = pneg %p84
        $region14: #{tpu_custom_call.1} parent=11 // pred_check_branch
          %442 = sbr.rel (%p440) target = $region16
        $region15: #{tpu_custom_call.1} parent=11 // pred_region
          %s444 = ssub.s32 4096, 4096
          %445 = vsyncadd [#allocation6], %s444
          %s446 = sshll.u32 [#allocation5], 4
          %s447 = int_to_ptr.vmem [resolvable:$true] %s446
          %452 = dma.hbm_to_vmem [thread:$0]  %s1, 4096, %s447, [#allocation6], 64, 64, 4
        $region16: #{tpu_custom_call.1} parent=11 // pred_fallthru
          _
        // Predicated region
        $region17: #{tpu_custom_call.1} parent=11 // pred_check
          %p453 = pneg %p105
        $region18: #{tpu_custom_call.1} parent=11 // pred_check_branch
          %455 = sbr.rel (%p453) target = $region20
        $region19: #{tpu_custom_call.1} parent=11 // pred_region
          %s457 = ssub.s32 64, 64
          %458 = vsyncadd [#allocation6], %s457
          %s459 = sshll.u32 [#allocation7], 4
          %s460 = int_to_ptr.vmem [resolvable:$true] %s459
          %465 = dma.hbm_to_vmem [thread:$0]  %s2, 64, %s460, [#allocation6], 16, 16, 1
        $region20: #{tpu_custom_call.1} parent=11 // pred_fallthru
          _
        // Predicated region
        $region21: #{tpu_custom_call.1} parent=11 // pred_check
          %p466 = pneg %p126
        $region22: #{tpu_custom_call.1} parent=11 // pred_check_branch
          %468 = sbr.rel (%p466) target = $region24
        $region23: #{tpu_custom_call.1} parent=11 // pred_region
          %s470 = ssub.s32 4096, 4096
          %471 = vsyncadd [#allocation9], %s470
          %s472 = sshll.u32 [#allocation8], 4
          %s473 = int_to_ptr.vmem [resolvable:$true] %s472
          %478 = dma.hbm_to_vmem [thread:$0]  %s3, 4096, %s473, [#allocation9], 64, 64, 4
        $region24: #{tpu_custom_call.1} parent=11 // pred_fallthru
          _
        // Predicated region
        $region25: #{tpu_custom_call.1} parent=11 // pred_check
          %p479 = pneg %p147
        $region26: #{tpu_custom_call.1} parent=11 // pred_check_branch
          %481 = sbr.rel (%p479) target = $region28
        $region27: #{tpu_custom_call.1} parent=11 // pred_region
          %s483 = ssub.s32 64, 64
          %484 = vsyncadd [#allocation9], %s483
          %s485 = sshll.u32 [#allocation10], 4
          %s486 = int_to_ptr.vmem [resolvable:$true] %s485
          %491 = dma.hbm_to_vmem [thread:$0]  %s4, 64, %s486, [#allocation9], 16, 16, 1
        $region28: #{tpu_custom_call.1} parent=11 // pred_fallthru
          _
        // Predicated region
        $region29: #{tpu_custom_call.1} parent=11 // pred_check
          %p492 = pneg %p168
        $region30: #{tpu_custom_call.1} parent=11 // pred_check_branch
          %494 = sbr.rel (%p492) target = $region32
        $region31: #{tpu_custom_call.1} parent=11 // pred_region
          %s496 = ssub.s32 4096, 4096
          %497 = vsyncadd [#allocation12], %s496
          %s498 = sshll.u32 [#allocation11], 4
          %s499 = int_to_ptr.vmem [resolvable:$true] %s498
          %504 = dma.hbm_to_vmem [thread:$0]  %s5, 4096, %s499, [#allocation12], 64, 64, 4
        $region32: #{tpu_custom_call.1} parent=11 // pred_fallthru
          _
        // Predicated region
        $region33: #{tpu_custom_call.1} parent=11 // pred_check
          %p505 = pneg %p189
        $region34: #{tpu_custom_call.1} parent=11 // pred_check_branch
          %507 = sbr.rel (%p505) target = $region36
        $region35: #{tpu_custom_call.1} parent=11 // pred_region
          %s509 = ssub.s32 64, 64
          %510 = vsyncadd [#allocation12], %s509
          %s511 = sshll.u32 [#allocation13], 4
          %s512 = int_to_ptr.vmem [resolvable:$true] %s511
          %517 = dma.hbm_to_vmem [thread:$0]  %s6, 64, %s512, [#allocation12], 16, 16, 1
        $region36: #{tpu_custom_call.1} parent=11 // pred_fallthru
          _
        // Predicated region
        $region37: #{tpu_custom_call.1} parent=11 // pred_check
          %p518 = pneg %p210
        $region38: #{tpu_custom_call.1} parent=11 // pred_check_branch
          %520 = sbr.rel (%p518) target = $region40
        $region39: #{tpu_custom_call.1} parent=11 // pred_region
          %s522 = ssub.s32 4096, 4096
          %523 = vsyncadd [#allocation15], %s522
          %s524 = sshll.u32 [#allocation14], 4
          %s525 = int_to_ptr.vmem [resolvable:$true] %s524
          %530 = dma.hbm_to_vmem [thread:$0]  %s7, 4096, %s525, [#allocation15], 64, 64, 4
        $region40: #{tpu_custom_call.1} parent=11 // pred_fallthru
          _
        // Predicated region
        $region41: #{tpu_custom_call.1} parent=11 // pred_check
          %p531 = pneg %p231
        $region42: #{tpu_custom_call.1} parent=11 // pred_check_branch
          %533 = sbr.rel (%p531) target = $region44
        $region43: #{tpu_custom_call.1} parent=11 // pred_region
          %s535 = ssub.s32 16, 16
          %536 = vsyncadd [#allocation15], %s535
          %s538 = sshll.u32 [#allocation16], 4
          %s539 = int_to_ptr.vmem [resolvable:$true] %s538
          %541 = dma.hbm_to_vmem [thread:$0]  %s8, 16, %s539, [#allocation15]
        $region44: #{tpu_custom_call.1} parent=11 // pred_fallthru
          _
        // Predicated region
        $region45: #{tpu_custom_call.1} parent=11 // pred_check
          %p542 = pneg %p252
        $region46: #{tpu_custom_call.1} parent=11 // pred_check_branch
          %544 = sbr.rel (%p542) target = $region48
        $region47: #{tpu_custom_call.1} parent=11 // pred_region
          %s546 = ssub.s32 1024, 1024
          %547 = vsyncadd [#allocation18], %s546
          %s548 = sshll.u32 [#allocation17], 4
          %s549 = int_to_ptr.vmem [resolvable:$true] %s548
          %554 = dma.hbm_to_vmem [thread:$0]  %s9, 1024, %s549, [#allocation18], 64, 64, 4
        $region48: #{tpu_custom_call.1} parent=11 // pred_fallthru
          _
        // Predicated region
        $region49: #{tpu_custom_call.1} parent=11 // pred_check
          %p555 = pneg %p273
        $region50: #{tpu_custom_call.1} parent=11 // pred_check_branch
          %557 = sbr.rel (%p555) target = $region52
        $region51: #{tpu_custom_call.1} parent=11 // pred_region
          %s559 = ssub.s32 16, 16
          %560 = vsyncadd [#allocation18], %s559
          %s562 = sshll.u32 [#allocation19], 4
          %s563 = int_to_ptr.vmem [resolvable:$true] %s562
          %565 = dma.hbm_to_vmem [thread:$0]  %s10, 16, %s563, [#allocation18]
        $region52: #{tpu_custom_call.1} parent=11 // pred_fallthru
          _
        // Predicated region
        $region53: #{tpu_custom_call.1} parent=11 // pred_check
          %p566 = pneg %p294
        $region54: #{tpu_custom_call.1} parent=11 // pred_check_branch
          %568 = sbr.rel (%p566) target = $region56
        $region55: #{tpu_custom_call.1} parent=11 // pred_region
          %s570 = ssub.s32 1024, 1024
          %571 = vsyncadd [#allocation21], %s570
          %s572 = sshll.u32 [#allocation20], 4
          %s573 = int_to_ptr.vmem [resolvable:$true] %s572
          %578 = dma.hbm_to_vmem [thread:$0]  %s11, 1024, %s573, [#allocation21], 64, 64, 4
        $region56: #{tpu_custom_call.1} parent=11 // pred_fallthru
          _
        // Predicated region
        $region57: #{tpu_custom_call.1} parent=11 // pred_check
          %p579 = pneg %p315
        $region58: #{tpu_custom_call.1} parent=11 // pred_check_branch
          %581 = sbr.rel (%p579) target = $region60
        $region59: #{tpu_custom_call.1} parent=11 // pred_region
          %s583 = ssub.s32 16, 16
          %584 = vsyncadd [#allocation21], %s583
          %s586 = sshll.u32 [#allocation22], 4
          %s587 = int_to_ptr.vmem [resolvable:$true] %s586
          %589 = dma.hbm_to_vmem [thread:$0]  %s12, 16, %s587, [#allocation21]
        $region60: #{tpu_custom_call.1} parent=11 // pred_fallthru
          _
        // Predicated region
        $region61: #{tpu_custom_call.1} parent=11 // pred_check
          %p590 = pneg %p336
        $region62: #{tpu_custom_call.1} parent=11 // pred_check_branch
          %592 = sbr.rel (%p590) target = $region64
        $region63: #{tpu_custom_call.1} parent=11 // pred_region
          %s594 = ssub.s32 16, 16
          %595 = vsyncadd [#allocation24], %s594
          %s597 = sshll.u32 [#allocation23], 4
          %s598 = int_to_ptr.vmem [resolvable:$true] %s597
          %600 = dma.hbm_to_vmem [thread:$0]  %s13, 16, %s598, [#allocation24]
        $region64: #{tpu_custom_call.1} parent=11 // pred_fallthru
          _
        // Predicated region
        $region65: #{tpu_custom_call.1} parent=11 // pred_check
          %p601 = pneg %p357
        $region66: #{tpu_custom_call.1} parent=11 // pred_check_branch
          %603 = sbr.rel (%p601) target = $region68
        $region67: #{tpu_custom_call.1} parent=11 // pred_region
          %s605 = ssub.s32 16, 16
          %606 = vsyncadd [#allocation24], %s605
          %s608 = sshll.u32 [#allocation25], 4
          %s609 = int_to_ptr.vmem [resolvable:$true] %s608
          %611 = dma.hbm_to_vmem [thread:$0]  %s14, 16, %s609, [#allocation24]
        $region68: #{tpu_custom_call.1} parent=11 // pred_fallthru
          _
        // Predicated region
        $region69: #{tpu_custom_call.1} parent=11 // pred_check
          %p612 = pneg %p378
        $region70: #{tpu_custom_call.1} parent=11 // pred_check_branch
          %614 = sbr.rel (%p612) target = $region72
        $region71: #{tpu_custom_call.1} parent=11 // pred_region
          %s616 = ssub.s32 16, 16
          %617 = vsyncadd [#allocation27], %s616
          %s619 = sshll.u32 [#allocation26], 4
          %s620 = int_to_ptr.vmem [resolvable:$true] %s619
          %622 = dma.hbm_to_vmem [thread:$0]  %s15, 16, %s620, [#allocation27]
        $region72: #{tpu_custom_call.1} parent=11 // pred_fallthru
          _
        // Predicated region
        $region73: #{tpu_custom_call.1} parent=11 // pred_check
          %p623 = pneg %p399
        $region74: #{tpu_custom_call.1} parent=11 // pred_check_branch
          %625 = sbr.rel (%p623) target = $region76
        $region75: #{tpu_custom_call.1} parent=11 // pred_region
          %s627 = ssub.s32 16, 16
          %628 = vsyncadd [#allocation27], %s627
          %s630 = sshll.u32 [#allocation28], 4
          %s631 = int_to_ptr.vmem [resolvable:$true] %s630
          %633 = dma.hbm_to_vmem [thread:$0]  %s16, 16, %s631, [#allocation27]
        $region76: #{tpu_custom_call.1} parent=11 // pred_fallthru
          _
      $region12: #{tpu_custom_call.1} parent=5 // pred_fallthru
        _
      %p634 = scmp.lt.s32.totalorder %s37, 2
      // Predicated region
      $region77: #{tpu_custom_call.1} parent=5 // pred_check
        %p635 = pneg %p634
      $region78: #{tpu_custom_call.1} parent=5 // pred_check_branch
        %637 = sbr.rel (%p635) target = $region80
      $region79: #{tpu_custom_call.1} parent=5 // pred_region
        // Predicated region
        $region81: #{tpu_custom_call.1} parent=79 // pred_check
          %p638 = pneg %p57
        $region82: #{tpu_custom_call.1} parent=79 // pred_check_branch
          %640 = sbr.rel (%p638) target = $region84
        $region83: #{tpu_custom_call.1} parent=79 // pred_region
          %s641 = sand.u32 %s47, 1
          %s642 = scalar_lea.sflag [#allocation3], %s641
          %s643 = sand.u32 %s47, 1
          %s644 = smul.addr %s643, 8
          %s645 = scalar_lea.vmem [#allocation2], %s644
          %s647 = ssub.s32 128, 128
          %648 = vsyncadd %s642, %s647
          %s649 = smul.addr %s37, 128
          %s650 = scalar_lea.hbm %s0, %s649
          %s652 = sshll.u32 %s645, 4
          %s653 = int_to_ptr.vmem [resolvable:$true] %s652
          %655 = dma.hbm_to_vmem [thread:$0]  %s650, 128, %s653, %s642
        $region84: #{tpu_custom_call.1} parent=79 // pred_fallthru
          _
      $region80: #{tpu_custom_call.1} parent=5 // pred_fallthru
        _
      %p656 = scmp.le.s32.totalorder 1, %s37
      %p657 = scmp.lt.s32.totalorder %s37, 3
      %p658 = pnand %p656, %p657
      %p659 = pneg %p658
      // Predicated region
      $region85: #{tpu_custom_call.1} parent=5 // pred_check
        _
      $region86: #{tpu_custom_call.1} parent=5 // pred_check_branch
        %661 = sbr.rel (%p658) target = $region88
      $region87: #{tpu_custom_call.1} parent=5 // pred_region
        %s662 = ssub.s32 %s37, 1
        %s663 = sand.u32 %s50, 1
        %s664 = scalar_lea.sflag [#allocation3], %s663
        %s665 = sand.u32 %s50, 1
        %s666 = smul.addr %s665, 8
        %s667 = scalar_lea.vmem [#allocation2], %s666
        // Predicated region
        $region89: #{tpu_custom_call.1} parent=87 // pred_check
          %p668 = pneg %p63
        $region90: #{tpu_custom_call.1} parent=87 // pred_check_branch
          %670 = sbr.rel (%p668) target = $region92
        $region91: #{tpu_custom_call.1} parent=87 // pred_region
          %671 = dma.done %s664, 128
        $region92: #{tpu_custom_call.1} parent=87 // pred_fallthru
          _
        // Predicated region
        $region93: #{tpu_custom_call.1} parent=87 // pred_check
          %p672 = pneg %p84
        $region94: #{tpu_custom_call.1} parent=87 // pred_check_branch
          %674 = sbr.rel (%p672) target = $region96
        $region95: #{tpu_custom_call.1} parent=87 // pred_region
          %675 = dma.done [#allocation6], 4096
        $region96: #{tpu_custom_call.1} parent=87 // pred_fallthru
          _
        // Predicated region
        $region97: #{tpu_custom_call.1} parent=87 // pred_check
          %p676 = pneg %p105
        $region98: #{tpu_custom_call.1} parent=87 // pred_check_branch
          %678 = sbr.rel (%p676) target = $region100
        $region99: #{tpu_custom_call.1} parent=87 // pred_region
          %679 = dma.done [#allocation6], 64
        $region100: #{tpu_custom_call.1} parent=87 // pred_fallthru
          _
        // Predicated region
        $region101: #{tpu_custom_call.1} parent=87 // pred_check
          %p680 = pneg %p126
        $region102: #{tpu_custom_call.1} parent=87 // pred_check_branch
          %682 = sbr.rel (%p680) target = $region104
        $region103: #{tpu_custom_call.1} parent=87 // pred_region
          %683 = dma.done [#allocation9], 4096
        $region104: #{tpu_custom_call.1} parent=87 // pred_fallthru
          _
        // Predicated region
        $region105: #{tpu_custom_call.1} parent=87 // pred_check
          %p684 = pneg %p147
        $region106: #{tpu_custom_call.1} parent=87 // pred_check_branch
          %686 = sbr.rel (%p684) target = $region108
        $region107: #{tpu_custom_call.1} parent=87 // pred_region
          %687 = dma.done [#allocation9], 64
        $region108: #{tpu_custom_call.1} parent=87 // pred_fallthru
          _
        // Predicated region
        $region109: #{tpu_custom_call.1} parent=87 // pred_check
          %p688 = pneg %p168
        $region110: #{tpu_custom_call.1} parent=87 // pred_check_branch
          %690 = sbr.rel (%p688) target = $region112
        $region111: #{tpu_custom_call.1} parent=87 // pred_region
          %691 = dma.done [#allocation12], 4096
        $region112: #{tpu_custom_call.1} parent=87 // pred_fallthru
          _
        // Predicated region
        $region113: #{tpu_custom_call.1} parent=87 // pred_check
          %p692 = pneg %p189
        $region114: #{tpu_custom_call.1} parent=87 // pred_check_branch
          %694 = sbr.rel (%p692) target = $region116
        $region115: #{tpu_custom_call.1} parent=87 // pred_region
          %695 = dma.done [#allocation12], 64
        $region116: #{tpu_custom_call.1} parent=87 // pred_fallthru
          _
        // Predicated region
        $region117: #{tpu_custom_call.1} parent=87 // pred_check
          %p696 = pneg %p210
        $region118: #{tpu_custom_call.1} parent=87 // pred_check_branch
          %698 = sbr.rel (%p696) target = $region120
        $region119: #{tpu_custom_call.1} parent=87 // pred_region
          %699 = dma.done [#allocation15], 4096
        $region120: #{tpu_custom_call.1} parent=87 // pred_fallthru
          _
        // Predicated region
        $region121: #{tpu_custom_call.1} parent=87 // pred_check
          %p700 = pneg %p231
        $region122: #{tpu_custom_call.1} parent=87 // pred_check_branch
          %702 = sbr.rel (%p700) target = $region124
        $region123: #{tpu_custom_call.1} parent=87 // pred_region
          %703 = dma.done [#allocation15], 16
        $region124: #{tpu_custom_call.1} parent=87 // pred_fallthru
          _
        // Predicated region
        $region125: #{tpu_custom_call.1} parent=87 // pred_check
          %p704 = pneg %p252
        $region126: #{tpu_custom_call.1} parent=87 // pred_check_branch
          %706 = sbr.rel (%p704) target = $region128
        $region127: #{tpu_custom_call.1} parent=87 // pred_region
          %707 = dma.done [#allocation18], 1024
        $region128: #{tpu_custom_call.1} parent=87 // pred_fallthru
          _
        // Predicated region
        $region129: #{tpu_custom_call.1} parent=87 // pred_check
          %p708 = pneg %p273
        $region130: #{tpu_custom_call.1} parent=87 // pred_check_branch
          %710 = sbr.rel (%p708) target = $region132
        $region131: #{tpu_custom_call.1} parent=87 // pred_region
          %711 = dma.done [#allocation18], 16
        $region132: #{tpu_custom_call.1} parent=87 // pred_fallthru
          _
        // Predicated region
        $region133: #{tpu_custom_call.1} parent=87 // pred_check
          %p712 = pneg %p294
        $region134: #{tpu_custom_call.1} parent=87 // pred_check_branch
          %714 = sbr.rel (%p712) target = $region136
        $region135: #{tpu_custom_call.1} parent=87 // pred_region
          %715 = dma.done [#allocation21], 1024
        $region136: #{tpu_custom_call.1} parent=87 // pred_fallthru
          _
        // Predicated region
        $region137: #{tpu_custom_call.1} parent=87 // pred_check
          %p716 = pneg %p315
        $region138: #{tpu_custom_call.1} parent=87 // pred_check_branch
          %718 = sbr.rel (%p716) target = $region140
        $region139: #{tpu_custom_call.1} parent=87 // pred_region
          %719 = dma.done [#allocation21], 16
        $region140: #{tpu_custom_call.1} parent=87 // pred_fallthru
          _
        // Predicated region
        $region141: #{tpu_custom_call.1} parent=87 // pred_check
          %p720 = pneg %p336
        $region142: #{tpu_custom_call.1} parent=87 // pred_check_branch
          %722 = sbr.rel (%p720) target = $region144
        $region143: #{tpu_custom_call.1} parent=87 // pred_region
          %723 = dma.done [#allocation24], 16
        $region144: #{tpu_custom_call.1} parent=87 // pred_fallthru
          _
        // Predicated region
        $region145: #{tpu_custom_call.1} parent=87 // pred_check
          %p724 = pneg %p357
        $region146: #{tpu_custom_call.1} parent=87 // pred_check_branch
          %726 = sbr.rel (%p724) target = $region148
        $region147: #{tpu_custom_call.1} parent=87 // pred_region
          %727 = dma.done [#allocation24], 16
        $region148: #{tpu_custom_call.1} parent=87 // pred_fallthru
          _
        // Predicated region
        $region149: #{tpu_custom_call.1} parent=87 // pred_check
          %p728 = pneg %p378
        $region150: #{tpu_custom_call.1} parent=87 // pred_check_branch
          %730 = sbr.rel (%p728) target = $region152
        $region151: #{tpu_custom_call.1} parent=87 // pred_region
          %731 = dma.done [#allocation27], 16
        $region152: #{tpu_custom_call.1} parent=87 // pred_fallthru
          _
        // Predicated region
        $region153: #{tpu_custom_call.1} parent=87 // pred_check
          %p732 = pneg %p399
        $region154: #{tpu_custom_call.1} parent=87 // pred_check_branch
          %734 = sbr.rel (%p732) target = $region156
        $region155: #{tpu_custom_call.1} parent=87 // pred_region
          %735 = dma.done [#allocation27], 16
        $region156: #{tpu_custom_call.1} parent=87 // pred_fallthru
          _
        %s736 = sand.u32 %s50, 1
        %s737 = scalar_lea.sflag [#allocation3], %s736
        %s738 = sand.u32 %s50, 1
        %s739 = smul.addr %s738, 8
        %s740 = scalar_lea.vmem [#allocation2], %s739
        %p741 = pneg %p63
        %p742 = pneg %p60
        %p743 = pneg %p84
        %p744 = pneg %p81
        %p745 = pneg %p105
        %p746 = pneg %p102
        %p747 = pneg %p126
        %p748 = pneg %p123
        %p749 = pneg %p147
        %p750 = pneg %p144
        %p751 = pneg %p168
        %p752 = pneg %p165
        %p753 = pneg %p189
        %p754 = pneg %p186
        %p755 = pneg %p210
        %p756 = pneg %p207
        %p757 = pneg %p231
        %p758 = pneg %p228
        %p759 = pneg %p252
        %p760 = pneg %p249
        %p761 = pneg %p273
        %p762 = pneg %p270
        %p763 = pneg %p294
        %p764 = pneg %p291
        %p765 = pneg %p315
        %p766 = pneg %p312
        %p767 = pneg %p336
        %p768 = pneg %p333
        %p769 = pneg %p357
        %p770 = pneg %p354
        %p771 = pneg %p378
        %p772 = pneg %p375
        %p773 = pneg %p399
        %p774 = pneg %p396
        %p775 = pneg %p425
        %p776 = pneg %p422
        %s777 = sand.u32 %s412, 1
        %s778 = scalar_lea.sflag [#allocation4], %s777
        %s779 = sand.u32 %s412, 1
        %s780 = smul.addr %s779, 8
        %s781 = scalar_lea.vmem [#allocation29], %s780
        %v783 = vld [vmem:[%s667] sm:$0xff]
        %v784 = vpack.c.bf16 %v783, %v783
        %v785 = vld [vmem:[#allocation5] sm:$0xf]
        %v786 = vld [vmem:[#allocation5 + $0x4] sm:$0xf]
        %v787 = vld [vmem:[#allocation5 + $0x8] sm:$0xf]
        %v788 = vld [vmem:[#allocation5 + $0xc] sm:$0xf]
        %v789 = vld [vmem:[#allocation5 + $0x10] sm:$0xf]
        %v790 = vld [vmem:[#allocation5 + $0x14] sm:$0xf]
        %v791 = vld [vmem:[#allocation5 + $0x18] sm:$0xf]
        %v792 = vld [vmem:[#allocation5 + $0x1c] sm:$0xf]
        %v793 = vld [vmem:[#allocation5 + $0x20] sm:$0xf]
        %v794 = vld [vmem:[#allocation5 + $0x24] sm:$0xf]
        %v795 = vld [vmem:[#allocation5 + $0x28] sm:$0xf]
        %v796 = vld [vmem:[#allocation5 + $0x2c] sm:$0xf]
        %v797 = vld [vmem:[#allocation5 + $0x30] sm:$0xf]
        %v798 = vld [vmem:[#allocation5 + $0x34] sm:$0xf]
        %v799 = vld [vmem:[#allocation5 + $0x38] sm:$0xf]
        %v800 = vld [vmem:[#allocation5 + $0x3c] sm:$0xf]
        %v801 = vld [vmem:[#allocation5 + $0x40] sm:$0xf]
        %v802 = vld [vmem:[#allocation5 + $0x44] sm:$0xf]
        %v803 = vld [vmem:[#allocation5 + $0x48] sm:$0xf]
        %v804 = vld [vmem:[#allocation5 + $0x4c] sm:$0xf]
        %v805 = vld [vmem:[#allocation5 + $0x50] sm:$0xf]
        %v806 = vld [vmem:[#allocation5 + $0x54] sm:$0xf]
        %v807 = vld [vmem:[#allocation5 + $0x58] sm:$0xf]
        %v808 = vld [vmem:[#allocation5 + $0x5c] sm:$0xf]
        %v809 = vld [vmem:[#allocation5 + $0x60] sm:$0xf]
        %v810 = vld [vmem:[#allocation5 + $0x64] sm:$0xf]
        %v811 = vld [vmem:[#allocation5 + $0x68] sm:$0xf]
        %v812 = vld [vmem:[#allocation5 + $0x6c] sm:$0xf]
        %v813 = vld [vmem:[#allocation5 + $0x70] sm:$0xf]
        %v814 = vld [vmem:[#allocation5 + $0x74] sm:$0xf]
        %v815 = vld [vmem:[#allocation5 + $0x78] sm:$0xf]
        %v816 = vld [vmem:[#allocation5 + $0x7c] sm:$0xf]
        %v817 = vld [vmem:[#allocation5 + $0x80] sm:$0xf]
        %v818 = vld [vmem:[#allocation5 + $0x84] sm:$0xf]
        %v819 = vld [vmem:[#allocation5 + $0x88] sm:$0xf]
        %v820 = vld [vmem:[#allocation5 + $0x8c] sm:$0xf]
        %v821 = vld [vmem:[#allocation5 + $0x90] sm:$0xf]
        %v822 = vld [vmem:[#allocation5 + $0x94] sm:$0xf]
        %v823 = vld [vmem:[#allocation5 + $0x98] sm:$0xf]
        %v824 = vld [vmem:[#allocation5 + $0x9c] sm:$0xf]
        %v825 = vld [vmem:[#allocation5 + $0xa0] sm:$0xf]
        %v826 = vld [vmem:[#allocation5 + $0xa4] sm:$0xf]
        %v827 = vld [vmem:[#allocation5 + $0xa8] sm:$0xf]
        %v828 = vld [vmem:[#allocation5 + $0xac] sm:$0xf]
        %v829 = vld [vmem:[#allocation5 + $0xb0] sm:$0xf]
        %v830 = vld [vmem:[#allocation5 + $0xb4] sm:$0xf]
        %v831 = vld [vmem:[#allocation5 + $0xb8] sm:$0xf]
        %v832 = vld [vmem:[#allocation5 + $0xbc] sm:$0xf]
        %v833 = vld [vmem:[#allocation5 + $0xc0] sm:$0xf]
        %v834 = vld [vmem:[#allocation5 + $0xc4] sm:$0xf]
        %v835 = vld [vmem:[#allocation5 + $0xc8] sm:$0xf]
        %v836 = vld [vmem:[#allocation5 + $0xcc] sm:$0xf]
        %v837 = vld [vmem:[#allocation5 + $0xd0] sm:$0xf]
        %v838 = vld [vmem:[#allocation5 + $0xd4] sm:$0xf]
        %v839 = vld [vmem:[#allocation5 + $0xd8] sm:$0xf]
        %v840 = vld [vmem:[#allocation5 + $0xdc] sm:$0xf]
        %v841 = vld [vmem:[#allocation5 + $0xe0] sm:$0xf]
        %v842 = vld [vmem:[#allocation5 + $0xe4] sm:$0xf]
        %v843 = vld [vmem:[#allocation5 + $0xe8] sm:$0xf]
        %v844 = vld [vmem:[#allocation5 + $0xec] sm:$0xf]
        %v845 = vld [vmem:[#allocation5 + $0xf0] sm:$0xf]
        %v846 = vld [vmem:[#allocation5 + $0xf4] sm:$0xf]
        %v847 = vld [vmem:[#allocation5 + $0xf8] sm:$0xf]
        %v848 = vld [vmem:[#allocation5 + $0xfc] sm:$0xf]
        %v849 = vld [vmem:[#allocation7] sm:$0x1]
        %v850 = vld [vmem:[#allocation7 + $0x1] sm:$0x1]
        %v851 = vld [vmem:[#allocation7 + $0x2] sm:$0x1]
        %v852 = vld [vmem:[#allocation7 + $0x3] sm:$0x1]
        %v857 = vlaneseq
        %v858 = vshrl.u32 %v857, 7
        %v859 = vsub.s32 0, %v858
        %v860 = vrot.slane %v849, %v859
        %v861 = vlaneseq
        %v862 = vshrl.u32 %v861, 7
        %v863 = vsub.s32 0, %v862
        %v864 = vrot.slane %v850, %v863
        %v865 = vlaneseq
        %v866 = vshrl.u32 %v865, 7
        %v867 = vsub.s32 0, %v866
        %v868 = vrot.slane %v851, %v867
        %v869 = vlaneseq
        %v870 = vshrl.u32 %v869, 7
        %v871 = vsub.s32 0, %v870
        %v872 = vrot.slane %v852, %v871
        %v893 = vunpack.c.l.b16 %v785
        %v894 = vunpack.c.l.b16 %v786
        %v895 = vunpack.c.l.b16 %v787
        %v896 = vunpack.c.l.b16 %v788
        %v897 = vunpack.c.l.b16 %v789
        %v898 = vunpack.c.l.b16 %v790
        %v899 = vunpack.c.l.b16 %v791
        %v900 = vunpack.c.l.b16 %v792
        %v901 = vunpack.c.l.b16 %v793
        %v902 = vunpack.c.l.b16 %v794
        %v903 = vunpack.c.l.b16 %v795
        %v904 = vunpack.c.l.b16 %v796
        %v905 = vunpack.c.l.b16 %v797
        %v906 = vunpack.c.l.b16 %v798
        %v907 = vunpack.c.l.b16 %v799
        %v908 = vunpack.c.l.b16 %v800
        %v909 = vpack.c.b16 %v894, %v893
        %v910 = vpack.c.b16 %v896, %v895
        %v911 = vpack.c.b16 %v898, %v897
        %v912 = vpack.c.b16 %v900, %v899
        %v913 = vpack.c.b16 %v902, %v901
        %v914 = vpack.c.b16 %v904, %v903
        %v915 = vpack.c.b16 %v906, %v905
        %v916 = vpack.c.b16 %v908, %v907
        %925 = vmatprep.subr.bf16.mxu0 0
        %926 = vmatpush1.bf16.msra.mxu0 %v909
        %927 = vmatprep.subr.bf16.mxu0 0
        %928 = vmatpush1.bf16.msra.mxu0 %v910
        %929 = vmatprep.subr.bf16.mxu0 0
        %930 = vmatpush1.bf16.msra.mxu0 %v911
        %931 = vmatprep.subr.bf16.mxu0 0
        %932 = vmatpush1.bf16.msra.mxu0 %v912
        %933 = vmatprep.subr.bf16.mxu0 0
        %934 = vmatpush1.bf16.msra.mxu0 %v913
        %935 = vmatprep.subr.bf16.mxu0 0
        %936 = vmatpush1.bf16.msra.mxu0 %v914
        %937 = vmatprep.subr.bf16.mxu0 0
        %938 = vmatpush1.bf16.msra.mxu0 %v915
        %939 = vmatprep.subr.bf16.mxu0 0
        %940 = vmatpush1.bf16.msra.mxu0 %v916
        %941 = vmatprep.subr.bf16.mxu0 0
        %942 = vmatpush1.bf16.msra.mxu0 0
        %943 = vmatprep.subr.bf16.mxu0 0
        %944 = vmatpush1.bf16.msra.mxu0 0
        %945 = vmatprep.subr.bf16.mxu0 0
        %946 = vmatpush1.bf16.msra.mxu0 0
        %947 = vmatprep.subr.bf16.mxu0 0
        %948 = vmatpush1.bf16.msra.mxu0 0
        %949 = vmatprep.subr.bf16.mxu0 0
        %950 = vmatpush1.bf16.msra.mxu0 0
        %951 = vmatprep.subr.bf16.mxu0 0
        %952 = vmatpush1.bf16.msra.mxu0 0
        %953 = vmatprep.subr.bf16.mxu0 0
        %954 = vmatpush1.bf16.msra.mxu0 0
        %955 = vmatprep.subr.bf16.mxu0 0
        %956 = vmatpush1.bf16.msra.mxu0 0
        %957 = vmatprep.mubr.bf16.mxu0 0
        %958 = vmatmul.mubr.bf16.gmra.mrb[0].mxu0 %v784
        %v959 = vpop.f32.mrb[0].mxu0
        %v960 = vadd.f32 %v860, %v959
        %v961 = vpop.f32.mrb[0].mxu0
        %v962 = vpop.f32.mrb[0].mxu0
        %v963 = vpop.f32.mrb[0].mxu0
        %964 = vdwg.mxu0
        %v981 = vunpack.c.l.b16 %v801
        %v982 = vunpack.c.l.b16 %v802
        %v983 = vunpack.c.l.b16 %v803
        %v984 = vunpack.c.l.b16 %v804
        %v985 = vunpack.c.l.b16 %v805
        %v986 = vunpack.c.l.b16 %v806
        %v987 = vunpack.c.l.b16 %v807
        %v988 = vunpack.c.l.b16 %v808
        %v989 = vunpack.c.l.b16 %v809
        %v990 = vunpack.c.l.b16 %v810
        %v991 = vunpack.c.l.b16 %v811
        %v992 = vunpack.c.l.b16 %v812
        %v993 = vunpack.c.l.b16 %v813
        %v994 = vunpack.c.l.b16 %v814
        %v995 = vunpack.c.l.b16 %v815
        %v996 = vunpack.c.l.b16 %v816
        %v997 = vpack.c.b16 %v982, %v981
        %v998 = vpack.c.b16 %v984, %v983
        %v999 = vpack.c.b16 %v986, %v985
        %v1000 = vpack.c.b16 %v988, %v987
        %v1001 = vpack.c.b16 %v990, %v989
        %v1002 = vpack.c.b16 %v992, %v991
        %v1003 = vpack.c.b16 %v994, %v993
        %v1004 = vpack.c.b16 %v996, %v995
        %1013 = vmatprep.subr.bf16.mxu0 0
        %1014 = vmatpush1.bf16.msra.mxu0 %v997
        %1015 = vmatprep.subr.bf16.mxu0 0
        %1016 = vmatpush1.bf16.msra.mxu0 %v998
        %1017 = vmatprep.subr.bf16.mxu0 0
        %1018 = vmatpush1.bf16.msra.mxu0 %v999
        %1019 = vmatprep.subr.bf16.mxu0 0
        %1020 = vmatpush1.bf16.msra.mxu0 %v1000
        %1021 = vmatprep.subr.bf16.mxu0 0
        %1022 = vmatpush1.bf16.msra.mxu0 %v1001
        %1023 = vmatprep.subr.bf16.mxu0 0
        %1024 = vmatpush1.bf16.msra.mxu0 %v1002
        %1025 = vmatprep.subr.bf16.mxu0 0
        %1026 = vmatpush1.bf16.msra.mxu0 %v1003
        %1027 = vmatprep.subr.bf16.mxu0 0
        %1028 = vmatpush1.bf16.msra.mxu0 %v1004
        %1029 = vmatprep.subr.bf16.mxu0 0
        %1030 = vmatpush1.bf16.msra.mxu0 0
        %1031 = vmatprep.subr.bf16.mxu0 0
        %1032 = vmatpush1.bf16.msra.mxu0 0
        %1033 = vmatprep.subr.bf16.mxu0 0
        %1034 = vmatpush1.bf16.msra.mxu0 0
        %1035 = vmatprep.subr.bf16.mxu0 0
        %1036 = vmatpush1.bf16.msra.mxu0 0
        %1037 = vmatprep.subr.bf16.mxu0 0
        %1038 = vmatpush1.bf16.msra.mxu0 0
        %1039 = vmatprep.subr.bf16.mxu0 0
        %1040 = vmatpush1.bf16.msra.mxu0 0
        %1041 = vmatprep.subr.bf16.mxu0 0
        %1042 = vmatpush1.bf16.msra.mxu0 0
        %1043 = vmatprep.subr.bf16.mxu0 0
        %1044 = vmatpush1.bf16.msra.mxu0 0
        %1045 = vmatprep.mubr.bf16.mxu0 0
        %1046 = vmatmul.mubr.bf16.gmra.mrb[0].mxu0 %v784
        %v1047 = vpop.f32.mrb[0].mxu0
        %v1048 = vadd.f32 %v864, %v1047
        %v1049 = vpop.f32.mrb[0].mxu0
        %v1050 = vpop.f32.mrb[0].mxu0
        %v1051 = vpop.f32.mrb[0].mxu0
        %1052 = vdwg.mxu0
        %v1069 = vunpack.c.l.b16 %v817
        %v1070 = vunpack.c.l.b16 %v818
        %v1071 = vunpack.c.l.b16 %v819
        %v1072 = vunpack.c.l.b16 %v820
        %v1073 = vunpack.c.l.b16 %v821
        %v1074 = vunpack.c.l.b16 %v822
        %v1075 = vunpack.c.l.b16 %v823
        %v1076 = vunpack.c.l.b16 %v824
        %v1077 = vunpack.c.l.b16 %v825
        %v1078 = vunpack.c.l.b16 %v826
        %v1079 = vunpack.c.l.b16 %v827
        %v1080 = vunpack.c.l.b16 %v828
        %v1081 = vunpack.c.l.b16 %v829
        %v1082 = vunpack.c.l.b16 %v830
        %v1083 = vunpack.c.l.b16 %v831
        %v1084 = vunpack.c.l.b16 %v832
        %v1085 = vpack.c.b16 %v1070, %v1069
        %v1086 = vpack.c.b16 %v1072, %v1071
        %v1087 = vpack.c.b16 %v1074, %v1073
        %v1088 = vpack.c.b16 %v1076, %v1075
        %v1089 = vpack.c.b16 %v1078, %v1077
        %v1090 = vpack.c.b16 %v1080, %v1079
        %v1091 = vpack.c.b16 %v1082, %v1081
        %v1092 = vpack.c.b16 %v1084, %v1083
        %1101 = vmatprep.subr.bf16.mxu0 0
        %1102 = vmatpush1.bf16.msra.mxu0 %v1085
        %1103 = vmatprep.subr.bf16.mxu0 0
        %1104 = vmatpush1.bf16.msra.mxu0 %v1086
        %1105 = vmatprep.subr.bf16.mxu0 0
        %1106 = vmatpush1.bf16.msra.mxu0 %v1087
        %1107 = vmatprep.subr.bf16.mxu0 0
        %1108 = vmatpush1.bf16.msra.mxu0 %v1088
        %1109 = vmatprep.subr.bf16.mxu0 0
        %1110 = vmatpush1.bf16.msra.mxu0 %v1089
        %1111 = vmatprep.subr.bf16.mxu0 0
        %1112 = vmatpush1.bf16.msra.mxu0 %v1090
        %1113 = vmatprep.subr.bf16.mxu0 0
        %1114 = vmatpush1.bf16.msra.mxu0 %v1091
        %1115 = vmatprep.subr.bf16.mxu0 0
        %1116 = vmatpush1.bf16.msra.mxu0 %v1092
        %1117 = vmatprep.subr.bf16.mxu0 0
        %1118 = vmatpush1.bf16.msra.mxu0 0
        %1119 = vmatprep.subr.bf16.mxu0 0
        %1120 = vmatpush1.bf16.msra.mxu0 0
        %1121 = vmatprep.subr.bf16.mxu0 0
        %1122 = vmatpush1.bf16.msra.mxu0 0
        %1123 = vmatprep.subr.bf16.mxu0 0
        %1124 = vmatpush1.bf16.msra.mxu0 0
        %1125 = vmatprep.subr.bf16.mxu0 0
        %1126 = vmatpush1.bf16.msra.mxu0 0
        %1127 = vmatprep.subr.bf16.mxu0 0
        %1128 = vmatpush1.bf16.msra.mxu0 0
        %1129 = vmatprep.subr.bf16.mxu0 0
        %1130 = vmatpush1.bf16.msra.mxu0 0
        %1131 = vmatprep.subr.bf16.mxu0 0
        %1132 = vmatpush1.bf16.msra.mxu0 0
        %1133 = vmatprep.mubr.bf16.mxu0 0
        %1134 = vmatmul.mubr.bf16.gmra.mrb[0].mxu0 %v784
        %v1135 = vpop.f32.mrb[0].mxu0
        %v1136 = vadd.f32 %v868, %v1135
        %v1137 = vpop.f32.mrb[0].mxu0
        %v1138 = vpop.f32.mrb[0].mxu0
        %v1139 = vpop.f32.mrb[0].mxu0
        %1140 = vdwg.mxu0
        %v1157 = vunpack.c.l.b16 %v833
        %v1158 = vunpack.c.l.b16 %v834
        %v1159 = vunpack.c.l.b16 %v835
        %v1160 = vunpack.c.l.b16 %v836
        %v1161 = vunpack.c.l.b16 %v837
        %v1162 = vunpack.c.l.b16 %v838
        %v1163 = vunpack.c.l.b16 %v839
        %v1164 = vunpack.c.l.b16 %v840
        %v1165 = vunpack.c.l.b16 %v841
        %v1166 = vunpack.c.l.b16 %v842
        %v1167 = vunpack.c.l.b16 %v843
        %v1168 = vunpack.c.l.b16 %v844
        %v1169 = vunpack.c.l.b16 %v845
        %v1170 = vunpack.c.l.b16 %v846
        %v1171 = vunpack.c.l.b16 %v847
        %v1172 = vunpack.c.l.b16 %v848
        %v1173 = vpack.c.b16 %v1158, %v1157
        %v1174 = vpack.c.b16 %v1160, %v1159
        %v1175 = vpack.c.b16 %v1162, %v1161
        %v1176 = vpack.c.b16 %v1164, %v1163
        %v1177 = vpack.c.b16 %v1166, %v1165
        %v1178 = vpack.c.b16 %v1168, %v1167
        %v1179 = vpack.c.b16 %v1170, %v1169
        %v1180 = vpack.c.b16 %v1172, %v1171
        %1189 = vmatprep.subr.bf16.mxu0 0
        %1190 = vmatpush1.bf16.msra.mxu0 %v1173
        %1191 = vmatprep.subr.bf16.mxu0 0
        %1192 = vmatpush1.bf16.msra.mxu0 %v1174
        %1193 = vmatprep.subr.bf16.mxu0 0
        %1194 = vmatpush1.bf16.msra.mxu0 %v1175
        %1195 = vmatprep.subr.bf16.mxu0 0
        %1196 = vmatpush1.bf16.msra.mxu0 %v1176
        %1197 = vmatprep.subr.bf16.mxu0 0
        %1198 = vmatpush1.bf16.msra.mxu0 %v1177
        %1199 = vmatprep.subr.bf16.mxu0 0
        %1200 = vmatpush1.bf16.msra.mxu0 %v1178
        %1201 = vmatprep.subr.bf16.mxu0 0
        %1202 = vmatpush1.bf16.msra.mxu0 %v1179
        %1203 = vmatprep.subr.bf16.mxu0 0
        %1204 = vmatpush1.bf16.msra.mxu0 %v1180
        %1205 = vmatprep.subr.bf16.mxu0 0
        %1206 = vmatpush1.bf16.msra.mxu0 0
        %1207 = vmatprep.subr.bf16.mxu0 0
        %1208 = vmatpush1.bf16.msra.mxu0 0
        %1209 = vmatprep.subr.bf16.mxu0 0
        %1210 = vmatpush1.bf16.msra.mxu0 0
        %1211 = vmatprep.subr.bf16.mxu0 0
        %1212 = vmatpush1.bf16.msra.mxu0 0
        %1213 = vmatprep.subr.bf16.mxu0 0
        %1214 = vmatpush1.bf16.msra.mxu0 0
        %1215 = vmatprep.subr.bf16.mxu0 0
        %1216 = vmatpush1.bf16.msra.mxu0 0
        %1217 = vmatprep.subr.bf16.mxu0 0
        %1218 = vmatpush1.bf16.msra.mxu0 0
        %1219 = vmatprep.subr.bf16.mxu0 0
        %1220 = vmatpush1.bf16.msra.mxu0 0
        %1221 = vmatprep.mubr.bf16.mxu0 0
        %1222 = vmatmul.mubr.bf16.gmra.mrb[0].mxu0 %v784
        %v1223 = vpop.f32.mrb[0].mxu0
        %v1224 = vadd.f32 %v872, %v1223
        %v1225 = vpop.f32.mrb[0].mxu0
        %v1226 = vpop.f32.mrb[0].mxu0
        %v1227 = vpop.f32.mrb[0].mxu0
        %1228 = vdwg.mxu0
        %v1229 = vld [vmem:[#allocation8] sm:$0xf]
        %v1230 = vld [vmem:[#allocation8 + $0x4] sm:$0xf]
        %v1231 = vld [vmem:[#allocation8 + $0x8] sm:$0xf]
        %v1232 = vld [vmem:[#allocation8 + $0xc] sm:$0xf]
        %v1233 = vld [vmem:[#allocation8 + $0x10] sm:$0xf]
        %v1234 = vld [vmem:[#allocation8 + $0x14] sm:$0xf]
        %v1235 = vld [vmem:[#allocation8 + $0x18] sm:$0xf]
        %v1236 = vld [vmem:[#allocation8 + $0x1c] sm:$0xf]
        %v1237 = vld [vmem:[#allocation8 + $0x20] sm:$0xf]
        %v1238 = vld [vmem:[#allocation8 + $0x24] sm:$0xf]
        %v1239 = vld [vmem:[#allocation8 + $0x28] sm:$0xf]
        %v1240 = vld [vmem:[#allocation8 + $0x2c] sm:$0xf]
        %v1241 = vld [vmem:[#allocation8 + $0x30] sm:$0xf]
        %v1242 = vld [vmem:[#allocation8 + $0x34] sm:$0xf]
        %v1243 = vld [vmem:[#allocation8 + $0x38] sm:$0xf]
        %v1244 = vld [vmem:[#allocation8 + $0x3c] sm:$0xf]
        %v1245 = vld [vmem:[#allocation8 + $0x40] sm:$0xf]
        %v1246 = vld [vmem:[#allocation8 + $0x44] sm:$0xf]
        %v1247 = vld [vmem:[#allocation8 + $0x48] sm:$0xf]
        %v1248 = vld [vmem:[#allocation8 + $0x4c] sm:$0xf]
        %v1249 = vld [vmem:[#allocation8 + $0x50] sm:$0xf]
        %v1250 = vld [vmem:[#allocation8 + $0x54] sm:$0xf]
        %v1251 = vld [vmem:[#allocation8 + $0x58] sm:$0xf]
        %v1252 = vld [vmem:[#allocation8 + $0x5c] sm:$0xf]
        %v1253 = vld [vmem:[#allocation8 + $0x60] sm:$0xf]
        %v1254 = vld [vmem:[#allocation8 + $0x64] sm:$0xf]
        %v1255 = vld [vmem:[#allocation8 + $0x68] sm:$0xf]
        %v1256 = vld [vmem:[#allocation8 + $0x6c] sm:$0xf]
        %v1257 = vld [vmem:[#allocation8 + $0x70] sm:$0xf]
        %v1258 = vld [vmem:[#allocation8 + $0x74] sm:$0xf]
        %v1259 = vld [vmem:[#allocation8 + $0x78] sm:$0xf]
        %v1260 = vld [vmem:[#allocation8 + $0x7c] sm:$0xf]
        %v1261 = vld [vmem:[#allocation8 + $0x80] sm:$0xf]
        %v1262 = vld [vmem:[#allocation8 + $0x84] sm:$0xf]
        %v1263 = vld [vmem:[#allocation8 + $0x88] sm:$0xf]
        %v1264 = vld [vmem:[#allocation8 + $0x8c] sm:$0xf]
        %v1265 = vld [vmem:[#allocation8 + $0x90] sm:$0xf]
        %v1266 = vld [vmem:[#allocation8 + $0x94] sm:$0xf]
        %v1267 = vld [vmem:[#allocation8 + $0x98] sm:$0xf]
        %v1268 = vld [vmem:[#allocation8 + $0x9c] sm:$0xf]
        %v1269 = vld [vmem:[#allocation8 + $0xa0] sm:$0xf]
        %v1270 = vld [vmem:[#allocation8 + $0xa4] sm:$0xf]
        %v1271 = vld [vmem:[#allocation8 + $0xa8] sm:$0xf]
        %v1272 = vld [vmem:[#allocation8 + $0xac] sm:$0xf]
        %v1273 = vld [vmem:[#allocation8 + $0xb0] sm:$0xf]
        %v1274 = vld [vmem:[#allocation8 + $0xb4] sm:$0xf]
        %v1275 = vld [vmem:[#allocation8 + $0xb8] sm:$0xf]
        %v1276 = vld [vmem:[#allocation8 + $0xbc] sm:$0xf]
        %v1277 = vld [vmem:[#allocation8 + $0xc0] sm:$0xf]
        %v1278 = vld [vmem:[#allocation8 + $0xc4] sm:$0xf]
        %v1279 = vld [vmem:[#allocation8 + $0xc8] sm:$0xf]
        %v1280 = vld [vmem:[#allocation8 + $0xcc] sm:$0xf]
        %v1281 = vld [vmem:[#allocation8 + $0xd0] sm:$0xf]
        %v1282 = vld [vmem:[#allocation8 + $0xd4] sm:$0xf]
        %v1283 = vld [vmem:[#allocation8 + $0xd8] sm:$0xf]
        %v1284 = vld [vmem:[#allocation8 + $0xdc] sm:$0xf]
        %v1285 = vld [vmem:[#allocation8 + $0xe0] sm:$0xf]
        %v1286 = vld [vmem:[#allocation8 + $0xe4] sm:$0xf]
        %v1287 = vld [vmem:[#allocation8 + $0xe8] sm:$0xf]
        %v1288 = vld [vmem:[#allocation8 + $0xec] sm:$0xf]
        %v1289 = vld [vmem:[#allocation8 + $0xf0] sm:$0xf]
        %v1290 = vld [vmem:[#allocation8 + $0xf4] sm:$0xf]
        %v1291 = vld [vmem:[#allocation8 + $0xf8] sm:$0xf]
        %v1292 = vld [vmem:[#allocation8 + $0xfc] sm:$0xf]
        %v1293 = vld [vmem:[#allocation10] sm:$0x1]
        %v1294 = vld [vmem:[#allocation10 + $0x1] sm:$0x1]
        %v1295 = vld [vmem:[#allocation10 + $0x2] sm:$0x1]
        %v1296 = vld [vmem:[#allocation10 + $0x3] sm:$0x1]
        %v1301 = vlaneseq
        %v1302 = vshrl.u32 %v1301, 7
        %v1303 = vsub.s32 0, %v1302
        %v1304 = vrot.slane %v1293, %v1303
        %v1305 = vlaneseq
        %v1306 = vshrl.u32 %v1305, 7
        %v1307 = vsub.s32 0, %v1306
        %v1308 = vrot.slane %v1294, %v1307
        %v1309 = vlaneseq
        %v1310 = vshrl.u32 %v1309, 7
        %v1311 = vsub.s32 0, %v1310
        %v1312 = vrot.slane %v1295, %v1311
        %v1313 = vlaneseq
        %v1314 = vshrl.u32 %v1313, 7
        %v1315 = vsub.s32 0, %v1314
        %v1316 = vrot.slane %v1296, %v1315
        %v1337 = vunpack.c.l.b16 %v1229
        %v1338 = vunpack.c.l.b16 %v1230
        %v1339 = vunpack.c.l.b16 %v1231
        %v1340 = vunpack.c.l.b16 %v1232
        %v1341 = vunpack.c.l.b16 %v1233
        %v1342 = vunpack.c.l.b16 %v1234
        %v1343 = vunpack.c.l.b16 %v1235
        %v1344 = vunpack.c.l.b16 %v1236
        %v1345 = vunpack.c.l.b16 %v1237
        %v1346 = vunpack.c.l.b16 %v1238
        %v1347 = vunpack.c.l.b16 %v1239
        %v1348 = vunpack.c.l.b16 %v1240
        %v1349 = vunpack.c.l.b16 %v1241
        %v1350 = vunpack.c.l.b16 %v1242
        %v1351 = vunpack.c.l.b16 %v1243
        %v1352 = vunpack.c.l.b16 %v1244
        %v1353 = vpack.c.b16 %v1338, %v1337
        %v1354 = vpack.c.b16 %v1340, %v1339
        %v1355 = vpack.c.b16 %v1342, %v1341
        %v1356 = vpack.c.b16 %v1344, %v1343
        %v1357 = vpack.c.b16 %v1346, %v1345
        %v1358 = vpack.c.b16 %v1348, %v1347
        %v1359 = vpack.c.b16 %v1350, %v1349
        %v1360 = vpack.c.b16 %v1352, %v1351
        %1369 = vmatprep.subr.bf16.mxu0 0
        %1370 = vmatpush1.bf16.msra.mxu0 %v1353
        %1371 = vmatprep.subr.bf16.mxu0 0
        %1372 = vmatpush1.bf16.msra.mxu0 %v1354
        %1373 = vmatprep.subr.bf16.mxu0 0
        %1374 = vmatpush1.bf16.msra.mxu0 %v1355
        %1375 = vmatprep.subr.bf16.mxu0 0
        %1376 = vmatpush1.bf16.msra.mxu0 %v1356
        %1377 = vmatprep.subr.bf16.mxu0 0
        %1378 = vmatpush1.bf16.msra.mxu0 %v1357
        %1379 = vmatprep.subr.bf16.mxu0 0
        %1380 = vmatpush1.bf16.msra.mxu0 %v1358
        %1381 = vmatprep.subr.bf16.mxu0 0
        %1382 = vmatpush1.bf16.msra.mxu0 %v1359
        %1383 = vmatprep.subr.bf16.mxu0 0
        %1384 = vmatpush1.bf16.msra.mxu0 %v1360
        %1385 = vmatprep.subr.bf16.mxu0 0
        %1386 = vmatpush1.bf16.msra.mxu0 0
        %1387 = vmatprep.subr.bf16.mxu0 0
        %1388 = vmatpush1.bf16.msra.mxu0 0
        %1389 = vmatprep.subr.bf16.mxu0 0
        %1390 = vmatpush1.bf16.msra.mxu0 0
        %1391 = vmatprep.subr.bf16.mxu0 0
        %1392 = vmatpush1.bf16.msra.mxu0 0
        %1393 = vmatprep.subr.bf16.mxu0 0
        %1394 = vmatpush1.bf16.msra.mxu0 0
        %1395 = vmatprep.subr.bf16.mxu0 0
        %1396 = vmatpush1.bf16.msra.mxu0 0
        %1397 = vmatprep.subr.bf16.mxu0 0
        %1398 = vmatpush1.bf16.msra.mxu0 0
        %1399 = vmatprep.subr.bf16.mxu0 0
        %1400 = vmatpush1.bf16.msra.mxu0 0
        %1401 = vmatprep.mubr.bf16.mxu0 0
        %1402 = vmatmul.mubr.bf16.gmra.mrb[0].mxu0 %v784
        %v1403 = vpop.f32.mrb[0].mxu0
        %v1404 = vadd.f32 %v1304, %v1403
        %v1405 = vpop.f32.mrb[0].mxu0
        %v1406 = vpop.f32.mrb[0].mxu0
        %v1407 = vpop.f32.mrb[0].mxu0
        %1408 = vdwg.mxu0
        %v1425 = vunpack.c.l.b16 %v1245
        %v1426 = vunpack.c.l.b16 %v1246
        %v1427 = vunpack.c.l.b16 %v1247
        %v1428 = vunpack.c.l.b16 %v1248
        %v1429 = vunpack.c.l.b16 %v1249
        %v1430 = vunpack.c.l.b16 %v1250
        %v1431 = vunpack.c.l.b16 %v1251
        %v1432 = vunpack.c.l.b16 %v1252
        %v1433 = vunpack.c.l.b16 %v1253
        %v1434 = vunpack.c.l.b16 %v1254
        %v1435 = vunpack.c.l.b16 %v1255
        %v1436 = vunpack.c.l.b16 %v1256
        %v1437 = vunpack.c.l.b16 %v1257
        %v1438 = vunpack.c.l.b16 %v1258
        %v1439 = vunpack.c.l.b16 %v1259
        %v1440 = vunpack.c.l.b16 %v1260
        %v1441 = vpack.c.b16 %v1426, %v1425
        %v1442 = vpack.c.b16 %v1428, %v1427
        %v1443 = vpack.c.b16 %v1430, %v1429
        %v1444 = vpack.c.b16 %v1432, %v1431
        %v1445 = vpack.c.b16 %v1434, %v1433
        %v1446 = vpack.c.b16 %v1436, %v1435
        %v1447 = vpack.c.b16 %v1438, %v1437
        %v1448 = vpack.c.b16 %v1440, %v1439
        %1457 = vmatprep.subr.bf16.mxu0 0
        %1458 = vmatpush1.bf16.msra.mxu0 %v1441
        %1459 = vmatprep.subr.bf16.mxu0 0
        %1460 = vmatpush1.bf16.msra.mxu0 %v1442
        %1461 = vmatprep.subr.bf16.mxu0 0
        %1462 = vmatpush1.bf16.msra.mxu0 %v1443
        %1463 = vmatprep.subr.bf16.mxu0 0
        %1464 = vmatpush1.bf16.msra.mxu0 %v1444
        %1465 = vmatprep.subr.bf16.mxu0 0
        %1466 = vmatpush1.bf16.msra.mxu0 %v1445
        %1467 = vmatprep.subr.bf16.mxu0 0
        %1468 = vmatpush1.bf16.msra.mxu0 %v1446
        %1469 = vmatprep.subr.bf16.mxu0 0
        %1470 = vmatpush1.bf16.msra.mxu0 %v1447
        %1471 = vmatprep.subr.bf16.mxu0 0
        %1472 = vmatpush1.bf16.msra.mxu0 %v1448
        %1473 = vmatprep.subr.bf16.mxu0 0
        %1474 = vmatpush1.bf16.msra.mxu0 0
        %1475 = vmatprep.subr.bf16.mxu0 0
        %1476 = vmatpush1.bf16.msra.mxu0 0
        %1477 = vmatprep.subr.bf16.mxu0 0
        %1478 = vmatpush1.bf16.msra.mxu0 0
        %1479 = vmatprep.subr.bf16.mxu0 0
        %1480 = vmatpush1.bf16.msra.mxu0 0
        %1481 = vmatprep.subr.bf16.mxu0 0
        %1482 = vmatpush1.bf16.msra.mxu0 0
        %1483 = vmatprep.subr.bf16.mxu0 0
        %1484 = vmatpush1.bf16.msra.mxu0 0
        %1485 = vmatprep.subr.bf16.mxu0 0
        %1486 = vmatpush1.bf16.msra.mxu0 0
        %1487 = vmatprep.subr.bf16.mxu0 0
        %1488 = vmatpush1.bf16.msra.mxu0 0
        %1489 = vmatprep.mubr.bf16.mxu0 0
        %1490 = vmatmul.mubr.bf16.gmra.mrb[0].mxu0 %v784
        %v1491 = vpop.f32.mrb[0].mxu0
        %v1492 = vadd.f32 %v1308, %v1491
        %v1493 = vpop.f32.mrb[0].mxu0
        %v1494 = vpop.f32.mrb[0].mxu0
        %v1495 = vpop.f32.mrb[0].mxu0
        %1496 = vdwg.mxu0
        %v1513 = vunpack.c.l.b16 %v1261
        %v1514 = vunpack.c.l.b16 %v1262
        %v1515 = vunpack.c.l.b16 %v1263
        %v1516 = vunpack.c.l.b16 %v1264
        %v1517 = vunpack.c.l.b16 %v1265
        %v1518 = vunpack.c.l.b16 %v1266
        %v1519 = vunpack.c.l.b16 %v1267
        %v1520 = vunpack.c.l.b16 %v1268
        %v1521 = vunpack.c.l.b16 %v1269
        %v1522 = vunpack.c.l.b16 %v1270
        %v1523 = vunpack.c.l.b16 %v1271
        %v1524 = vunpack.c.l.b16 %v1272
        %v1525 = vunpack.c.l.b16 %v1273
        %v1526 = vunpack.c.l.b16 %v1274
        %v1527 = vunpack.c.l.b16 %v1275
        %v1528 = vunpack.c.l.b16 %v1276
        %v1529 = vpack.c.b16 %v1514, %v1513
        %v1530 = vpack.c.b16 %v1516, %v1515
        %v1531 = vpack.c.b16 %v1518, %v1517
        %v1532 = vpack.c.b16 %v1520, %v1519
        %v1533 = vpack.c.b16 %v1522, %v1521
        %v1534 = vpack.c.b16 %v1524, %v1523
        %v1535 = vpack.c.b16 %v1526, %v1525
        %v1536 = vpack.c.b16 %v1528, %v1527
        %1545 = vmatprep.subr.bf16.mxu0 0
        %1546 = vmatpush1.bf16.msra.mxu0 %v1529
        %1547 = vmatprep.subr.bf16.mxu0 0
        %1548 = vmatpush1.bf16.msra.mxu0 %v1530
        %1549 = vmatprep.subr.bf16.mxu0 0
        %1550 = vmatpush1.bf16.msra.mxu0 %v1531
        %1551 = vmatprep.subr.bf16.mxu0 0
        %1552 = vmatpush1.bf16.msra.mxu0 %v1532
        %1553 = vmatprep.subr.bf16.mxu0 0
        %1554 = vmatpush1.bf16.msra.mxu0 %v1533
        %1555 = vmatprep.subr.bf16.mxu0 0
        %1556 = vmatpush1.bf16.msra.mxu0 %v1534
        %1557 = vmatprep.subr.bf16.mxu0 0
        %1558 = vmatpush1.bf16.msra.mxu0 %v1535
        %1559 = vmatprep.subr.bf16.mxu0 0
        %1560 = vmatpush1.bf16.msra.mxu0 %v1536
        %1561 = vmatprep.subr.bf16.mxu0 0
        %1562 = vmatpush1.bf16.msra.mxu0 0
        %1563 = vmatprep.subr.bf16.mxu0 0
        %1564 = vmatpush1.bf16.msra.mxu0 0
        %1565 = vmatprep.subr.bf16.mxu0 0
        %1566 = vmatpush1.bf16.msra.mxu0 0
        %1567 = vmatprep.subr.bf16.mxu0 0
        %1568 = vmatpush1.bf16.msra.mxu0 0
        %1569 = vmatprep.subr.bf16.mxu0 0
        %1570 = vmatpush1.bf16.msra.mxu0 0
        %1571 = vmatprep.subr.bf16.mxu0 0
        %1572 = vmatpush1.bf16.msra.mxu0 0
        %1573 = vmatprep.subr.bf16.mxu0 0
        %1574 = vmatpush1.bf16.msra.mxu0 0
        %1575 = vmatprep.subr.bf16.mxu0 0
        %1576 = vmatpush1.bf16.msra.mxu0 0
        %1577 = vmatprep.mubr.bf16.mxu0 0
        %1578 = vmatmul.mubr.bf16.gmra.mrb[0].mxu0 %v784
        %v1579 = vpop.f32.mrb[0].mxu0
        %v1580 = vadd.f32 %v1312, %v1579
        %v1581 = vpop.f32.mrb[0].mxu0
        %v1582 = vpop.f32.mrb[0].mxu0
        %v1583 = vpop.f32.mrb[0].mxu0
        %1584 = vdwg.mxu0
        %v1601 = vunpack.c.l.b16 %v1277
        %v1602 = vunpack.c.l.b16 %v1278
        %v1603 = vunpack.c.l.b16 %v1279
        %v1604 = vunpack.c.l.b16 %v1280
        %v1605 = vunpack.c.l.b16 %v1281
        %v1606 = vunpack.c.l.b16 %v1282
        %v1607 = vunpack.c.l.b16 %v1283
        %v1608 = vunpack.c.l.b16 %v1284
        %v1609 = vunpack.c.l.b16 %v1285
        %v1610 = vunpack.c.l.b16 %v1286
        %v1611 = vunpack.c.l.b16 %v1287
        %v1612 = vunpack.c.l.b16 %v1288
        %v1613 = vunpack.c.l.b16 %v1289
        %v1614 = vunpack.c.l.b16 %v1290
        %v1615 = vunpack.c.l.b16 %v1291
        %v1616 = vunpack.c.l.b16 %v1292
        %v1617 = vpack.c.b16 %v1602, %v1601
        %v1618 = vpack.c.b16 %v1604, %v1603
        %v1619 = vpack.c.b16 %v1606, %v1605
        %v1620 = vpack.c.b16 %v1608, %v1607
        %v1621 = vpack.c.b16 %v1610, %v1609
        %v1622 = vpack.c.b16 %v1612, %v1611
        %v1623 = vpack.c.b16 %v1614, %v1613
        %v1624 = vpack.c.b16 %v1616, %v1615
        %1633 = vmatprep.subr.bf16.mxu0 0
        %1634 = vmatpush1.bf16.msra.mxu0 %v1617
        %1635 = vmatprep.subr.bf16.mxu0 0
        %1636 = vmatpush1.bf16.msra.mxu0 %v1618
        %1637 = vmatprep.subr.bf16.mxu0 0
        %1638 = vmatpush1.bf16.msra.mxu0 %v1619
        %1639 = vmatprep.subr.bf16.mxu0 0
        %1640 = vmatpush1.bf16.msra.mxu0 %v1620
        %1641 = vmatprep.subr.bf16.mxu0 0
        %1642 = vmatpush1.bf16.msra.mxu0 %v1621
        %1643 = vmatprep.subr.bf16.mxu0 0
        %1644 = vmatpush1.bf16.msra.mxu0 %v1622
        %1645 = vmatprep.subr.bf16.mxu0 0
        %1646 = vmatpush1.bf16.msra.mxu0 %v1623
        %1647 = vmatprep.subr.bf16.mxu0 0
        %1648 = vmatpush1.bf16.msra.mxu0 %v1624
        %1649 = vmatprep.subr.bf16.mxu0 0
        %1650 = vmatpush1.bf16.msra.mxu0 0
        %1651 = vmatprep.subr.bf16.mxu0 0
        %1652 = vmatpush1.bf16.msra.mxu0 0
        %1653 = vmatprep.subr.bf16.mxu0 0
        %1654 = vmatpush1.bf16.msra.mxu0 0
        %1655 = vmatprep.subr.bf16.mxu0 0
        %1656 = vmatpush1.bf16.msra.mxu0 0
        %1657 = vmatprep.subr.bf16.mxu0 0
        %1658 = vmatpush1.bf16.msra.mxu0 0
        %1659 = vmatprep.subr.bf16.mxu0 0
        %1660 = vmatpush1.bf16.msra.mxu0 0
        %1661 = vmatprep.subr.bf16.mxu0 0
        %1662 = vmatpush1.bf16.msra.mxu0 0
        %1663 = vmatprep.subr.bf16.mxu0 0
        %1664 = vmatpush1.bf16.msra.mxu0 0
        %1665 = vmatprep.mubr.bf16.mxu0 0
        %1666 = vmatmul.mubr.bf16.gmra.mrb[0].mxu0 %v784
        %v1667 = vpop.f32.mrb[0].mxu0
        %v1668 = vadd.f32 %v1316, %v1667
        %v1669 = vpop.f32.mrb[0].mxu0
        %v1670 = vpop.f32.mrb[0].mxu0
        %v1671 = vpop.f32.mrb[0].mxu0
        %1672 = vdwg.mxu0
        %v1673 = vld [vmem:[#allocation11] sm:$0xf]
        %v1674 = vld [vmem:[#allocation11 + $0x4] sm:$0xf]
        %v1675 = vld [vmem:[#allocation11 + $0x8] sm:$0xf]
        %v1676 = vld [vmem:[#allocation11 + $0xc] sm:$0xf]
        %v1677 = vld [vmem:[#allocation11 + $0x10] sm:$0xf]
        %v1678 = vld [vmem:[#allocation11 + $0x14] sm:$0xf]
        %v1679 = vld [vmem:[#allocation11 + $0x18] sm:$0xf]
        %v1680 = vld [vmem:[#allocation11 + $0x1c] sm:$0xf]
        %v1681 = vld [vmem:[#allocation11 + $0x20] sm:$0xf]
        %v1682 = vld [vmem:[#allocation11 + $0x24] sm:$0xf]
        %v1683 = vld [vmem:[#allocation11 + $0x28] sm:$0xf]
        %v1684 = vld [vmem:[#allocation11 + $0x2c] sm:$0xf]
        %v1685 = vld [vmem:[#allocation11 + $0x30] sm:$0xf]
        %v1686 = vld [vmem:[#allocation11 + $0x34] sm:$0xf]
        %v1687 = vld [vmem:[#allocation11 + $0x38] sm:$0xf]
        %v1688 = vld [vmem:[#allocation11 + $0x3c] sm:$0xf]
        %v1689 = vld [vmem:[#allocation11 + $0x40] sm:$0xf]
        %v1690 = vld [vmem:[#allocation11 + $0x44] sm:$0xf]
        %v1691 = vld [vmem:[#allocation11 + $0x48] sm:$0xf]
        %v1692 = vld [vmem:[#allocation11 + $0x4c] sm:$0xf]
        %v1693 = vld [vmem:[#allocation11 + $0x50] sm:$0xf]
        %v1694 = vld [vmem:[#allocation11 + $0x54] sm:$0xf]
        %v1695 = vld [vmem:[#allocation11 + $0x58] sm:$0xf]
        %v1696 = vld [vmem:[#allocation11 + $0x5c] sm:$0xf]
        %v1697 = vld [vmem:[#allocation11 + $0x60] sm:$0xf]
        %v1698 = vld [vmem:[#allocation11 + $0x64] sm:$0xf]
        %v1699 = vld [vmem:[#allocation11 + $0x68] sm:$0xf]
        %v1700 = vld [vmem:[#allocation11 + $0x6c] sm:$0xf]
        %v1701 = vld [vmem:[#allocation11 + $0x70] sm:$0xf]
        %v1702 = vld [vmem:[#allocation11 + $0x74] sm:$0xf]
        %v1703 = vld [vmem:[#allocation11 + $0x78] sm:$0xf]
        %v1704 = vld [vmem:[#allocation11 + $0x7c] sm:$0xf]
        %v1705 = vld [vmem:[#allocation11 + $0x80] sm:$0xf]
        %v1706 = vld [vmem:[#allocation11 + $0x84] sm:$0xf]
        %v1707 = vld [vmem:[#allocation11 + $0x88] sm:$0xf]
        %v1708 = vld [vmem:[#allocation11 + $0x8c] sm:$0xf]
        %v1709 = vld [vmem:[#allocation11 + $0x90] sm:$0xf]
        %v1710 = vld [vmem:[#allocation11 + $0x94] sm:$0xf]
        %v1711 = vld [vmem:[#allocation11 + $0x98] sm:$0xf]
        %v1712 = vld [vmem:[#allocation11 + $0x9c] sm:$0xf]
        %v1713 = vld [vmem:[#allocation11 + $0xa0] sm:$0xf]
        %v1714 = vld [vmem:[#allocation11 + $0xa4] sm:$0xf]
        %v1715 = vld [vmem:[#allocation11 + $0xa8] sm:$0xf]
        %v1716 = vld [vmem:[#allocation11 + $0xac] sm:$0xf]
        %v1717 = vld [vmem:[#allocation11 + $0xb0] sm:$0xf]
        %v1718 = vld [vmem:[#allocation11 + $0xb4] sm:$0xf]
        %v1719 = vld [vmem:[#allocation11 + $0xb8] sm:$0xf]
        %v1720 = vld [vmem:[#allocation11 + $0xbc] sm:$0xf]
        %v1721 = vld [vmem:[#allocation11 + $0xc0] sm:$0xf]
        %v1722 = vld [vmem:[#allocation11 + $0xc4] sm:$0xf]
        %v1723 = vld [vmem:[#allocation11 + $0xc8] sm:$0xf]
        %v1724 = vld [vmem:[#allocation11 + $0xcc] sm:$0xf]
        %v1725 = vld [vmem:[#allocation11 + $0xd0] sm:$0xf]
        %v1726 = vld [vmem:[#allocation11 + $0xd4] sm:$0xf]
        %v1727 = vld [vmem:[#allocation11 + $0xd8] sm:$0xf]
        %v1728 = vld [vmem:[#allocation11 + $0xdc] sm:$0xf]
        %v1729 = vld [vmem:[#allocation11 + $0xe0] sm:$0xf]
        %v1730 = vld [vmem:[#allocation11 + $0xe4] sm:$0xf]
        %v1731 = vld [vmem:[#allocation11 + $0xe8] sm:$0xf]
        %v1732 = vld [vmem:[#allocation11 + $0xec] sm:$0xf]
        %v1733 = vld [vmem:[#allocation11 + $0xf0] sm:$0xf]
        %v1734 = vld [vmem:[#allocation11 + $0xf4] sm:$0xf]
        %v1735 = vld [vmem:[#allocation11 + $0xf8] sm:$0xf]
        %v1736 = vld [vmem:[#allocation11 + $0xfc] sm:$0xf]
        %v1737 = vld [vmem:[#allocation13] sm:$0x1]
        %v1738 = vld [vmem:[#allocation13 + $0x1] sm:$0x1]
        %v1739 = vld [vmem:[#allocation13 + $0x2] sm:$0x1]
        %v1740 = vld [vmem:[#allocation13 + $0x3] sm:$0x1]
        %v1745 = vlaneseq
        %v1746 = vshrl.u32 %v1745, 7
        %v1747 = vsub.s32 0, %v1746
        %v1748 = vrot.slane %v1737, %v1747
        %v1749 = vlaneseq
        %v1750 = vshrl.u32 %v1749, 7
        %v1751 = vsub.s32 0, %v1750
        %v1752 = vrot.slane %v1738, %v1751
        %v1753 = vlaneseq
        %v1754 = vshrl.u32 %v1753, 7
        %v1755 = vsub.s32 0, %v1754
        %v1756 = vrot.slane %v1739, %v1755
        %v1757 = vlaneseq
        %v1758 = vshrl.u32 %v1757, 7
        %v1759 = vsub.s32 0, %v1758
        %v1760 = vrot.slane %v1740, %v1759
        %v1781 = vunpack.c.l.b16 %v1673
        %v1782 = vunpack.c.l.b16 %v1674
        %v1783 = vunpack.c.l.b16 %v1675
        %v1784 = vunpack.c.l.b16 %v1676
        %v1785 = vunpack.c.l.b16 %v1677
        %v1786 = vunpack.c.l.b16 %v1678
        %v1787 = vunpack.c.l.b16 %v1679
        %v1788 = vunpack.c.l.b16 %v1680
        %v1789 = vunpack.c.l.b16 %v1681
        %v1790 = vunpack.c.l.b16 %v1682
        %v1791 = vunpack.c.l.b16 %v1683
        %v1792 = vunpack.c.l.b16 %v1684
        %v1793 = vunpack.c.l.b16 %v1685
        %v1794 = vunpack.c.l.b16 %v1686
        %v1795 = vunpack.c.l.b16 %v1687
        %v1796 = vunpack.c.l.b16 %v1688
        %v1797 = vpack.c.b16 %v1782, %v1781
        %v1798 = vpack.c.b16 %v1784, %v1783
        %v1799 = vpack.c.b16 %v1786, %v1785
        %v1800 = vpack.c.b16 %v1788, %v1787
        %v1801 = vpack.c.b16 %v1790, %v1789
        %v1802 = vpack.c.b16 %v1792, %v1791
        %v1803 = vpack.c.b16 %v1794, %v1793
        %v1804 = vpack.c.b16 %v1796, %v1795
        %1813 = vmatprep.subr.bf16.mxu0 0
        %1814 = vmatpush1.bf16.msra.mxu0 %v1797
        %1815 = vmatprep.subr.bf16.mxu0 0
        %1816 = vmatpush1.bf16.msra.mxu0 %v1798
        %1817 = vmatprep.subr.bf16.mxu0 0
        %1818 = vmatpush1.bf16.msra.mxu0 %v1799
        %1819 = vmatprep.subr.bf16.mxu0 0
        %1820 = vmatpush1.bf16.msra.mxu0 %v1800
        %1821 = vmatprep.subr.bf16.mxu0 0
        %1822 = vmatpush1.bf16.msra.mxu0 %v1801
        %1823 = vmatprep.subr.bf16.mxu0 0
        %1824 = vmatpush1.bf16.msra.mxu0 %v1802
        %1825 = vmatprep.subr.bf16.mxu0 0
        %1826 = vmatpush1.bf16.msra.mxu0 %v1803
        %1827 = vmatprep.subr.bf16.mxu0 0
        %1828 = vmatpush1.bf16.msra.mxu0 %v1804
        %1829 = vmatprep.subr.bf16.mxu0 0
        %1830 = vmatpush1.bf16.msra.mxu0 0
        %1831 = vmatprep.subr.bf16.mxu0 0
        %1832 = vmatpush1.bf16.msra.mxu0 0
        %1833 = vmatprep.subr.bf16.mxu0 0
        %1834 = vmatpush1.bf16.msra.mxu0 0
        %1835 = vmatprep.subr.bf16.mxu0 0
        %1836 = vmatpush1.bf16.msra.mxu0 0
        %1837 = vmatprep.subr.bf16.mxu0 0
        %1838 = vmatpush1.bf16.msra.mxu0 0
        %1839 = vmatprep.subr.bf16.mxu0 0
        %1840 = vmatpush1.bf16.msra.mxu0 0
        %1841 = vmatprep.subr.bf16.mxu0 0
        %1842 = vmatpush1.bf16.msra.mxu0 0
        %1843 = vmatprep.subr.bf16.mxu0 0
        %1844 = vmatpush1.bf16.msra.mxu0 0
        %1845 = vmatprep.mubr.bf16.mxu0 0
        %1846 = vmatmul.mubr.bf16.gmra.mrb[0].mxu0 %v784
        %v1847 = vpop.f32.mrb[0].mxu0
        %v1848 = vadd.f32 %v1748, %v1847
        %v1849 = vpop.f32.mrb[0].mxu0
        %v1850 = vpop.f32.mrb[0].mxu0
        %v1851 = vpop.f32.mrb[0].mxu0
        %1852 = vdwg.mxu0
        %v1869 = vunpack.c.l.b16 %v1689
        %v1870 = vunpack.c.l.b16 %v1690
        %v1871 = vunpack.c.l.b16 %v1691
        %v1872 = vunpack.c.l.b16 %v1692
        %v1873 = vunpack.c.l.b16 %v1693
        %v1874 = vunpack.c.l.b16 %v1694
        %v1875 = vunpack.c.l.b16 %v1695
        %v1876 = vunpack.c.l.b16 %v1696
        %v1877 = vunpack.c.l.b16 %v1697
        %v1878 = vunpack.c.l.b16 %v1698
        %v1879 = vunpack.c.l.b16 %v1699
        %v1880 = vunpack.c.l.b16 %v1700
        %v1881 = vunpack.c.l.b16 %v1701
        %v1882 = vunpack.c.l.b16 %v1702
        %v1883 = vunpack.c.l.b16 %v1703
        %v1884 = vunpack.c.l.b16 %v1704
        %v1885 = vpack.c.b16 %v1870, %v1869
        %v1886 = vpack.c.b16 %v1872, %v1871
        %v1887 = vpack.c.b16 %v1874, %v1873
        %v1888 = vpack.c.b16 %v1876, %v1875
        %v1889 = vpack.c.b16 %v1878, %v1877
        %v1890 = vpack.c.b16 %v1880, %v1879
        %v1891 = vpack.c.b16 %v1882, %v1881
        %v1892 = vpack.c.b16 %v1884, %v1883
        %1901 = vmatprep.subr.bf16.mxu0 0
        %1902 = vmatpush1.bf16.msra.mxu0 %v1885
        %1903 = vmatprep.subr.bf16.mxu0 0
        %1904 = vmatpush1.bf16.msra.mxu0 %v1886
        %1905 = vmatprep.subr.bf16.mxu0 0
        %1906 = vmatpush1.bf16.msra.mxu0 %v1887
        %1907 = vmatprep.subr.bf16.mxu0 0
        %1908 = vmatpush1.bf16.msra.mxu0 %v1888
        %1909 = vmatprep.subr.bf16.mxu0 0
        %1910 = vmatpush1.bf16.msra.mxu0 %v1889
        %1911 = vmatprep.subr.bf16.mxu0 0
        %1912 = vmatpush1.bf16.msra.mxu0 %v1890
        %1913 = vmatprep.subr.bf16.mxu0 0
        %1914 = vmatpush1.bf16.msra.mxu0 %v1891
        %1915 = vmatprep.subr.bf16.mxu0 0
        %1916 = vmatpush1.bf16.msra.mxu0 %v1892
        %1917 = vmatprep.subr.bf16.mxu0 0
        %1918 = vmatpush1.bf16.msra.mxu0 0
        %1919 = vmatprep.subr.bf16.mxu0 0
        %1920 = vmatpush1.bf16.msra.mxu0 0
        %1921 = vmatprep.subr.bf16.mxu0 0
        %1922 = vmatpush1.bf16.msra.mxu0 0
        %1923 = vmatprep.subr.bf16.mxu0 0
        %1924 = vmatpush1.bf16.msra.mxu0 0
        %1925 = vmatprep.subr.bf16.mxu0 0
        %1926 = vmatpush1.bf16.msra.mxu0 0
        %1927 = vmatprep.subr.bf16.mxu0 0
        %1928 = vmatpush1.bf16.msra.mxu0 0
        %1929 = vmatprep.subr.bf16.mxu0 0
        %1930 = vmatpush1.bf16.msra.mxu0 0
        %1931 = vmatprep.subr.bf16.mxu0 0
        %1932 = vmatpush1.bf16.msra.mxu0 0
        %1933 = vmatprep.mubr.bf16.mxu0 0
        %1934 = vmatmul.mubr.bf16.gmra.mrb[0].mxu0 %v784
        %v1935 = vpop.f32.mrb[0].mxu0
        %v1936 = vadd.f32 %v1752, %v1935
        %v1937 = vpop.f32.mrb[0].mxu0
        %v1938 = vpop.f32.mrb[0].mxu0
        %v1939 = vpop.f32.mrb[0].mxu0
        %1940 = vdwg.mxu0
        %v1957 = vunpack.c.l.b16 %v1705
        %v1958 = vunpack.c.l.b16 %v1706
        %v1959 = vunpack.c.l.b16 %v1707
        %v1960 = vunpack.c.l.b16 %v1708
        %v1961 = vunpack.c.l.b16 %v1709
        %v1962 = vunpack.c.l.b16 %v1710
        %v1963 = vunpack.c.l.b16 %v1711
        %v1964 = vunpack.c.l.b16 %v1712
        %v1965 = vunpack.c.l.b16 %v1713
        %v1966 = vunpack.c.l.b16 %v1714
        %v1967 = vunpack.c.l.b16 %v1715
        %v1968 = vunpack.c.l.b16 %v1716
        %v1969 = vunpack.c.l.b16 %v1717
        %v1970 = vunpack.c.l.b16 %v1718
        %v1971 = vunpack.c.l.b16 %v1719
        %v1972 = vunpack.c.l.b16 %v1720
        %v1973 = vpack.c.b16 %v1958, %v1957
        %v1974 = vpack.c.b16 %v1960, %v1959
        %v1975 = vpack.c.b16 %v1962, %v1961
        %v1976 = vpack.c.b16 %v1964, %v1963
        %v1977 = vpack.c.b16 %v1966, %v1965
        %v1978 = vpack.c.b16 %v1968, %v1967
        %v1979 = vpack.c.b16 %v1970, %v1969
        %v1980 = vpack.c.b16 %v1972, %v1971
        %1989 = vmatprep.subr.bf16.mxu0 0
        %1990 = vmatpush1.bf16.msra.mxu0 %v1973
        %1991 = vmatprep.subr.bf16.mxu0 0
        %1992 = vmatpush1.bf16.msra.mxu0 %v1974
        %1993 = vmatprep.subr.bf16.mxu0 0
        %1994 = vmatpush1.bf16.msra.mxu0 %v1975
        %1995 = vmatprep.subr.bf16.mxu0 0
        %1996 = vmatpush1.bf16.msra.mxu0 %v1976
        %1997 = vmatprep.subr.bf16.mxu0 0
        %1998 = vmatpush1.bf16.msra.mxu0 %v1977
        %1999 = vmatprep.subr.bf16.mxu0 0
        %2000 = vmatpush1.bf16.msra.mxu0 %v1978
        %2001 = vmatprep.subr.bf16.mxu0 0
        %2002 = vmatpush1.bf16.msra.mxu0 %v1979
        %2003 = vmatprep.subr.bf16.mxu0 0
        %2004 = vmatpush1.bf16.msra.mxu0 %v1980
        %2005 = vmatprep.subr.bf16.mxu0 0
        %2006 = vmatpush1.bf16.msra.mxu0 0
        %2007 = vmatprep.subr.bf16.mxu0 0
        %2008 = vmatpush1.bf16.msra.mxu0 0
        %2009 = vmatprep.subr.bf16.mxu0 0
        %2010 = vmatpush1.bf16.msra.mxu0 0
        %2011 = vmatprep.subr.bf16.mxu0 0
        %2012 = vmatpush1.bf16.msra.mxu0 0
        %2013 = vmatprep.subr.bf16.mxu0 0
        %2014 = vmatpush1.bf16.msra.mxu0 0
        %2015 = vmatprep.subr.bf16.mxu0 0
        %2016 = vmatpush1.bf16.msra.mxu0 0
        %2017 = vmatprep.subr.bf16.mxu0 0
        %2018 = vmatpush1.bf16.msra.mxu0 0
        %2019 = vmatprep.subr.bf16.mxu0 0
        %2020 = vmatpush1.bf16.msra.mxu0 0
        %2021 = vmatprep.mubr.bf16.mxu0 0
        %2022 = vmatmul.mubr.bf16.gmra.mrb[0].mxu0 %v784
        %v2023 = vpop.f32.mrb[0].mxu0
        %v2024 = vadd.f32 %v1756, %v2023
        %v2025 = vpop.f32.mrb[0].mxu0
        %v2026 = vpop.f32.mrb[0].mxu0
        %v2027 = vpop.f32.mrb[0].mxu0
        %2028 = vdwg.mxu0
        %v2045 = vunpack.c.l.b16 %v1721
        %v2046 = vunpack.c.l.b16 %v1722
        %v2047 = vunpack.c.l.b16 %v1723
        %v2048 = vunpack.c.l.b16 %v1724
        %v2049 = vunpack.c.l.b16 %v1725
        %v2050 = vunpack.c.l.b16 %v1726
        %v2051 = vunpack.c.l.b16 %v1727
        %v2052 = vunpack.c.l.b16 %v1728
        %v2053 = vunpack.c.l.b16 %v1729
        %v2054 = vunpack.c.l.b16 %v1730
        %v2055 = vunpack.c.l.b16 %v1731
        %v2056 = vunpack.c.l.b16 %v1732
        %v2057 = vunpack.c.l.b16 %v1733
        %v2058 = vunpack.c.l.b16 %v1734
        %v2059 = vunpack.c.l.b16 %v1735
        %v2060 = vunpack.c.l.b16 %v1736
        %v2061 = vpack.c.b16 %v2046, %v2045
        %v2062 = vpack.c.b16 %v2048, %v2047
        %v2063 = vpack.c.b16 %v2050, %v2049
        %v2064 = vpack.c.b16 %v2052, %v2051
        %v2065 = vpack.c.b16 %v2054, %v2053
        %v2066 = vpack.c.b16 %v2056, %v2055
        %v2067 = vpack.c.b16 %v2058, %v2057
        %v2068 = vpack.c.b16 %v2060, %v2059
        %2077 = vmatprep.subr.bf16.mxu0 0
        %2078 = vmatpush1.bf16.msra.mxu0 %v2061
        %2079 = vmatprep.subr.bf16.mxu0 0
        %2080 = vmatpush1.bf16.msra.mxu0 %v2062
        %2081 = vmatprep.subr.bf16.mxu0 0
        %2082 = vmatpush1.bf16.msra.mxu0 %v2063
        %2083 = vmatprep.subr.bf16.mxu0 0
        %2084 = vmatpush1.bf16.msra.mxu0 %v2064
        %2085 = vmatprep.subr.bf16.mxu0 0
        %2086 = vmatpush1.bf16.msra.mxu0 %v2065
        %2087 = vmatprep.subr.bf16.mxu0 0
        %2088 = vmatpush1.bf16.msra.mxu0 %v2066
        %2089 = vmatprep.subr.bf16.mxu0 0
        %2090 = vmatpush1.bf16.msra.mxu0 %v2067
        %2091 = vmatprep.subr.bf16.mxu0 0
        %2092 = vmatpush1.bf16.msra.mxu0 %v2068
        %2093 = vmatprep.subr.bf16.mxu0 0
        %2094 = vmatpush1.bf16.msra.mxu0 0
        %2095 = vmatprep.subr.bf16.mxu0 0
        %2096 = vmatpush1.bf16.msra.mxu0 0
        %2097 = vmatprep.subr.bf16.mxu0 0
        %2098 = vmatpush1.bf16.msra.mxu0 0
        %2099 = vmatprep.subr.bf16.mxu0 0
        %2100 = vmatpush1.bf16.msra.mxu0 0
        %2101 = vmatprep.subr.bf16.mxu0 0
        %2102 = vmatpush1.bf16.msra.mxu0 0
        %2103 = vmatprep.subr.bf16.mxu0 0
        %2104 = vmatpush1.bf16.msra.mxu0 0
        %2105 = vmatprep.subr.bf16.mxu0 0
        %2106 = vmatpush1.bf16.msra.mxu0 0
        %2107 = vmatprep.subr.bf16.mxu0 0
        %2108 = vmatpush1.bf16.msra.mxu0 0
        %2109 = vmatprep.mubr.bf16.mxu0 0
        %2110 = vmatmul.mubr.bf16.gmra.mrb[0].mxu0 %v784
        %v2111 = vpop.f32.mrb[0].mxu0
        %v2112 = vadd.f32 %v1760, %v2111
        %v2113 = vpop.f32.mrb[0].mxu0
        %v2114 = vpop.f32.mrb[0].mxu0
        %v2115 = vpop.f32.mrb[0].mxu0
        %2116 = vdwg.mxu0
        %v2117 = vpack.c.bf16 %v960, %v960
        %v2118 = vpack.c.bf16 %v1048, %v1048
        %v2119 = vpack.c.bf16 %v1136, %v1136
        %v2120 = vpack.c.bf16 %v1224, %v1224
        %v2121 = vpack.c.bf16 %v1404, %v1404
        %v2122 = vpack.c.bf16 %v1492, %v1492
        %v2123 = vpack.c.bf16 %v1580, %v1580
        %v2124 = vpack.c.bf16 %v1668, %v1668
        %v2125 = vpack.c.bf16 %v1848, %v1848
        %v2126 = vpack.c.bf16 %v1936, %v1936
        %v2127 = vpack.c.bf16 %v2024, %v2024
        %v2128 = vpack.c.bf16 %v2112, %v2112
        %2129 = vmatprep.subr.bf16.mxu0 0
        %2130 = vmatpush1.bf16.xpose.msra.mxu0 %v2121
        %2131 = vmatprep.subr.bf16.mxu0 0
        %2132 = vmatpush1.bf16.xpose.msra.mxu0 0
        %2133 = vmatprep.subr.bf16.mxu0 0
        %2134 = vmatpush1.bf16.xpose.msra.mxu0 0
        %2135 = vmatprep.subr.bf16.mxu0 0
        %2136 = vmatpush1.bf16.xpose.msra.mxu0 0
        %2137 = vmatprep.subr.bf16.mxu0 0
        %2138 = vmatpush1.bf16.xpose.msra.mxu0 0
        %2139 = vmatprep.subr.bf16.mxu0 0
        %2140 = vmatpush1.bf16.xpose.msra.mxu0 0
        %2141 = vmatprep.subr.bf16.mxu0 0
        %2142 = vmatpush1.bf16.xpose.msra.mxu0 0
        %2143 = vmatprep.subr.bf16.mxu0 0
        %2144 = vmatpush1.bf16.xpose.msra.mxu0 0
        %2145 = vmatprep.subr.bf16.mxu0 0
        %2146 = vmatpush1.bf16.xpose.msra.mxu0 0
        %2147 = vmatprep.subr.bf16.mxu0 0
        %2148 = vmatpush1.bf16.xpose.msra.mxu0 0
        %2149 = vmatprep.subr.bf16.mxu0 0
        %2150 = vmatpush1.bf16.xpose.msra.mxu0 0
        %2151 = vmatprep.subr.bf16.mxu0 0
        %2152 = vmatpush1.bf16.xpose.msra.mxu0 0
        %2153 = vmatprep.subr.bf16.mxu0 0
        %2154 = vmatpush1.bf16.xpose.msra.mxu0 0
        %2155 = vmatprep.subr.bf16.mxu0 0
        %2156 = vmatpush1.bf16.xpose.msra.mxu0 0
        %2157 = vmatprep.subr.bf16.mxu0 0
        %2158 = vmatpush1.bf16.xpose.msra.mxu0 0
        %2159 = vmatprep.subr.bf16.mxu0 0
        %2160 = vmatpush1.bf16.xpose.msra.mxu0 0
        %2161 = vmatprep.mubr.bf16.mxu0 0
        %2162 = vmatmul.mubr.bf16.gmra.mrb[0].mxu0 %v2117
        %v2163 = vpop.f32.mrb[0].mxu0
        %v2164 = vadd.f32 0.0, %v2163
        %v2165 = vpop.f32.mrb[0].mxu0
        %v2166 = vpop.f32.mrb[0].mxu0
        %v2167 = vpop.f32.mrb[0].mxu0
        %2168 = vdwg.mxu0
        %2169 = vmatprep.subr.bf16.mxu0 0
        %2170 = vmatpush1.bf16.xpose.msra.mxu0 %v2122
        %2171 = vmatprep.subr.bf16.mxu0 0
        %2172 = vmatpush1.bf16.xpose.msra.mxu0 0
        %2173 = vmatprep.subr.bf16.mxu0 0
        %2174 = vmatpush1.bf16.xpose.msra.mxu0 0
        %2175 = vmatprep.subr.bf16.mxu0 0
        %2176 = vmatpush1.bf16.xpose.msra.mxu0 0
        %2177 = vmatprep.subr.bf16.mxu0 0
        %2178 = vmatpush1.bf16.xpose.msra.mxu0 0
        %2179 = vmatprep.subr.bf16.mxu0 0
        %2180 = vmatpush1.bf16.xpose.msra.mxu0 0
        %2181 = vmatprep.subr.bf16.mxu0 0
        %2182 = vmatpush1.bf16.xpose.msra.mxu0 0
        %2183 = vmatprep.subr.bf16.mxu0 0
        %2184 = vmatpush1.bf16.xpose.msra.mxu0 0
        %2185 = vmatprep.subr.bf16.mxu0 0
        %2186 = vmatpush1.bf16.xpose.msra.mxu0 0
        %2187 = vmatprep.subr.bf16.mxu0 0
        %2188 = vmatpush1.bf16.xpose.msra.mxu0 0
        %2189 = vmatprep.subr.bf16.mxu0 0
        %2190 = vmatpush1.bf16.xpose.msra.mxu0 0
        %2191 = vmatprep.subr.bf16.mxu0 0
        %2192 = vmatpush1.bf16.xpose.msra.mxu0 0
        %2193 = vmatprep.subr.bf16.mxu0 0
        %2194 = vmatpush1.bf16.xpose.msra.mxu0 0
        %2195 = vmatprep.subr.bf16.mxu0 0
        %2196 = vmatpush1.bf16.xpose.msra.mxu0 0
        %2197 = vmatprep.subr.bf16.mxu0 0
        %2198 = vmatpush1.bf16.xpose.msra.mxu0 0
        %2199 = vmatprep.subr.bf16.mxu0 0
        %2200 = vmatpush1.bf16.xpose.msra.mxu0 0
        %2201 = vmatprep.mubr.bf16.mxu0 0
        %2202 = vmatmul.mubr.bf16.gmra.mrb[0].mxu0 %v2118
        %v2203 = vpop.f32.mrb[0].mxu0
        %v2204 = vadd.f32 0.0, %v2203
        %v2205 = vpop.f32.mrb[0].mxu0
        %v2206 = vpop.f32.mrb[0].mxu0
        %v2207 = vpop.f32.mrb[0].mxu0
        %2208 = vdwg.mxu0
        %2209 = vmatprep.subr.bf16.mxu0 0
        %2210 = vmatpush1.bf16.xpose.msra.mxu0 %v2123
        %2211 = vmatprep.subr.bf16.mxu0 0
        %2212 = vmatpush1.bf16.xpose.msra.mxu0 0
        %2213 = vmatprep.subr.bf16.mxu0 0
        %2214 = vmatpush1.bf16.xpose.msra.mxu0 0
        %2215 = vmatprep.subr.bf16.mxu0 0
        %2216 = vmatpush1.bf16.xpose.msra.mxu0 0
        %2217 = vmatprep.subr.bf16.mxu0 0
        %2218 = vmatpush1.bf16.xpose.msra.mxu0 0
        %2219 = vmatprep.subr.bf16.mxu0 0
        %2220 = vmatpush1.bf16.xpose.msra.mxu0 0
        %2221 = vmatprep.subr.bf16.mxu0 0
        %2222 = vmatpush1.bf16.xpose.msra.mxu0 0
        %2223 = vmatprep.subr.bf16.mxu0 0
        %2224 = vmatpush1.bf16.xpose.msra.mxu0 0
        %2225 = vmatprep.subr.bf16.mxu0 0
        %2226 = vmatpush1.bf16.xpose.msra.mxu0 0
        %2227 = vmatprep.subr.bf16.mxu0 0
        %2228 = vmatpush1.bf16.xpose.msra.mxu0 0
        %2229 = vmatprep.subr.bf16.mxu0 0
        %2230 = vmatpush1.bf16.xpose.msra.mxu0 0
        %2231 = vmatprep.subr.bf16.mxu0 0
        %2232 = vmatpush1.bf16.xpose.msra.mxu0 0
        %2233 = vmatprep.subr.bf16.mxu0 0
        %2234 = vmatpush1.bf16.xpose.msra.mxu0 0
        %2235 = vmatprep.subr.bf16.mxu0 0
        %2236 = vmatpush1.bf16.xpose.msra.mxu0 0
        %2237 = vmatprep.subr.bf16.mxu0 0
        %2238 = vmatpush1.bf16.xpose.msra.mxu0 0
        %2239 = vmatprep.subr.bf16.mxu0 0
        %2240 = vmatpush1.bf16.xpose.msra.mxu0 0
        %2241 = vmatprep.mubr.bf16.mxu0 0
        %2242 = vmatmul.mubr.bf16.gmra.mrb[0].mxu0 %v2119
        %v2243 = vpop.f32.mrb[0].mxu0
        %v2244 = vadd.f32 0.0, %v2243
        %v2245 = vpop.f32.mrb[0].mxu0
        %v2246 = vpop.f32.mrb[0].mxu0
        %v2247 = vpop.f32.mrb[0].mxu0
        %2248 = vdwg.mxu0
        %2249 = vmatprep.subr.bf16.mxu0 0
        %2250 = vmatpush1.bf16.xpose.msra.mxu0 %v2124
        %2251 = vmatprep.subr.bf16.mxu0 0
        %2252 = vmatpush1.bf16.xpose.msra.mxu0 0
        %2253 = vmatprep.subr.bf16.mxu0 0
        %2254 = vmatpush1.bf16.xpose.msra.mxu0 0
        %2255 = vmatprep.subr.bf16.mxu0 0
        %2256 = vmatpush1.bf16.xpose.msra.mxu0 0
        %2257 = vmatprep.subr.bf16.mxu0 0
        %2258 = vmatpush1.bf16.xpose.msra.mxu0 0
        %2259 = vmatprep.subr.bf16.mxu0 0
        %2260 = vmatpush1.bf16.xpose.msra.mxu0 0
        %2261 = vmatprep.subr.bf16.mxu0 0
        %2262 = vmatpush1.bf16.xpose.msra.mxu0 0
        %2263 = vmatprep.subr.bf16.mxu0 0
        %2264 = vmatpush1.bf16.xpose.msra.mxu0 0
        %2265 = vmatprep.subr.bf16.mxu0 0
        %2266 = vmatpush1.bf16.xpose.msra.mxu0 0
        %2267 = vmatprep.subr.bf16.mxu0 0
        %2268 = vmatpush1.bf16.xpose.msra.mxu0 0
        %2269 = vmatprep.subr.bf16.mxu0 0
        %2270 = vmatpush1.bf16.xpose.msra.mxu0 0
        %2271 = vmatprep.subr.bf16.mxu0 0
        %2272 = vmatpush1.bf16.xpose.msra.mxu0 0
        %2273 = vmatprep.subr.bf16.mxu0 0
        %2274 = vmatpush1.bf16.xpose.msra.mxu0 0
        %2275 = vmatprep.subr.bf16.mxu0 0
        %2276 = vmatpush1.bf16.xpose.msra.mxu0 0
        %2277 = vmatprep.subr.bf16.mxu0 0
        %2278 = vmatpush1.bf16.xpose.msra.mxu0 0
        %2279 = vmatprep.subr.bf16.mxu0 0
        %2280 = vmatpush1.bf16.xpose.msra.mxu0 0
        %2281 = vmatprep.mubr.bf16.mxu0 0
        %2282 = vmatmul.mubr.bf16.gmra.mrb[0].mxu0 %v2120
        %v2283 = vpop.f32.mrb[0].mxu0
        %v2284 = vadd.f32 0.0, %v2283
        %v2285 = vpop.f32.mrb[0].mxu0
        %v2286 = vpop.f32.mrb[0].mxu0
        %v2287 = vpop.f32.mrb[0].mxu0
        %2288 = vdwg.mxu0
        %vm2289 = vcmask 64512
        %v2290 = vsel %vm2289, %v2164, -inf
        %2291 = vmax.xlane.f32.xlu0 %v2290
        %v2292 = vpop.xlane.xlu0 %2291
        %v2293 = vsel %vm2289, %v2204, -inf
        %2294 = vmax.xlane.f32.xlu0 %v2293
        %v2295 = vpop.xlane.xlu0 %2294
        %v2296 = vsel %vm2289, %v2244, -inf
        %2297 = vmax.xlane.f32.xlu0 %v2296
        %v2298 = vpop.xlane.xlu0 %2297
        %v2299 = vsel %vm2289, %v2284, -inf
        %2300 = vmax.xlane.f32.xlu0 %v2299
        %v2301 = vpop.xlane.xlu0 %2300
        %v2302 = vsub.f32 %v2164, %v2292
        %v2303 = vsub.f32 %v2204, %v2295
        %v2304 = vsub.f32 %v2244, %v2298
        %v2305 = vsub.f32 %v2284, %v2301
        %v2306 = vmul.f32 %v2302, 1.442695
        %v2307 = vpow.pop %v2306
        %v2308 = vmul.f32 %v2303, 1.442695
        %v2309 = vpow.pop %v2308
        %v2310 = vmul.f32 %v2304, 1.442695
        %v2311 = vpow.pop %v2310
        %v2312 = vmul.f32 %v2305, 1.442695
        %v2313 = vpow.pop %v2312
        %v2314 = vsel %vm2289, %v2307, 0.0
        %2315 = vadd.xlane.f32.xlu0 %v2314
        %v2316 = vpop.xlane.xlu0 %2315
        %v2317 = vsel %vm2289, %v2309, 0.0
        %2318 = vadd.xlane.f32.xlu0 %v2317
        %v2319 = vpop.xlane.xlu0 %2318
        %v2320 = vsel %vm2289, %v2311, 0.0
        %2321 = vadd.xlane.f32.xlu0 %v2320
        %v2322 = vpop.xlane.xlu0 %2321
        %v2323 = vsel %vm2289, %v2313, 0.0
        %2324 = vadd.xlane.f32.xlu0 %v2323
        %v2325 = vpop.xlane.xlu0 %2324
        %v2326 = vrcp.pop %v2316
        %v2327 = vrcp.pop %v2319
        %v2328 = vrcp.pop %v2322
        %v2329 = vrcp.pop %v2325
        %v2330 = vmul.f32 %v2307, %v2326
        %v2331 = vmul.f32 %v2309, %v2327
        %v2332 = vmul.f32 %v2311, %v2328
        %v2333 = vmul.f32 %v2313, %v2329
        %v2334 = vpack.c.bf16 %v2330, %v2330
        %v2335 = vpack.c.bf16 %v2331, %v2331
        %v2336 = vpack.c.bf16 %v2332, %v2332
        %v2337 = vpack.c.bf16 %v2333, %v2333
        %v2339 = vsel %vm2289, %v2334, 0
        %vm2341 = vcmask 1043456
        %v2343 = vsel %vm2341, %v2125, 0
        %2345 = vmatprep.subr.bf16.mxu0 0
        %2346 = vmatpush1.bf16.msra.mxu0 %v2343
        %2347 = vmatprep.subr.bf16.mxu0 0
        %2348 = vmatpush1.bf16.msra.mxu0 0
        %2349 = vmatprep.subr.bf16.mxu0 0
        %2350 = vmatpush1.bf16.msra.mxu0 0
        %2351 = vmatprep.subr.bf16.mxu0 0
        %2352 = vmatpush1.bf16.msra.mxu0 0
        %2353 = vmatprep.subr.bf16.mxu0 0
        %2354 = vmatpush1.bf16.msra.mxu0 0
        %2355 = vmatprep.subr.bf16.mxu0 0
        %2356 = vmatpush1.bf16.msra.mxu0 0
        %2357 = vmatprep.subr.bf16.mxu0 0
        %2358 = vmatpush1.bf16.msra.mxu0 0
        %2359 = vmatprep.subr.bf16.mxu0 0
        %2360 = vmatpush1.bf16.msra.mxu0 0
        %2361 = vmatprep.subr.bf16.mxu0 0
        %2362 = vmatpush1.bf16.msra.mxu0 0
        %2363 = vmatprep.subr.bf16.mxu0 0
        %2364 = vmatpush1.bf16.msra.mxu0 0
        %2365 = vmatprep.subr.bf16.mxu0 0
        %2366 = vmatpush1.bf16.msra.mxu0 0
        %2367 = vmatprep.subr.bf16.mxu0 0
        %2368 = vmatpush1.bf16.msra.mxu0 0
        %2369 = vmatprep.subr.bf16.mxu0 0
        %2370 = vmatpush1.bf16.msra.mxu0 0
        %2371 = vmatprep.subr.bf16.mxu0 0
        %2372 = vmatpush1.bf16.msra.mxu0 0
        %2373 = vmatprep.subr.bf16.mxu0 0
        %2374 = vmatpush1.bf16.msra.mxu0 0
        %2375 = vmatprep.subr.bf16.mxu0 0
        %2376 = vmatpush1.bf16.msra.mxu0 0
        %2377 = vmatprep.mubr.bf16.mxu0 0
        %2378 = vmatmul.mubr.bf16.gmra.mrb[0].mxu0 %v2339
        %v2379 = vpop.f32.mrb[0].mxu0
        %v2380 = vadd.f32 0.0, %v2379
        %v2381 = vpop.f32.mrb[0].mxu0
        %v2382 = vpop.f32.mrb[0].mxu0
        %v2383 = vpop.f32.mrb[0].mxu0
        %2384 = vdwg.mxu0
        %v2386 = vsel %vm2289, %v2335, 0
        %v2389 = vsel %vm2341, %v2126, 0
        %2391 = vmatprep.subr.bf16.mxu0 0
        %2392 = vmatpush1.bf16.msra.mxu0 %v2389
        %2393 = vmatprep.subr.bf16.mxu0 0
        %2394 = vmatpush1.bf16.msra.mxu0 0
        %2395 = vmatprep.subr.bf16.mxu0 0
        %2396 = vmatpush1.bf16.msra.mxu0 0
        %2397 = vmatprep.subr.bf16.mxu0 0
        %2398 = vmatpush1.bf16.msra.mxu0 0
        %2399 = vmatprep.subr.bf16.mxu0 0
        %2400 = vmatpush1.bf16.msra.mxu0 0
        %2401 = vmatprep.subr.bf16.mxu0 0
        %2402 = vmatpush1.bf16.msra.mxu0 0
        %2403 = vmatprep.subr.bf16.mxu0 0
        %2404 = vmatpush1.bf16.msra.mxu0 0
        %2405 = vmatprep.subr.bf16.mxu0 0
        %2406 = vmatpush1.bf16.msra.mxu0 0
        %2407 = vmatprep.subr.bf16.mxu0 0
        %2408 = vmatpush1.bf16.msra.mxu0 0
        %2409 = vmatprep.subr.bf16.mxu0 0
        %2410 = vmatpush1.bf16.msra.mxu0 0
        %2411 = vmatprep.subr.bf16.mxu0 0
        %2412 = vmatpush1.bf16.msra.mxu0 0
        %2413 = vmatprep.subr.bf16.mxu0 0
        %2414 = vmatpush1.bf16.msra.mxu0 0
        %2415 = vmatprep.subr.bf16.mxu0 0
        %2416 = vmatpush1.bf16.msra.mxu0 0
        %2417 = vmatprep.subr.bf16.mxu0 0
        %2418 = vmatpush1.bf16.msra.mxu0 0
        %2419 = vmatprep.subr.bf16.mxu0 0
        %2420 = vmatpush1.bf16.msra.mxu0 0
        %2421 = vmatprep.subr.bf16.mxu0 0
        %2422 = vmatpush1.bf16.msra.mxu0 0
        %2423 = vmatprep.mubr.bf16.mxu0 0
        %2424 = vmatmul.mubr.bf16.gmra.mrb[0].mxu0 %v2386
        %v2425 = vpop.f32.mrb[0].mxu0
        %v2426 = vadd.f32 0.0, %v2425
        %v2427 = vpop.f32.mrb[0].mxu0
        %v2428 = vpop.f32.mrb[0].mxu0
        %v2429 = vpop.f32.mrb[0].mxu0
        %2430 = vdwg.mxu0
        %v2432 = vsel %vm2289, %v2336, 0
        %v2435 = vsel %vm2341, %v2127, 0
        %2437 = vmatprep.subr.bf16.mxu0 0
        %2438 = vmatpush1.bf16.msra.mxu0 %v2435
        %2439 = vmatprep.subr.bf16.mxu0 0
        %2440 = vmatpush1.bf16.msra.mxu0 0
        %2441 = vmatprep.subr.bf16.mxu0 0
        %2442 = vmatpush1.bf16.msra.mxu0 0
        %2443 = vmatprep.subr.bf16.mxu0 0
        %2444 = vmatpush1.bf16.msra.mxu0 0
        %2445 = vmatprep.subr.bf16.mxu0 0
        %2446 = vmatpush1.bf16.msra.mxu0 0
        %2447 = vmatprep.subr.bf16.mxu0 0
        %2448 = vmatpush1.bf16.msra.mxu0 0
        %2449 = vmatprep.subr.bf16.mxu0 0
        %2450 = vmatpush1.bf16.msra.mxu0 0
        %2451 = vmatprep.subr.bf16.mxu0 0
        %2452 = vmatpush1.bf16.msra.mxu0 0
        %2453 = vmatprep.subr.bf16.mxu0 0
        %2454 = vmatpush1.bf16.msra.mxu0 0
        %2455 = vmatprep.subr.bf16.mxu0 0
        %2456 = vmatpush1.bf16.msra.mxu0 0
        %2457 = vmatprep.subr.bf16.mxu0 0
        %2458 = vmatpush1.bf16.msra.mxu0 0
        %2459 = vmatprep.subr.bf16.mxu0 0
        %2460 = vmatpush1.bf16.msra.mxu0 0
        %2461 = vmatprep.subr.bf16.mxu0 0
        %2462 = vmatpush1.bf16.msra.mxu0 0
        %2463 = vmatprep.subr.bf16.mxu0 0
        %2464 = vmatpush1.bf16.msra.mxu0 0
        %2465 = vmatprep.subr.bf16.mxu0 0
        %2466 = vmatpush1.bf16.msra.mxu0 0
        %2467 = vmatprep.subr.bf16.mxu0 0
        %2468 = vmatpush1.bf16.msra.mxu0 0
        %2469 = vmatprep.mubr.bf16.mxu0 0
        %2470 = vmatmul.mubr.bf16.gmra.mrb[0].mxu0 %v2432
        %v2471 = vpop.f32.mrb[0].mxu0
        %v2472 = vadd.f32 0.0, %v2471
        %v2473 = vpop.f32.mrb[0].mxu0
        %v2474 = vpop.f32.mrb[0].mxu0
        %v2475 = vpop.f32.mrb[0].mxu0
        %2476 = vdwg.mxu0
        %v2478 = vsel %vm2289, %v2337, 0
        %v2481 = vsel %vm2341, %v2128, 0
        %2483 = vmatprep.subr.bf16.mxu0 0
        %2484 = vmatpush1.bf16.msra.mxu0 %v2481
        %2485 = vmatprep.subr.bf16.mxu0 0
        %2486 = vmatpush1.bf16.msra.mxu0 0
        %2487 = vmatprep.subr.bf16.mxu0 0
        %2488 = vmatpush1.bf16.msra.mxu0 0
        %2489 = vmatprep.subr.bf16.mxu0 0
        %2490 = vmatpush1.bf16.msra.mxu0 0
        %2491 = vmatprep.subr.bf16.mxu0 0
        %2492 = vmatpush1.bf16.msra.mxu0 0
        %2493 = vmatprep.subr.bf16.mxu0 0
        %2494 = vmatpush1.bf16.msra.mxu0 0
        %2495 = vmatprep.subr.bf16.mxu0 0
        %2496 = vmatpush1.bf16.msra.mxu0 0
        %2497 = vmatprep.subr.bf16.mxu0 0
        %2498 = vmatpush1.bf16.msra.mxu0 0
        %2499 = vmatprep.subr.bf16.mxu0 0
        %2500 = vmatpush1.bf16.msra.mxu0 0
        %2501 = vmatprep.subr.bf16.mxu0 0
        %2502 = vmatpush1.bf16.msra.mxu0 0
        %2503 = vmatprep.subr.bf16.mxu0 0
        %2504 = vmatpush1.bf16.msra.mxu0 0
        %2505 = vmatprep.subr.bf16.mxu0 0
        %2506 = vmatpush1.bf16.msra.mxu0 0
        %2507 = vmatprep.subr.bf16.mxu0 0
        %2508 = vmatpush1.bf16.msra.mxu0 0
        %2509 = vmatprep.subr.bf16.mxu0 0
        %2510 = vmatpush1.bf16.msra.mxu0 0
        %2511 = vmatprep.subr.bf16.mxu0 0
        %2512 = vmatpush1.bf16.msra.mxu0 0
        %2513 = vmatprep.subr.bf16.mxu0 0
        %2514 = vmatpush1.bf16.msra.mxu0 0
        %2515 = vmatprep.mubr.bf16.mxu0 0
        %2516 = vmatmul.mubr.bf16.gmra.mrb[0].mxu0 %v2478
        %v2517 = vpop.f32.mrb[0].mxu0
        %v2518 = vadd.f32 0.0, %v2517
        %v2519 = vpop.f32.mrb[0].mxu0
        %v2520 = vpop.f32.mrb[0].mxu0
        %v2521 = vpop.f32.mrb[0].mxu0
        %2522 = vdwg.mxu0
        %v2523 = vpack.c.bf16 %v2380, %v2380
        %v2524 = vpack.c.bf16 %v2426, %v2426
        %v2525 = vpack.c.bf16 %v2472, %v2472
        %v2526 = vpack.c.bf16 %v2518, %v2518
        %v2527 = vld [vmem:[#allocation14] sm:$0xf]
        %v2528 = vld [vmem:[#allocation14 + $0x4] sm:$0xf]
        %v2529 = vld [vmem:[#allocation14 + $0x8] sm:$0xf]
        %v2530 = vld [vmem:[#allocation14 + $0xc] sm:$0xf]
        %v2531 = vld [vmem:[#allocation14 + $0x10] sm:$0xf]
        %v2532 = vld [vmem:[#allocation14 + $0x14] sm:$0xf]
        %v2533 = vld [vmem:[#allocation14 + $0x18] sm:$0xf]
        %v2534 = vld [vmem:[#allocation14 + $0x1c] sm:$0xf]
        %v2535 = vld [vmem:[#allocation14 + $0x20] sm:$0xf]
        %v2536 = vld [vmem:[#allocation14 + $0x24] sm:$0xf]
        %v2537 = vld [vmem:[#allocation14 + $0x28] sm:$0xf]
        %v2538 = vld [vmem:[#allocation14 + $0x2c] sm:$0xf]
        %v2539 = vld [vmem:[#allocation14 + $0x30] sm:$0xf]
        %v2540 = vld [vmem:[#allocation14 + $0x34] sm:$0xf]
        %v2541 = vld [vmem:[#allocation14 + $0x38] sm:$0xf]
        %v2542 = vld [vmem:[#allocation14 + $0x3c] sm:$0xf]
        %v2543 = vld [vmem:[#allocation14 + $0x40] sm:$0xf]
        %v2544 = vld [vmem:[#allocation14 + $0x44] sm:$0xf]
        %v2545 = vld [vmem:[#allocation14 + $0x48] sm:$0xf]
        %v2546 = vld [vmem:[#allocation14 + $0x4c] sm:$0xf]
        %v2547 = vld [vmem:[#allocation14 + $0x50] sm:$0xf]
        %v2548 = vld [vmem:[#allocation14 + $0x54] sm:$0xf]
        %v2549 = vld [vmem:[#allocation14 + $0x58] sm:$0xf]
        %v2550 = vld [vmem:[#allocation14 + $0x5c] sm:$0xf]
        %v2551 = vld [vmem:[#allocation14 + $0x60] sm:$0xf]
        %v2552 = vld [vmem:[#allocation14 + $0x64] sm:$0xf]
        %v2553 = vld [vmem:[#allocation14 + $0x68] sm:$0xf]
        %v2554 = vld [vmem:[#allocation14 + $0x6c] sm:$0xf]
        %v2555 = vld [vmem:[#allocation14 + $0x70] sm:$0xf]
        %v2556 = vld [vmem:[#allocation14 + $0x74] sm:$0xf]
        %v2557 = vld [vmem:[#allocation14 + $0x78] sm:$0xf]
        %v2558 = vld [vmem:[#allocation14 + $0x7c] sm:$0xf]
        %v2559 = vld [vmem:[#allocation14 + $0x80] sm:$0xf]
        %v2560 = vld [vmem:[#allocation14 + $0x84] sm:$0xf]
        %v2561 = vld [vmem:[#allocation14 + $0x88] sm:$0xf]
        %v2562 = vld [vmem:[#allocation14 + $0x8c] sm:$0xf]
        %v2563 = vld [vmem:[#allocation14 + $0x90] sm:$0xf]
        %v2564 = vld [vmem:[#allocation14 + $0x94] sm:$0xf]
        %v2565 = vld [vmem:[#allocation14 + $0x98] sm:$0xf]
        %v2566 = vld [vmem:[#allocation14 + $0x9c] sm:$0xf]
        %v2567 = vld [vmem:[#allocation14 + $0xa0] sm:$0xf]
        %v2568 = vld [vmem:[#allocation14 + $0xa4] sm:$0xf]
        %v2569 = vld [vmem:[#allocation14 + $0xa8] sm:$0xf]
        %v2570 = vld [vmem:[#allocation14 + $0xac] sm:$0xf]
        %v2571 = vld [vmem:[#allocation14 + $0xb0] sm:$0xf]
        %v2572 = vld [vmem:[#allocation14 + $0xb4] sm:$0xf]
        %v2573 = vld [vmem:[#allocation14 + $0xb8] sm:$0xf]
        %v2574 = vld [vmem:[#allocation14 + $0xbc] sm:$0xf]
        %v2575 = vld [vmem:[#allocation14 + $0xc0] sm:$0xf]
        %v2576 = vld [vmem:[#allocation14 + $0xc4] sm:$0xf]
        %v2577 = vld [vmem:[#allocation14 + $0xc8] sm:$0xf]
        %v2578 = vld [vmem:[#allocation14 + $0xcc] sm:$0xf]
        %v2579 = vld [vmem:[#allocation14 + $0xd0] sm:$0xf]
        %v2580 = vld [vmem:[#allocation14 + $0xd4] sm:$0xf]
        %v2581 = vld [vmem:[#allocation14 + $0xd8] sm:$0xf]
        %v2582 = vld [vmem:[#allocation14 + $0xdc] sm:$0xf]
        %v2583 = vld [vmem:[#allocation14 + $0xe0] sm:$0xf]
        %v2584 = vld [vmem:[#allocation14 + $0xe4] sm:$0xf]
        %v2585 = vld [vmem:[#allocation14 + $0xe8] sm:$0xf]
        %v2586 = vld [vmem:[#allocation14 + $0xec] sm:$0xf]
        %v2587 = vld [vmem:[#allocation14 + $0xf0] sm:$0xf]
        %v2588 = vld [vmem:[#allocation14 + $0xf4] sm:$0xf]
        %v2589 = vld [vmem:[#allocation14 + $0xf8] sm:$0xf]
        %v2590 = vld [vmem:[#allocation14 + $0xfc] sm:$0xf]
        %v2607 = vunpack.c.l.b16 %v2527
        %v2608 = vunpack.c.l.b16 %v2528
        %v2609 = vunpack.c.l.b16 %v2529
        %v2610 = vunpack.c.l.b16 %v2530
        %v2611 = vunpack.c.l.b16 %v2531
        %v2612 = vunpack.c.l.b16 %v2532
        %v2613 = vunpack.c.l.b16 %v2533
        %v2614 = vunpack.c.l.b16 %v2534
        %v2615 = vunpack.c.l.b16 %v2535
        %v2616 = vunpack.c.l.b16 %v2536
        %v2617 = vunpack.c.l.b16 %v2537
        %v2618 = vunpack.c.l.b16 %v2538
        %v2619 = vunpack.c.l.b16 %v2539
        %v2620 = vunpack.c.l.b16 %v2540
        %v2621 = vunpack.c.l.b16 %v2541
        %v2622 = vunpack.c.l.b16 %v2542
        %v2623 = vpack.c.b16 %v2608, %v2607
        %v2624 = vpack.c.b16 %v2610, %v2609
        %v2625 = vpack.c.b16 %v2612, %v2611
        %v2626 = vpack.c.b16 %v2614, %v2613
        %v2627 = vpack.c.b16 %v2616, %v2615
        %v2628 = vpack.c.b16 %v2618, %v2617
        %v2629 = vpack.c.b16 %v2620, %v2619
        %v2630 = vpack.c.b16 %v2622, %v2621
        %2639 = vmatprep.subr.bf16.mxu0 0
        %2640 = vmatpush1.bf16.msra.mxu0 %v2623
        %2641 = vmatprep.subr.bf16.mxu0 0
        %2642 = vmatpush1.bf16.msra.mxu0 %v2624
        %2643 = vmatprep.subr.bf16.mxu0 0
        %2644 = vmatpush1.bf16.msra.mxu0 %v2625
        %2645 = vmatprep.subr.bf16.mxu0 0
        %2646 = vmatpush1.bf16.msra.mxu0 %v2626
        %2647 = vmatprep.subr.bf16.mxu0 0
        %2648 = vmatpush1.bf16.msra.mxu0 %v2627
        %2649 = vmatprep.subr.bf16.mxu0 0
        %2650 = vmatpush1.bf16.msra.mxu0 %v2628
        %2651 = vmatprep.subr.bf16.mxu0 0
        %2652 = vmatpush1.bf16.msra.mxu0 %v2629
        %2653 = vmatprep.subr.bf16.mxu0 0
        %2654 = vmatpush1.bf16.msra.mxu0 %v2630
        %2655 = vmatprep.subr.bf16.mxu0 0
        %2656 = vmatpush1.bf16.msra.mxu0 0
        %2657 = vmatprep.subr.bf16.mxu0 0
        %2658 = vmatpush1.bf16.msra.mxu0 0
        %2659 = vmatprep.subr.bf16.mxu0 0
        %2660 = vmatpush1.bf16.msra.mxu0 0
        %2661 = vmatprep.subr.bf16.mxu0 0
        %2662 = vmatpush1.bf16.msra.mxu0 0
        %2663 = vmatprep.subr.bf16.mxu0 0
        %2664 = vmatpush1.bf16.msra.mxu0 0
        %2665 = vmatprep.subr.bf16.mxu0 0
        %2666 = vmatpush1.bf16.msra.mxu0 0
        %2667 = vmatprep.subr.bf16.mxu0 0
        %2668 = vmatpush1.bf16.msra.mxu0 0
        %2669 = vmatprep.subr.bf16.mxu0 0
        %2670 = vmatpush1.bf16.msra.mxu0 0
        %2671 = vmatprep.mubr.bf16.mxu0 0
        %2672 = vmatmul.mubr.bf16.gmra.mrb[0].mxu0 %v2523
        %v2673 = vpop.f32.mrb[0].mxu0
        %v2674 = vadd.f32 0.0, %v2673
        %v2675 = vpop.f32.mrb[0].mxu0
        %v2676 = vpop.f32.mrb[0].mxu0
        %v2677 = vpop.f32.mrb[0].mxu0
        %2678 = vdwg.mxu0
        %v2695 = vunpack.c.l.b16 %v2543
        %v2696 = vunpack.c.l.b16 %v2544
        %v2697 = vunpack.c.l.b16 %v2545
        %v2698 = vunpack.c.l.b16 %v2546
        %v2699 = vunpack.c.l.b16 %v2547
        %v2700 = vunpack.c.l.b16 %v2548
        %v2701 = vunpack.c.l.b16 %v2549
        %v2702 = vunpack.c.l.b16 %v2550
        %v2703 = vunpack.c.l.b16 %v2551
        %v2704 = vunpack.c.l.b16 %v2552
        %v2705 = vunpack.c.l.b16 %v2553
        %v2706 = vunpack.c.l.b16 %v2554
        %v2707 = vunpack.c.l.b16 %v2555
        %v2708 = vunpack.c.l.b16 %v2556
        %v2709 = vunpack.c.l.b16 %v2557
        %v2710 = vunpack.c.l.b16 %v2558
        %v2711 = vpack.c.b16 %v2696, %v2695
        %v2712 = vpack.c.b16 %v2698, %v2697
        %v2713 = vpack.c.b16 %v2700, %v2699
        %v2714 = vpack.c.b16 %v2702, %v2701
        %v2715 = vpack.c.b16 %v2704, %v2703
        %v2716 = vpack.c.b16 %v2706, %v2705
        %v2717 = vpack.c.b16 %v2708, %v2707
        %v2718 = vpack.c.b16 %v2710, %v2709
        %2727 = vmatprep.subr.bf16.mxu0 0
        %2728 = vmatpush1.bf16.msra.mxu0 %v2711
        %2729 = vmatprep.subr.bf16.mxu0 0
        %2730 = vmatpush1.bf16.msra.mxu0 %v2712
        %2731 = vmatprep.subr.bf16.mxu0 0
        %2732 = vmatpush1.bf16.msra.mxu0 %v2713
        %2733 = vmatprep.subr.bf16.mxu0 0
        %2734 = vmatpush1.bf16.msra.mxu0 %v2714
        %2735 = vmatprep.subr.bf16.mxu0 0
        %2736 = vmatpush1.bf16.msra.mxu0 %v2715
        %2737 = vmatprep.subr.bf16.mxu0 0
        %2738 = vmatpush1.bf16.msra.mxu0 %v2716
        %2739 = vmatprep.subr.bf16.mxu0 0
        %2740 = vmatpush1.bf16.msra.mxu0 %v2717
        %2741 = vmatprep.subr.bf16.mxu0 0
        %2742 = vmatpush1.bf16.msra.mxu0 %v2718
        %2743 = vmatprep.subr.bf16.mxu0 0
        %2744 = vmatpush1.bf16.msra.mxu0 0
        %2745 = vmatprep.subr.bf16.mxu0 0
        %2746 = vmatpush1.bf16.msra.mxu0 0
        %2747 = vmatprep.subr.bf16.mxu0 0
        %2748 = vmatpush1.bf16.msra.mxu0 0
        %2749 = vmatprep.subr.bf16.mxu0 0
        %2750 = vmatpush1.bf16.msra.mxu0 0
        %2751 = vmatprep.subr.bf16.mxu0 0
        %2752 = vmatpush1.bf16.msra.mxu0 0
        %2753 = vmatprep.subr.bf16.mxu0 0
        %2754 = vmatpush1.bf16.msra.mxu0 0
        %2755 = vmatprep.subr.bf16.mxu0 0
        %2756 = vmatpush1.bf16.msra.mxu0 0
        %2757 = vmatprep.subr.bf16.mxu0 0
        %2758 = vmatpush1.bf16.msra.mxu0 0
        %2759 = vmatprep.mubr.bf16.mxu0 0
        %2760 = vmatmul.mubr.bf16.gmra.mrb[0].mxu0 %v2524
        %v2761 = vpop.f32.mrb[0].mxu0
        %v2762 = vadd.f32 0.0, %v2761
        %v2763 = vpop.f32.mrb[0].mxu0
        %v2764 = vpop.f32.mrb[0].mxu0
        %v2765 = vpop.f32.mrb[0].mxu0
        %2766 = vdwg.mxu0
        %v2783 = vunpack.c.l.b16 %v2559
        %v2784 = vunpack.c.l.b16 %v2560
        %v2785 = vunpack.c.l.b16 %v2561
        %v2786 = vunpack.c.l.b16 %v2562
        %v2787 = vunpack.c.l.b16 %v2563
        %v2788 = vunpack.c.l.b16 %v2564
        %v2789 = vunpack.c.l.b16 %v2565
        %v2790 = vunpack.c.l.b16 %v2566
        %v2791 = vunpack.c.l.b16 %v2567
        %v2792 = vunpack.c.l.b16 %v2568
        %v2793 = vunpack.c.l.b16 %v2569
        %v2794 = vunpack.c.l.b16 %v2570
        %v2795 = vunpack.c.l.b16 %v2571
        %v2796 = vunpack.c.l.b16 %v2572
        %v2797 = vunpack.c.l.b16 %v2573
        %v2798 = vunpack.c.l.b16 %v2574
        %v2799 = vpack.c.b16 %v2784, %v2783
        %v2800 = vpack.c.b16 %v2786, %v2785
        %v2801 = vpack.c.b16 %v2788, %v2787
        %v2802 = vpack.c.b16 %v2790, %v2789
        %v2803 = vpack.c.b16 %v2792, %v2791
        %v2804 = vpack.c.b16 %v2794, %v2793
        %v2805 = vpack.c.b16 %v2796, %v2795
        %v2806 = vpack.c.b16 %v2798, %v2797
        %2815 = vmatprep.subr.bf16.mxu0 0
        %2816 = vmatpush1.bf16.msra.mxu0 %v2799
        %2817 = vmatprep.subr.bf16.mxu0 0
        %2818 = vmatpush1.bf16.msra.mxu0 %v2800
        %2819 = vmatprep.subr.bf16.mxu0 0
        %2820 = vmatpush1.bf16.msra.mxu0 %v2801
        %2821 = vmatprep.subr.bf16.mxu0 0
        %2822 = vmatpush1.bf16.msra.mxu0 %v2802
        %2823 = vmatprep.subr.bf16.mxu0 0
        %2824 = vmatpush1.bf16.msra.mxu0 %v2803
        %2825 = vmatprep.subr.bf16.mxu0 0
        %2826 = vmatpush1.bf16.msra.mxu0 %v2804
        %2827 = vmatprep.subr.bf16.mxu0 0
        %2828 = vmatpush1.bf16.msra.mxu0 %v2805
        %2829 = vmatprep.subr.bf16.mxu0 0
        %2830 = vmatpush1.bf16.msra.mxu0 %v2806
        %2831 = vmatprep.subr.bf16.mxu0 0
        %2832 = vmatpush1.bf16.msra.mxu0 0
        %2833 = vmatprep.subr.bf16.mxu0 0
        %2834 = vmatpush1.bf16.msra.mxu0 0
        %2835 = vmatprep.subr.bf16.mxu0 0
        %2836 = vmatpush1.bf16.msra.mxu0 0
        %2837 = vmatprep.subr.bf16.mxu0 0
        %2838 = vmatpush1.bf16.msra.mxu0 0
        %2839 = vmatprep.subr.bf16.mxu0 0
        %2840 = vmatpush1.bf16.msra.mxu0 0
        %2841 = vmatprep.subr.bf16.mxu0 0
        %2842 = vmatpush1.bf16.msra.mxu0 0
        %2843 = vmatprep.subr.bf16.mxu0 0
        %2844 = vmatpush1.bf16.msra.mxu0 0
        %2845 = vmatprep.subr.bf16.mxu0 0
        %2846 = vmatpush1.bf16.msra.mxu0 0
        %2847 = vmatprep.mubr.bf16.mxu0 0
        %2848 = vmatmul.mubr.bf16.gmra.mrb[0].mxu0 %v2525
        %v2849 = vpop.f32.mrb[0].mxu0
        %v2850 = vadd.f32 0.0, %v2849
        %v2851 = vpop.f32.mrb[0].mxu0
        %v2852 = vpop.f32.mrb[0].mxu0
        %v2853 = vpop.f32.mrb[0].mxu0
        %2854 = vdwg.mxu0
        %v2871 = vunpack.c.l.b16 %v2575
        %v2872 = vunpack.c.l.b16 %v2576
        %v2873 = vunpack.c.l.b16 %v2577
        %v2874 = vunpack.c.l.b16 %v2578
        %v2875 = vunpack.c.l.b16 %v2579
        %v2876 = vunpack.c.l.b16 %v2580
        %v2877 = vunpack.c.l.b16 %v2581
        %v2878 = vunpack.c.l.b16 %v2582
        %v2879 = vunpack.c.l.b16 %v2583
        %v2880 = vunpack.c.l.b16 %v2584
        %v2881 = vunpack.c.l.b16 %v2585
        %v2882 = vunpack.c.l.b16 %v2586
        %v2883 = vunpack.c.l.b16 %v2587
        %v2884 = vunpack.c.l.b16 %v2588
        %v2885 = vunpack.c.l.b16 %v2589
        %v2886 = vunpack.c.l.b16 %v2590
        %v2887 = vpack.c.b16 %v2872, %v2871
        %v2888 = vpack.c.b16 %v2874, %v2873
        %v2889 = vpack.c.b16 %v2876, %v2875
        %v2890 = vpack.c.b16 %v2878, %v2877
        %v2891 = vpack.c.b16 %v2880, %v2879
        %v2892 = vpack.c.b16 %v2882, %v2881
        %v2893 = vpack.c.b16 %v2884, %v2883
        %v2894 = vpack.c.b16 %v2886, %v2885
        %2903 = vmatprep.subr.bf16.mxu0 0
        %2904 = vmatpush1.bf16.msra.mxu0 %v2887
        %2905 = vmatprep.subr.bf16.mxu0 0
        %2906 = vmatpush1.bf16.msra.mxu0 %v2888
        %2907 = vmatprep.subr.bf16.mxu0 0
        %2908 = vmatpush1.bf16.msra.mxu0 %v2889
        %2909 = vmatprep.subr.bf16.mxu0 0
        %2910 = vmatpush1.bf16.msra.mxu0 %v2890
        %2911 = vmatprep.subr.bf16.mxu0 0
        %2912 = vmatpush1.bf16.msra.mxu0 %v2891
        %2913 = vmatprep.subr.bf16.mxu0 0
        %2914 = vmatpush1.bf16.msra.mxu0 %v2892
        %2915 = vmatprep.subr.bf16.mxu0 0
        %2916 = vmatpush1.bf16.msra.mxu0 %v2893
        %2917 = vmatprep.subr.bf16.mxu0 0
        %2918 = vmatpush1.bf16.msra.mxu0 %v2894
        %2919 = vmatprep.subr.bf16.mxu0 0
        %2920 = vmatpush1.bf16.msra.mxu0 0
        %2921 = vmatprep.subr.bf16.mxu0 0
        %2922 = vmatpush1.bf16.msra.mxu0 0
        %2923 = vmatprep.subr.bf16.mxu0 0
        %2924 = vmatpush1.bf16.msra.mxu0 0
        %2925 = vmatprep.subr.bf16.mxu0 0
        %2926 = vmatpush1.bf16.msra.mxu0 0
        %2927 = vmatprep.subr.bf16.mxu0 0
        %2928 = vmatpush1.bf16.msra.mxu0 0
        %2929 = vmatprep.subr.bf16.mxu0 0
        %2930 = vmatpush1.bf16.msra.mxu0 0
        %2931 = vmatprep.subr.bf16.mxu0 0
        %2932 = vmatpush1.bf16.msra.mxu0 0
        %2933 = vmatprep.subr.bf16.mxu0 0
        %2934 = vmatpush1.bf16.msra.mxu0 0
        %2935 = vmatprep.mubr.bf16.mxu0 0
        %2936 = vmatmul.mubr.bf16.gmra.mrb[0].mxu0 %v2526
        %v2937 = vpop.f32.mrb[0].mxu0
        %v2938 = vadd.f32 0.0, %v2937
        %v2939 = vpop.f32.mrb[0].mxu0
        %v2940 = vpop.f32.mrb[0].mxu0
        %v2941 = vpop.f32.mrb[0].mxu0
        %2942 = vdwg.mxu0
        %v2943 = vadd.f32 %v2674, %v2762
        %v2944 = vadd.f32 %v2943, %v2850
        %v2945 = vadd.f32 %v2944, %v2938
        %v2946 = vld [vmem:[#allocation16] sm:$0x1]
        %v2948 = vlaneseq
        %v2949 = vshrl.u32 %v2948, 7
        %v2950 = vsub.s32 0, %v2949
        %v2951 = vrot.slane %v2946, %v2950
        %v2953 = vadd.f32 %v2945, %v2951
        %v2954 = vlaneseq
        %v2955 = vand.u32 %v2954, 127
        %vm2956 = vcmp.lt.s32.totalorder %v2955, 32
        %v2957 = vsel %vm2956, 1, 0
        %v2958 = vcvt.s32.f32 %v2957
        %v2959 = vadd.f32 %v783, %v2953
        %v2960 = vld [vmem:[#allocation23] sm:$0x1]
        %v2961 = vld [vmem:[#allocation25] sm:$0x1]
        %2962 = vadd.xlane.f32.xlu0 %v2959
        %v2963 = vpop.xlane.xlu0 %2962
        %v2964 = vmul.f32 %v2963, 0.03125
        %v2965 = vsub.f32 %v2959, %v2964
        %v2966 = vmul.f32 %v2965, %v2958
        %v2967 = vmul.f32 %v2966, %v2966
        %2968 = vadd.xlane.f32.xlu0 %v2967
        %v2969 = vpop.xlane.xlu0 %2968
        %v2970 = vmul.f32 %v2969, 0.03125
        %v2971 = vadd.f32 %v2970, 1e-05
        %v2972 = vrsqrt.pop %v2971
        %v2973 = vmul.f32 %v2966, %v2972
        %v2975 = vlaneseq
        %v2976 = vshrl.u32 %v2975, 7
        %v2977 = vsub.s32 0, %v2976
        %v2978 = vrot.slane %v2960, %v2977
        %v2980 = vmul.f32 %v2973, %v2978
        %v2982 = vlaneseq
        %v2983 = vshrl.u32 %v2982, 7
        %v2984 = vsub.s32 0, %v2983
        %v2985 = vrot.slane %v2961, %v2984
        %v2987 = vadd.f32 %v2980, %v2985
        %v2988 = vpack.c.bf16 %v2987, %v2987
        %v2989 = vld [vmem:[#allocation17] sm:$0xf]
        %v2990 = vld [vmem:[#allocation17 + $0x4] sm:$0xf]
        %v2991 = vld [vmem:[#allocation17 + $0x8] sm:$0xf]
        %v2992 = vld [vmem:[#allocation17 + $0xc] sm:$0xf]
        %v2993 = vld [vmem:[#allocation17 + $0x10] sm:$0xf]
        %v2994 = vld [vmem:[#allocation17 + $0x14] sm:$0xf]
        %v2995 = vld [vmem:[#allocation17 + $0x18] sm:$0xf]
        %v2996 = vld [vmem:[#allocation17 + $0x1c] sm:$0xf]
        %v2997 = vld [vmem:[#allocation17 + $0x20] sm:$0xf]
        %v2998 = vld [vmem:[#allocation17 + $0x24] sm:$0xf]
        %v2999 = vld [vmem:[#allocation17 + $0x28] sm:$0xf]
        %v3000 = vld [vmem:[#allocation17 + $0x2c] sm:$0xf]
        %v3001 = vld [vmem:[#allocation17 + $0x30] sm:$0xf]
        %v3002 = vld [vmem:[#allocation17 + $0x34] sm:$0xf]
        %v3003 = vld [vmem:[#allocation17 + $0x38] sm:$0xf]
        %v3004 = vld [vmem:[#allocation17 + $0x3c] sm:$0xf]
        %v3005 = vld [vmem:[#allocation19] sm:$0x1]
        %v3007 = vlaneseq
        %v3008 = vshrl.u32 %v3007, 7
        %v3009 = vsub.s32 0, %v3008
        %v3010 = vrot.slane %v3005, %v3009
        %v3028 = vunpack.c.l.b16 %v2989
        %v3029 = vunpack.c.l.b16 %v2990
        %v3030 = vunpack.c.l.b16 %v2991
        %v3031 = vunpack.c.l.b16 %v2992
        %v3032 = vunpack.c.l.b16 %v2993
        %v3033 = vunpack.c.l.b16 %v2994
        %v3034 = vunpack.c.l.b16 %v2995
        %v3035 = vunpack.c.l.b16 %v2996
        %v3036 = vunpack.c.l.b16 %v2997
        %v3037 = vunpack.c.l.b16 %v2998
        %v3038 = vunpack.c.l.b16 %v2999
        %v3039 = vunpack.c.l.b16 %v3000
        %v3040 = vunpack.c.l.b16 %v3001
        %v3041 = vunpack.c.l.b16 %v3002
        %v3042 = vunpack.c.l.b16 %v3003
        %v3043 = vunpack.c.l.b16 %v3004
        %v3044 = vpack.c.b16 %v3029, %v3028
        %v3045 = vpack.c.b16 %v3031, %v3030
        %v3046 = vpack.c.b16 %v3033, %v3032
        %v3047 = vpack.c.b16 %v3035, %v3034
        %v3048 = vpack.c.b16 %v3037, %v3036
        %v3049 = vpack.c.b16 %v3039, %v3038
        %v3050 = vpack.c.b16 %v3041, %v3040
        %v3051 = vpack.c.b16 %v3043, %v3042
        %3060 = vmatprep.subr.bf16.mxu0 0
        %3061 = vmatpush1.bf16.msra.mxu0 %v3044
        %3062 = vmatprep.subr.bf16.mxu0 0
        %3063 = vmatpush1.bf16.msra.mxu0 %v3045
        %3064 = vmatprep.subr.bf16.mxu0 0
        %3065 = vmatpush1.bf16.msra.mxu0 %v3046
        %3066 = vmatprep.subr.bf16.mxu0 0
        %3067 = vmatpush1.bf16.msra.mxu0 %v3047
        %3068 = vmatprep.subr.bf16.mxu0 0
        %3069 = vmatpush1.bf16.msra.mxu0 %v3048
        %3070 = vmatprep.subr.bf16.mxu0 0
        %3071 = vmatpush1.bf16.msra.mxu0 %v3049
        %3072 = vmatprep.subr.bf16.mxu0 0
        %3073 = vmatpush1.bf16.msra.mxu0 %v3050
        %3074 = vmatprep.subr.bf16.mxu0 0
        %3075 = vmatpush1.bf16.msra.mxu0 %v3051
        %3076 = vmatprep.subr.bf16.mxu0 0
        %3077 = vmatpush1.bf16.msra.mxu0 0
        %3078 = vmatprep.subr.bf16.mxu0 0
        %3079 = vmatpush1.bf16.msra.mxu0 0
        %3080 = vmatprep.subr.bf16.mxu0 0
        %3081 = vmatpush1.bf16.msra.mxu0 0
        %3082 = vmatprep.subr.bf16.mxu0 0
        %3083 = vmatpush1.bf16.msra.mxu0 0
        %3084 = vmatprep.subr.bf16.mxu0 0
        %3085 = vmatpush1.bf16.msra.mxu0 0
        %3086 = vmatprep.subr.bf16.mxu0 0
        %3087 = vmatpush1.bf16.msra.mxu0 0
        %3088 = vmatprep.subr.bf16.mxu0 0
        %3089 = vmatpush1.bf16.msra.mxu0 0
        %3090 = vmatprep.subr.bf16.mxu0 0
        %3091 = vmatpush1.bf16.msra.mxu0 0
        %3092 = vmatprep.mubr.bf16.mxu0 0
        %3093 = vmatmul.mubr.bf16.gmra.mrb[0].mxu0 %v2988
        %v3094 = vpop.f32.mrb[0].mxu0
        %v3095 = vadd.f32 %v3010, %v3094
        %v3096 = vpop.f32.mrb[0].mxu0
        %v3097 = vpop.f32.mrb[0].mxu0
        %v3098 = vpop.f32.mrb[0].mxu0
        %3099 = vdwg.mxu0
        %v3100 = vmul.f32 %v3095, 0.5
        %v3101 = vmul.f32 %v3095, 0.70710677
        %v3102 = verf.f32.pop %v3101
        %v3103 = vadd.f32 %v3102, 1.0
        %v3104 = vmul.f32 %v3100, %v3103
        %v3105 = vpack.c.bf16 %v3104, %v3104
        %v3106 = vld [vmem:[#allocation20] sm:$0xf]
        %v3107 = vld [vmem:[#allocation20 + $0x4] sm:$0xf]
        %v3108 = vld [vmem:[#allocation20 + $0x8] sm:$0xf]
        %v3109 = vld [vmem:[#allocation20 + $0xc] sm:$0xf]
        %v3110 = vld [vmem:[#allocation20 + $0x10] sm:$0xf]
        %v3111 = vld [vmem:[#allocation20 + $0x14] sm:$0xf]
        %v3112 = vld [vmem:[#allocation20 + $0x18] sm:$0xf]
        %v3113 = vld [vmem:[#allocation20 + $0x1c] sm:$0xf]
        %v3114 = vld [vmem:[#allocation20 + $0x20] sm:$0xf]
        %v3115 = vld [vmem:[#allocation20 + $0x24] sm:$0xf]
        %v3116 = vld [vmem:[#allocation20 + $0x28] sm:$0xf]
        %v3117 = vld [vmem:[#allocation20 + $0x2c] sm:$0xf]
        %v3118 = vld [vmem:[#allocation20 + $0x30] sm:$0xf]
        %v3119 = vld [vmem:[#allocation20 + $0x34] sm:$0xf]
        %v3120 = vld [vmem:[#allocation20 + $0x38] sm:$0xf]
        %v3121 = vld [vmem:[#allocation20 + $0x3c] sm:$0xf]
        %v3122 = vld [vmem:[#allocation22] sm:$0x1]
        %v3124 = vlaneseq
        %v3125 = vshrl.u32 %v3124, 7
        %v3126 = vsub.s32 0, %v3125
        %v3127 = vrot.slane %v3122, %v3126
        %v3145 = vunpack.c.l.b16 %v3106
        %v3146 = vunpack.c.l.b16 %v3107
        %v3147 = vunpack.c.l.b16 %v3108
        %v3148 = vunpack.c.l.b16 %v3109
        %v3149 = vunpack.c.l.b16 %v3110
        %v3150 = vunpack.c.l.b16 %v3111
        %v3151 = vunpack.c.l.b16 %v3112
        %v3152 = vunpack.c.l.b16 %v3113
        %v3153 = vunpack.c.l.b16 %v3114
        %v3154 = vunpack.c.l.b16 %v3115
        %v3155 = vunpack.c.l.b16 %v3116
        %v3156 = vunpack.c.l.b16 %v3117
        %v3157 = vunpack.c.l.b16 %v3118
        %v3158 = vunpack.c.l.b16 %v3119
        %v3159 = vunpack.c.l.b16 %v3120
        %v3160 = vunpack.c.l.b16 %v3121
        %v3161 = vpack.c.b16 %v3146, %v3145
        %v3162 = vpack.c.b16 %v3148, %v3147
        %v3163 = vpack.c.b16 %v3150, %v3149
        %v3164 = vpack.c.b16 %v3152, %v3151
        %v3165 = vpack.c.b16 %v3154, %v3153
        %v3166 = vpack.c.b16 %v3156, %v3155
        %v3167 = vpack.c.b16 %v3158, %v3157
        %v3168 = vpack.c.b16 %v3160, %v3159
        %3177 = vmatprep.subr.bf16.mxu0 0
        %3178 = vmatpush1.bf16.msra.mxu0 %v3161
        %3179 = vmatprep.subr.bf16.mxu0 0
        %3180 = vmatpush1.bf16.msra.mxu0 %v3162
        %3181 = vmatprep.subr.bf16.mxu0 0
        %3182 = vmatpush1.bf16.msra.mxu0 %v3163
        %3183 = vmatprep.subr.bf16.mxu0 0
        %3184 = vmatpush1.bf16.msra.mxu0 %v3164
        %3185 = vmatprep.subr.bf16.mxu0 0
        %3186 = vmatpush1.bf16.msra.mxu0 %v3165
        %3187 = vmatprep.subr.bf16.mxu0 0
        %3188 = vmatpush1.bf16.msra.mxu0 %v3166
        %3189 = vmatprep.subr.bf16.mxu0 0
        %3190 = vmatpush1.bf16.msra.mxu0 %v3167
        %3191 = vmatprep.subr.bf16.mxu0 0
        %3192 = vmatpush1.bf16.msra.mxu0 %v3168
        %3193 = vmatprep.subr.bf16.mxu0 0
        %3194 = vmatpush1.bf16.msra.mxu0 0
        %3195 = vmatprep.subr.bf16.mxu0 0
        %3196 = vmatpush1.bf16.msra.mxu0 0
        %3197 = vmatprep.subr.bf16.mxu0 0
        %3198 = vmatpush1.bf16.msra.mxu0 0
        %3199 = vmatprep.subr.bf16.mxu0 0
        %3200 = vmatpush1.bf16.msra.mxu0 0
        %3201 = vmatprep.subr.bf16.mxu0 0
        %3202 = vmatpush1.bf16.msra.mxu0 0
        %3203 = vmatprep.subr.bf16.mxu0 0
        %3204 = vmatpush1.bf16.msra.mxu0 0
        %3205 = vmatprep.subr.bf16.mxu0 0
        %3206 = vmatpush1.bf16.msra.mxu0 0
        %3207 = vmatprep.subr.bf16.mxu0 0
        %3208 = vmatpush1.bf16.msra.mxu0 0
        %3209 = vmatprep.mubr.bf16.mxu0 0
        %3210 = vmatmul.mubr.bf16.gmra.mrb[0].mxu0 %v3105
        %v3211 = vpop.f32.mrb[0].mxu0
        %v3212 = vadd.f32 %v3127, %v3211
        %v3213 = vpop.f32.mrb[0].mxu0
        %v3214 = vpop.f32.mrb[0].mxu0
        %v3215 = vpop.f32.mrb[0].mxu0
        %3216 = vdwg.mxu0
        %v3217 = vadd.f32 %v2987, %v3212
        %v3218 = vld [vmem:[#allocation26] sm:$0x1]
        %v3219 = vld [vmem:[#allocation28] sm:$0x1]
        %3220 = vadd.xlane.f32.xlu0 %v3217
        %v3221 = vpop.xlane.xlu0 %3220
        %v3222 = vmul.f32 %v3221, 0.03125
        %v3223 = vsub.f32 %v3217, %v3222
        %v3224 = vmul.f32 %v3223, %v2958
        %v3225 = vmul.f32 %v3224, %v3224
        %3226 = vadd.xlane.f32.xlu0 %v3225
        %v3227 = vpop.xlane.xlu0 %3226
        %v3228 = vmul.f32 %v3227, 0.03125
        %v3229 = vadd.f32 %v3228, 1e-05
        %v3230 = vrsqrt.pop %v3229
        %v3231 = vmul.f32 %v3224, %v3230
        %v3233 = vlaneseq
        %v3234 = vshrl.u32 %v3233, 7
        %v3235 = vsub.s32 0, %v3234
        %v3236 = vrot.slane %v3218, %v3235
        %v3238 = vmul.f32 %v3231, %v3236
        %v3240 = vlaneseq
        %v3241 = vshrl.u32 %v3240, 7
        %v3242 = vsub.s32 0, %v3241
        %v3243 = vrot.slane %v3219, %v3242
        %v3245 = vadd.f32 %v3238, %v3243
        %3246 = vst [vmem:[%s781] sm:$0xff] %v3245
        %s3247 = sand.u32 %s412, 1
        %s3248 = scalar_lea.sflag [#allocation4], %s3247
        %s3249 = sand.u32 %s412, 1
        %s3250 = smul.addr %s3249, 8
        %s3251 = scalar_lea.vmem [#allocation29], %s3250
        // Predicated region
        $region157: #{tpu_custom_call.1} parent=87 // pred_check
          %p3252 = pneg %p422
        $region158: #{tpu_custom_call.1} parent=87 // pred_check_branch
          %3254 = sbr.rel (%p3252) target = $region160
        $region159: #{tpu_custom_call.1} parent=87 // pred_region
          %s3256 = ssub.s32 128, 128
          %3257 = vsyncadd %s3248, %s3256
          %s3258 = smul.addr %s42, 128
          %s3259 = scalar_lea.hbm %s17, %s3258
          %s3261 = sshll.u32 %s3251, 4
          %s3262 = int_to_ptr.vmem [resolvable:$true] %s3261
          %3264 = dma.vmem_to_hbm [thread:$0]  %s3262, 128, %s3259, %s3248
        $region160: #{tpu_custom_call.1} parent=87 // pred_fallthru
          _
      $region88: #{tpu_custom_call.1} parent=5 // pred_fallthru
        _
      %p3265 = scmp.le.s32.totalorder 2, %s37
      // Predicated region
      $region161: #{tpu_custom_call.1} parent=5 // pred_check
        %p3266 = pneg %p3265
      $region162: #{tpu_custom_call.1} parent=5 // pred_check_branch
        %3268 = sbr.rel (%p3266) target = $region164
      $region163: #{tpu_custom_call.1} parent=5 // pred_region
        %s3269 = ssub.s32 %s37, 2
        // Predicated region
        $region165: #{tpu_custom_call.1} parent=163 // pred_check
          %p3270 = pneg %p428
        $region166: #{tpu_custom_call.1} parent=163 // pred_check_branch
          %3272 = sbr.rel (%p3270) target = $region168
        $region167: #{tpu_custom_call.1} parent=163 // pred_region
          %s3273 = sand.u32 %s413, 1
          %s3274 = scalar_lea.sflag [#allocation4], %s3273
          %s3275 = sand.u32 %s413, 1
          %s3276 = smul.addr %s3275, 8
          %s3277 = scalar_lea.vmem [#allocation29], %s3276
          %3278 = dma.done %s3274, 128
        $region168: #{tpu_custom_call.1} parent=163 // pred_fallthru
          _
      $region164: #{tpu_custom_call.1} parent=5 // pred_fallthru
        _
    $region6: #{tpu_custom_call.1} parent=1 // loop_footer
      %s41 = sadd.s32 1, %s37
    $region7: #{tpu_custom_call.1} parent=1 // loop_footer_branch
      %36 = sbr.rel target = $region3
    $region8: #{tpu_custom_call.1} parent=1 // loop_exit
      _
    %3279 = vsyncpa [#allocation3], 1
    %s3280 = scalar_lea.sflag [#allocation3], 1
    %3281 = vsyncpa %s3280, 1
    %3282 = vsyncpa [#allocation6], 1
    %3283 = vsyncpa [#allocation9], 1
    %3284 = vsyncpa [#allocation12], 1
    %3285 = vsyncpa [#allocation15], 1
    %3286 = vsyncpa [#allocation18], 1
    %3287 = vsyncpa [#allocation21], 1
    %3288 = vsyncpa [#allocation24], 1
    %3289 = vsyncpa [#allocation27], 1
    %3290 = vsyncpa [#allocation4], 1
    %s3291 = scalar_lea.sflag [#allocation4], 1
    %3292 = vsyncpa %s3291, 1

</llo_original>
